<compile_context>
chip_gen: v7x
topology: tpu7x:2x2x1
jax: 0.10.0
libtpu: 0.0.40
codegen_flags: <defaults>
</compile_context>

<pallas_src>
import functools
import math

import jax
import jax.numpy as jnp
from jax.experimental import pallas as pl
from jax.experimental.pallas import tpu as pltpu


# ---------------------------------------------------------------------------
# Fused kernel: streamed avg-pool + Linear1 accumulation, BN/dropout/Linear2 finalize.
# ---------------------------------------------------------------------------
def _fused_ftnet_se_kernel(x_ref,          # (B, ct, HW)  feature-map channel tile
                           w1_ref,         # (ct, NB)     bf16 Linear1 row tile
                           b1_ref,         # (1, NB)      f32
                           g_ref,          # (1, NB)      f32 BN gamma
                           beta_ref,       # (1, NB)      f32 BN beta
                           mask_ref,       # (B, NB)      f32 dropout mask * 1/(1-p)
                           w2_ref,         # (NB, NC)     bf16 classifier weight
                           b2_ref,         # (1, NC)      f32
                           v_ref,          # out: (B, ct) f32 pooled-feature tile
                           y_ref,          # out: (B, NC) f32 logits (last step only)
                           h_acc,          # scratch: (B, NB) f32 Linear1 accumulator
                           *, inv_hw, apply_dropout):
    c = pl.program_id(0)

    @pl.when(c == 0)
    def _():
        h_acc[...] = jnp.zeros_like(h_acc)

    # AdaptiveAvgPool2d((1,1)) on this channel tile (f32 accumulation in-kernel).
    x = x_ref[...].astype(jnp.float32)                      # (B, ct, HW)
    v_tile = jnp.sum(x, axis=-1) * inv_hw                   # (B, ct) f32
    v_ref[...] = v_tile

    # Partial Linear(C -> NB): accumulate this ct-slice on the bf16 MXU path.
    h_acc[...] += jnp.dot(v_tile.astype(jnp.bfloat16), w1_ref[...],
                          preferred_element_type=jnp.float32)

    @pl.when(c == pl.num_programs(0) - 1)
    def _():
        h = h_acc[...] + b1_ref[...]

        # BatchNorm1d(NB), training mode (biased batch variance, eps=1e-5).
        mu = jnp.mean(h, axis=0, keepdims=True)
        xc = h - mu
        var = jnp.mean(xc * xc, axis=0, keepdims=True)
        h = xc * jax.lax.rsqrt(var + 1e-5) * g_ref[...] + beta_ref[...]

        # Dropout(p), training mode: keep-mask already carries the 1/(1-p) scale.
        if apply_dropout:
            h = h * mask_ref[...]

        # classifier: Linear(NB -> class_num), bf16 MXU, f32 accumulate.
        y_ref[...] = (jnp.dot(h.astype(jnp.bfloat16), w2_ref[...],
                              preferred_element_type=jnp.float32) + b2_ref[...])


# ---------------------------------------------------------------------------
# Tiling helpers (lane-padding and double-buffer aware).
# ---------------------------------------------------------------------------
def _round_up(x, m):
    return ((x + m - 1) // m) * m


def _pick_tile(dim, multiple, max_tile):
    """Largest divisor of `dim` that is a multiple of `multiple` and <= max_tile."""
    best, found, t = dim, False, multiple
    limit = min(dim, max_tile)
    while t <= limit:
        if dim % t == 0:
            best, found = t, True
        t += multiple
    return best if found else dim


def _choose_channel_tile(B, C, HW, itemsize, budget_bytes, min_steps=2):
    """Channel tile for the fused kernel.

    Real per-buffer VMEM footprint of one (B, ct, HW) feature block is
    B * ct * round_up(HW, 128) * itemsize (lane padding), and BlockSpec
    double-buffers it (x2).  Both factors are included before comparing
    against `budget_bytes`.  The tile is also capped so the grid has at
    least `min_steps` steps (DMA/compute overlap from double-buffering).
    """
    if C % 128 != 0:
        return C  # fall back to a single full-C step (shapes still legal).
    hw_pad = _round_up(HW, 128)
    bytes_per_channel = 2 * B * hw_pad * itemsize           # x2: double buffer
    max_ct = max(128, (budget_bytes // max(1, bytes_per_channel)) // 128 * 128)
    if C // min_steps >= 128:
        max_ct = min(max_ct, (C // min_steps) // 128 * 128)  # guarantee >= min_steps
    return _pick_tile(C, 128, max_ct)


# ---------------------------------------------------------------------------
# Wrapper.
# ---------------------------------------------------------------------------
def ft_net_se_forward(x_feat_nchw, params, *, droprate=0.5, rng_key=None,
                      feature_stream_budget_bytes=8 * 1024 * 1024):
    """Training-mode forward of ft_net_SE applied to the backbone feature map.

    x_feat_nchw: (B, C, H, W) — output of self.model.features(x), native layout/dtype.
    Returns (y, v): class logits (B, class_num) and pooled features (B, C), both f32.
    """
    B, C, H, W = x_feat_nchw.shape
    HW = H * W
    x = x_feat_nchw.reshape(B, C, HW)     # free view: no transpose, no dtype copy

    w1 = params["w1"].astype(jnp.bfloat16)
    w2 = params["w2"].astype(jnp.bfloat16)
    b1, gamma, beta, b2 = params["b1"], params["gamma"], params["beta"], params["b2"]
    NB = w1.shape[1]
    NC = w2.shape[1]

    apply_dropout = droprate > 0.0
    if apply_dropout:
        if rng_key is None:
            raise ValueError("droprate > 0 requires an explicit rng_key "
                             "(dropout mask must differ per training step).")
        # Inverted dropout: fold the 1/(1-p) scale into the keep mask on the host.
        mask = (jax.random.bernoulli(rng_key, 1.0 - droprate, (B, NB))
                .astype(jnp.float32) * (1.0 / (1.0 - droprate)))
    else:
        mask = jnp.ones((B, NB), jnp.float32)

    ct = _choose_channel_tile(B, C, HW, x.dtype.itemsize, feature_stream_budget_bytes)
    grid = (C // ct,)

    v, y = pl.pallas_call(
        functools.partial(_fused_ftnet_se_kernel,
                          inv_hw=1.0 / float(HW), apply_dropout=apply_dropout),
        grid=grid,
        out_shape=(jax.ShapeDtypeStruct((B, C), jnp.float32),
                   jax.ShapeDtypeStruct((B, NC), jnp.float32)),
        in_specs=[
            pl.BlockSpec((B, ct, HW), lambda c: (0, c, 0)),   # feature tile
            pl.BlockSpec((ct, NB), lambda c: (c, 0)),         # w1 row tile (bf16)
            pl.BlockSpec((1, NB), lambda c: (0, 0)),          # b1
            pl.BlockSpec((1, NB), lambda c: (0, 0)),          # gamma
            pl.BlockSpec((1, NB), lambda c: (0, 0)),          # beta
            pl.BlockSpec((B, NB), lambda c: (0, 0)),          # dropout mask (scaled)
            pl.BlockSpec((NB, NC), lambda c: (0, 0)),         # w2 (bf16)
            pl.BlockSpec((1, NC), lambda c: (0, 0)),          # b2
        ],
        out_specs=(
            pl.BlockSpec((B, ct), lambda c: (0, c)),          # v tiles (per step)
            pl.BlockSpec((B, NC), lambda c: (0, 0)),          # y (resident, last step)
        ),
        scratch_shapes=[pltpu.VMEM((B, NB), jnp.float32)],    # Linear1 accumulator
        compiler_params=pltpu.CompilerParams(
            dimension_semantics=("arbitrary",),               # C is a reduction axis
            vmem_limit_bytes=32 * 1024 * 1024,                # explicit, safe on v5e/v7x
        ),
    )(x, w1, b1, gamma, beta, mask, w2, b2)
    return y, v


def init_classblock_params(key, input_dim, class_num, num_bottleneck):
    """Deterministic re-implementation of ClassBlock's weight initializers."""
    k1, k2, k3 = jax.random.split(key, 3)
    # add_block Linear: kaiming_normal_(a=0, mode='fan_out') -> std = sqrt(2/out_features)
    w1 = (jax.random.normal(k1, (input_dim, num_bottleneck), jnp.float32)
          * math.sqrt(2.0 / num_bottleneck))
    b1 = jnp.zeros((1, num_bottleneck), jnp.float32)
    # BatchNorm1d: weight ~ N(1.0, 0.02), bias = 0
    gamma = 1.0 + 0.02 * jax.random.normal(k2, (1, num_bottleneck), jnp.float32)
    beta = jnp.zeros((1, num_bottleneck), jnp.float32)
    # classifier Linear: weight ~ N(0, 0.001), bias = 0
    w2 = 0.001 * jax.random.normal(k3, (num_bottleneck, class_num), jnp.float32)
    b2 = jnp.zeros((1, class_num), jnp.float32)
    return dict(w1=w1, b1=b1, gamma=gamma, beta=beta, w2=w2, b2=b2)


def _reference_forward(x_feat_nchw, params, droprate, rng_key):
    """Pure-JAX reference (same bf16 matmul dtypes, same dropout mask)."""
    B, C, H, W = x_feat_nchw.shape
    v = jnp.mean(x_feat_nchw.astype(jnp.float32).reshape(B, C, H * W), axis=-1)
    w1 = params["w1"].astype(jnp.bfloat16)
    w2 = params["w2"].astype(jnp.bfloat16)
    h = jnp.dot(v.astype(jnp.bfloat16), w1,
                preferred_element_type=jnp.float32) + params["b1"]
    mu = jnp.mean(h, axis=0, keepdims=True)
    var = jnp.mean((h - mu) ** 2, axis=0, keepdims=True)
    h = (h - mu) * jax.lax.rsqrt(var + 1e-5) * params["gamma"] + params["beta"]
    if droprate > 0.0:
        keep = jax.random.bernoulli(rng_key, 1.0 - droprate,
                                    (B, params["w1"].shape[1])).astype(jnp.float32)
        h = h * keep * (1.0 / (1.0 - droprate))
    y = jnp.dot(h.astype(jnp.bfloat16), w2,
                preferred_element_type=jnp.float32) + params["b2"]
    return y, v


if __name__ == "__main__":
    # Stand-in small shapes for the real (B, 2048, 7, 7) SE-ResNeXt101 feature map.
    B, C, H, W = 8, 256, 8, 8
    NUM_BOTTLENECK = 128            # stand-in for 512
    CLASS_NUM = 128                 # arbitrary small class count
    DROPRATE = 0.5

    key = jax.random.PRNGKey(0)
    k_feat, k_par, k_drop = jax.random.split(key, 3)
    feat = jax.random.normal(k_feat, (B, C, H, W), jnp.float32)
    params = init_classblock_params(k_par, C, CLASS_NUM, NUM_BOTTLENECK)

    y, v = ft_net_se_forward(feat, params, droprate=DROPRATE, rng_key=k_drop)
    jax.block_until_ready((y, v))

    assert y.shape == (B, CLASS_NUM) and v.shape == (B, C)
    assert y.dtype == jnp.float32 and v.dtype == jnp.float32

    y_ref, v_ref = _reference_forward(feat, params, DROPRATE, k_drop)
    assert jnp.allclose(v, v_ref, atol=1e-4, rtol=1e-4)
    assert jnp.allclose(y, y_ref, atol=2e-3, rtol=2e-3)

    print("KERNEL_OK")
</pallas_src>

<mosaic_0001>
module attributes {stable_mosaic.version = 11 : i64} {
  func.func @_fused_ftnet_se_kernel(%arg0: i32, %arg1: memref<8x128x64xf32, #tpu.memory_space<vmem>>, %arg2: memref<128x128xbf16, #tpu.memory_space<vmem>>, %arg3: memref<1x128xf32, #tpu.memory_space<vmem>>, %arg4: memref<1x128xf32, #tpu.memory_space<vmem>>, %arg5: memref<1x128xf32, #tpu.memory_space<vmem>>, %arg6: memref<8x128xf32, #tpu.memory_space<vmem>>, %arg7: memref<128x128xbf16, #tpu.memory_space<vmem>>, %arg8: memref<1x128xf32, #tpu.memory_space<vmem>>, %arg9: memref<8x128xf32, #tpu.memory_space<vmem>>, %arg10: memref<8x128xf32, #tpu.memory_space<vmem>>, %arg11: memref<8x128xf32, #tpu.memory_space<vmem>>) attributes {dimension_semantics = [#tpu.dimension_semantics<arbitrary>], iteration_bounds = array<i64: 2>, scalar_prefetch = 0 : i64, scratch_operands = 1 : i64, tpu.core_type = #tpu.core_type<tc>, window_params = [{transform_indices = @transform_0, window_bounds = array<i64: 8, 128, 64>}, {transform_indices = @transform_1, window_bounds = array<i64: 128, 128>}, {pipeline_mode = #tpu.pipeline_mode<synchronous>, transform_indices = @transform_2, window_bounds = array<i64: 1, 128>}, {pipeline_mode = #tpu.pipeline_mode<synchronous>, transform_indices = @transform_3, window_bounds = array<i64: 1, 128>}, {pipeline_mode = #tpu.pipeline_mode<synchronous>, transform_indices = @transform_4, window_bounds = array<i64: 1, 128>}, {pipeline_mode = #tpu.pipeline_mode<synchronous>, transform_indices = @transform_5, window_bounds = array<i64: 8, 128>}, {pipeline_mode = #tpu.pipeline_mode<synchronous>, transform_indices = @transform_6, window_bounds = array<i64: 128, 128>}, {pipeline_mode = #tpu.pipeline_mode<synchronous>, transform_indices = @transform_7, window_bounds = array<i64: 1, 128>}, {transform_indices = @transform_8, window_bounds = array<i64: 8, 128>}, {pipeline_mode = #tpu.pipeline_mode<synchronous>, transform_indices = @transform_9, window_bounds = array<i64: 8, 128>}]} {
    %c0_i32 = arith.constant 0 : i32
    %0 = arith.cmpi eq, %arg0, %c0_i32 : i32
    %1 = arith.extui %0 : i1 to i32
    %c0_i32_0 = arith.constant 0 : i32
    %2 = arith.cmpi ne, %1, %c0_i32_0 : i32
    scf.if %2 {
      %cst_14 = arith.constant 0.000000e+00 : f32
      %17 = vector.broadcast %cst_14 : f32 to vector<8x128xf32>
      %c0_15 = arith.constant 0 : index
      %c0_16 = arith.constant 0 : index
      %18 = vector.load %arg11[%c0_15, %c0_16] : memref<8x128xf32, #tpu.memory_space<vmem>>, vector<8x128xf32>
      tpu.vector_store %arg11[%c0_15, %c0_16], %17 {strides = array<i32>} : memref<8x128xf32, #tpu.memory_space<vmem>>, vector<8x128xf32>,
    } else {
    }
    %c0 = arith.constant 0 : index
    %c0_1 = arith.constant 0 : index
    %c0_2 = arith.constant 0 : index
    %3 = vector.load %arg1[%c0, %c0_1, %c0_2] : memref<8x128x64xf32, #tpu.memory_space<vmem>>, vector<8x128x64xf32>
    %cst = arith.constant dense<0.000000e+00> : vector<8x128xf32>
    %4 = vector.multi_reduction <add>, %3, %cst [2] : vector<8x128x64xf32> to vector<8x128xf32>
    %cst_3 = arith.constant 1.562500e-02 : f32
    %5 = vector.broadcast %cst_3 : f32 to vector<8x128xf32>
    %6 = arith.mulf %4, %5 : vector<8x128xf32>
    %c0_4 = arith.constant 0 : index
    %c0_5 = arith.constant 0 : index
    %7 = vector.load %arg9[%c0_4, %c0_5] : memref<8x128xf32, #tpu.memory_space<vmem>>, vector<8x128xf32>
    tpu.vector_store %arg9[%c0_4, %c0_5], %6 {strides = array<i32>} : memref<8x128xf32, #tpu.memory_space<vmem>>, vector<8x128xf32>,
    %c0_6 = arith.constant 0 : index
    %c0_7 = arith.constant 0 : index
    %8 = vector.load %arg11[%c0_6, %c0_7] : memref<8x128xf32, #tpu.memory_space<vmem>>, vector<8x128xf32>
    %9 = arith.truncf %6 : vector<8x128xf32> to vector<8x128xbf16>
    %c0_8 = arith.constant 0 : index
    %c0_9 = arith.constant 0 : index
    %10 = vector.load %arg2[%c0_8, %c0_9] : memref<128x128xbf16, #tpu.memory_space<vmem>>, vector<128x128xbf16>
    %cst_10 = arith.constant dense<0.000000e+00> : vector<8x128xf32>
    %11 = tpu.matmul %9, %10, %cst_10 {dimension_numbers = #tpu.dot_dimension_numbers<[1], [0], [0], [1], [0, 0, 1, 1], [], []>} : vector<8x128xbf16>, vector<128x128xbf16>, vector<8x128xf32> -> vector<8x128xf32>
    %12 = arith.addf %8, %11 : vector<8x128xf32>
    %c0_11 = arith.constant 0 : index
    %c0_12 = arith.constant 0 : index
    %13 = vector.load %arg11[%c0_11, %c0_12] : memref<8x128xf32, #tpu.memory_space<vmem>>, vector<8x128xf32>
    tpu.vector_store %arg11[%c0_11, %c0_12], %12 {strides = array<i32>} : memref<8x128xf32, #tpu.memory_space<vmem>>, vector<8x128xf32>,
    %c1_i32 = arith.constant 1 : i32
    %14 = arith.cmpi eq, %arg0, %c1_i32 : i32
    %15 = arith.extui %14 : i1 to i32
    %c0_i32_13 = arith.constant 0 : i32
    %16 = arith.cmpi ne, %15, %c0_i32_13 : i32
    scf.if %16 {
      %c0_14 = arith.constant 0 : index
      %c0_15 = arith.constant 0 : index
      %17 = vector.load %arg11[%c0_14, %c0_15] : memref<8x128xf32, #tpu.memory_space<vmem>>, vector<8x128xf32>
      %c0_16 = arith.constant 0 : index
      %c0_17 = arith.constant 0 : index
      %18 = vector.load %arg3[%c0_16, %c0_17] : memref<1x128xf32, #tpu.memory_space<vmem>>, vector<1x128xf32>
      %19 = vector.broadcast %18 : vector<1x128xf32> to vector<8x128xf32>
      %20 = arith.addf %17, %19 : vector<8x128xf32>
      %cst_18 = arith.constant dense<0.000000e+00> : vector<128xf32>
      %21 = vector.multi_reduction <add>, %20, %cst_18 [0] : vector<8x128xf32> to vector<128xf32>
      %22 = vector.shape_cast %21 : vector<128xf32> to vector<1x128xf32>
      %cst_19 = arith.constant 8.000000e+00 : f32
      %23 = vector.broadcast %cst_19 : f32 to vector<1x128xf32>
      %24 = arith.divf %22, %23 : vector<1x128xf32>
      %25 = vector.broadcast %24 : vector<1x128xf32> to vector<8x128xf32>
      %26 = arith.subf %20, %25 : vector<8x128xf32>
      %27 = arith.mulf %26, %26 : vector<8x128xf32>
      %cst_20 = arith.constant dense<0.000000e+00> : vector<128xf32>
      %28 = vector.multi_reduction <add>, %27, %cst_20 [0] : vector<8x128xf32> to vector<128xf32>
      %29 = vector.shape_cast %28 : vector<128xf32> to vector<1x128xf32>
      %cst_21 = arith.constant 8.000000e+00 : f32
      %30 = vector.broadcast %cst_21 : f32 to vector<1x128xf32>
      %31 = arith.divf %29, %30 : vector<1x128xf32>
      %cst_22 = arith.constant 9.99999974E-6 : f32
      %32 = vector.broadcast %cst_22 : f32 to vector<1x128xf32>
      %33 = arith.addf %31, %32 : vector<1x128xf32>
      %34 = math.rsqrt %33 : vector<1x128xf32>
      %35 = vector.broadcast %34 : vector<1x128xf32> to vector<8x128xf32>
      %36 = arith.mulf %26, %35 : vector<8x128xf32>
      %c0_23 = arith.constant 0 : index
      %c0_24 = arith.constant 0 : index
      %37 = vector.load %arg4[%c0_23, %c0_24] : memref<1x128xf32, #tpu.memory_space<vmem>>, vector<1x128xf32>
      %38 = vector.broadcast %37 : vector<1x128xf32> to vector<8x128xf32>
      %39 = arith.mulf %36, %38 : vector<8x128xf32>
      %c0_25 = arith.constant 0 : index
      %c0_26 = arith.constant 0 : index
      %40 = vector.load %arg5[%c0_25, %c0_26] : memref<1x128xf32, #tpu.memory_space<vmem>>, vector<1x128xf32>
      %41 = vector.broadcast %40 : vector<1x128xf32> to vector<8x128xf32>
      %42 = arith.addf %39, %41 : vector<8x128xf32>
      %c0_27 = arith.constant 0 : index
      %c0_28 = arith.constant 0 : index
      %43 = vector.load %arg6[%c0_27, %c0_28] : memref<8x128xf32, #tpu.memory_space<vmem>>, vector<8x128xf32>
      %44 = arith.mulf %42, %43 : vector<8x128xf32>
      %45 = arith.truncf %44 : vector<8x128xf32> to vector<8x128xbf16>
      %c0_29 = arith.constant 0 : index
      %c0_30 = arith.constant 0 : index
      %46 = vector.load %arg7[%c0_29, %c0_30] : memref<128x128xbf16, #tpu.memory_space<vmem>>, vector<128x128xbf16>
      %cst_31 = arith.constant dense<0.000000e+00> : vector<8x128xf32>
      %47 = tpu.matmul %45, %46, %cst_31 {dimension_numbers = #tpu.dot_dimension_numbers<[1], [0], [0], [1], [0, 0, 1, 1], [], []>} : vector<8x128xbf16>, vector<128x128xbf16>, vector<8x128xf32> -> vector<8x128xf32>
      %c0_32 = arith.constant 0 : index
      %c0_33 = arith.constant 0 : index
      %48 = vector.load %arg8[%c0_32, %c0_33] : memref<1x128xf32, #tpu.memory_space<vmem>>, vector<1x128xf32>
      %49 = vector.broadcast %48 : vector<1x128xf32> to vector<8x128xf32>
      %50 = arith.addf %47, %49 : vector<8x128xf32>
      %c0_34 = arith.constant 0 : index
      %c0_35 = arith.constant 0 : index
      %51 = vector.load %arg10[%c0_34, %c0_35] : memref<8x128xf32, #tpu.memory_space<vmem>>, vector<8x128xf32>
      tpu.vector_store %arg10[%c0_34, %c0_35], %50 {strides = array<i32>} : memref<8x128xf32, #tpu.memory_space<vmem>>, vector<8x128xf32>,
    } else {
    }
    return
  }
  func.func @transform_0(%arg0: i32) -> (i32, i32, i32) {
    %c0_i32 = arith.constant 0 : i32
    %c0_i32_0 = arith.constant 0 : i32
    %c0_i32_1 = arith.constant 0 : i32
    return %c0_i32, %arg0, %c0_i32_0 : i32, i32, i32
  }
  func.func @transform_1(%arg0: i32) -> (i32, i32) {
    %c0_i32 = arith.constant 0 : i32
    %c0_i32_0 = arith.constant 0 : i32
    return %arg0, %c0_i32 : i32, i32
  }
  func.func @transform_2(%arg0: i32) -> (i32, i32) {
    %c0_i32 = arith.constant 0 : i32
    %c0_i32_0 = arith.constant 0 : i32
    %c0_i32_1 = arith.constant 0 : i32
    return %c0_i32, %c0_i32_0 : i32, i32
  }
  func.func @transform_3(%arg0: i32) -> (i32, i32) {
    %c0_i32 = arith.constant 0 : i32
    %c0_i32_0 = arith.constant 0 : i32
    %c0_i32_1 = arith.constant 0 : i32
    return %c0_i32, %c0_i32_0 : i32, i32
  }
  func.func @transform_4(%arg0: i32) -> (i32, i32) {
    %c0_i32 = arith.constant 0 : i32
    %c0_i32_0 = arith.constant 0 : i32
    %c0_i32_1 = arith.constant 0 : i32
    return %c0_i32, %c0_i32_0 : i32, i32
  }
  func.func @transform_5(%arg0: i32) -> (i32, i32) {
    %c0_i32 = arith.constant 0 : i32
    %c0_i32_0 = arith.constant 0 : i32
    %c0_i32_1 = arith.constant 0 : i32
    return %c0_i32, %c0_i32_0 : i32, i32
  }
  func.func @transform_6(%arg0: i32) -> (i32, i32) {
    %c0_i32 = arith.constant 0 : i32
    %c0_i32_0 = arith.constant 0 : i32
    %c0_i32_1 = arith.constant 0 : i32
    return %c0_i32, %c0_i32_0 : i32, i32
  }
  func.func @transform_7(%arg0: i32) -> (i32, i32) {
    %c0_i32 = arith.constant 0 : i32
    %c0_i32_0 = arith.constant 0 : i32
    %c0_i32_1 = arith.constant 0 : i32
    return %c0_i32, %c0_i32_0 : i32, i32
  }
  func.func @transform_8(%arg0: i32) -> (i32, i32) {
    %c0_i32 = arith.constant 0 : i32
    %c0_i32_0 = arith.constant 0 : i32
    return %c0_i32, %arg0 : i32, i32
  }
  func.func @transform_9(%arg0: i32) -> (i32, i32) {
    %c0_i32 = arith.constant 0 : i32
    %c0_i32_0 = arith.constant 0 : i32
    %c0_i32_1 = arith.constant 0 : i32
    return %c0_i32, %c0_i32_0 : i32, i32
  }
}

</mosaic_0001>

<llo_original>
// kernel: tpu_custom_call.1
$region0: #{tpu_custom_call.1}
  #allocation0 [shape = 'u32[]', space=smem, size = 0x4, offset = 0x4, fixed_abs, tag = 'smem constant byte address 0x4 - core index']
  #allocation1 [shape = 'u32[144,128]{1,0:T(1,128)}', space=vmem, size = 0x12000, scoped, tag = 'internal scratch']
  #allocation2 [shape = 'f32[8,128]{1,0:T(8,128)}', space=vmem, size = 0x1000, scoped, tag = 'scratch operand']
  %s0 = inlined_call_operand.vmem [shape: f32[8,256,64], index: 0, kind: input, shape index: {}]
  %s1 = inlined_call_operand.vmem [shape: bf16[256,128], index: 1, kind: input, shape index: {}]
  %s2 = inlined_call_operand.vmem [shape: f32[1,128], index: 2, kind: input, shape index: {}]
  %s3 = inlined_call_operand.vmem [shape: f32[1,128], index: 3, kind: input, shape index: {}]
  %s4 = inlined_call_operand.vmem [shape: f32[1,128], index: 4, kind: input, shape index: {}]
  %s5 = inlined_call_operand.vmem [shape: f32[8,128], index: 5, kind: input, shape index: {}]
  %s6 = inlined_call_operand.vmem [shape: bf16[128,128], index: 6, kind: input, shape index: {}]
  %s7 = inlined_call_operand.vmem [shape: f32[1,128], index: 7, kind: input, shape index: {}]
  %s8 = inlined_call_operand.hbm [shape: f32[8,256], index: 8, kind: output, shape index: {0}]
  %s9 = inlined_call_operand.hbm [shape: f32[8,128], index: 9, kind: output, shape index: {1}]
  %10 = xla_tuple %s8, %s9
  %s11 = sld [smem:[#allocation0]]
  $region119: #{tpu_custom_call.1} parent=0
    _
  %s13 = ssub.s32 1, %s11
  %s14 = scalar_select 0, %s13, %s11
  $region1: #{tpu_custom_call.1} parent=0
    #allocation3 [shape = 'u8[1048576]{0}', space=vmem, size = 0x100000, scoped, tag = 'input window, operand 0']
    #allocation4 [shape = 'u8[8192]{0}', space=vmem, size = 0x2000, scoped, tag = 'output window, operand 0']
    #allocation5 [shape = 's32[2]{0}', space=sflag, size = 0x8, scoped, tag = 'scoped memory for tpu_custom_call.1']
    #allocation6 [shape = 'u8[4096]{0}', space=vmem, size = 0x1000, scoped, tag = 'output window, operand 1, single buffered']
    #allocation7 [shape = 's32[1]{0}', space=sflag, size = 0x4, scoped, tag = 'scoped memory for tpu_custom_call.1']
    %15 = vsyncpa [#allocation5], 0
    %s16 = scalar_lea.sflag [#allocation5], 1
    %17 = vsyncpa %s16, 0
    %18 = vsyncpa [#allocation7], 0
    loop: start=0, step=1, limit=4
    $region2: #{tpu_custom_call.1} parent=1 // loop_pre_header
      _
    $region3: #{tpu_custom_call.1} parent=1 // loop_header
      %s20 = sphi 0, %s24
      %p21 = scmp.ge.s32.totalorder %s20, 4
      %s30 = sphi 0, %s32
      %s33 = sphi 0, %s30
      %s34 = sphi 0, %s33
      %s50 = sphi 0, %s34
      %s56 = sphi 0, %s58
      %s59 = sphi 0, %s56
      %s60 = sphi 0, %s59
      %s76 = sphi 0, %s60
      %s80 = sphi 0, %s80
      %s82 = sphi 0, %s80
      %s83 = sphi 0, %s82
      %s97 = sphi 0, %s83
      %s101 = sphi 0, %s101
      %s103 = sphi 0, %s101
      %s104 = sphi 0, %s103
      %s118 = sphi 0, %s104
      %s122 = sphi 0, %s122
      %s124 = sphi 0, %s122
      %s125 = sphi 0, %s124
      %s139 = sphi 0, %s125
      %s143 = sphi 0, %s143
      %s145 = sphi 0, %s143
      %s146 = sphi 0, %s145
      %s160 = sphi 0, %s146
      %s164 = sphi 0, %s164
      %s166 = sphi 0, %s164
      %s167 = sphi 0, %s166
      %s181 = sphi 0, %s167
      %s185 = sphi 0, %s185
      %s187 = sphi 0, %s185
      %s188 = sphi 0, %s187
      %s202 = sphi 0, %s188
      %s208 = sphi 0, %s210
      %s211 = sphi 0, %s208
      %s212 = sphi 0, %s211
      %s228 = sphi 0, %s212
      %s232 = sphi 0, %s232
      %s234 = sphi 0, %s232
      %s235 = sphi 0, %s234
      %s249 = sphi 0, %s235
    $region4: #{tpu_custom_call.1} parent=1 // loop_header_branch
      %23 = sbr.rel (%p21) target = $region8
    $region5: #{tpu_custom_call.1} parent=1 // loop_body
      %s25 = ssub.s32 %s20, 1
      %s26 = ssub.s32 %s20, 2
      %s27 = sadd.s32 %s20, 1
      %s28 = ssub.s32 %s20, %s27
      %p29 = scmp.eq.s32.totalorder %s28, 0
      %s31 = sadd.s32 %s30, 1
      %s32 = scalar_select %p29, %s30, %s31
      %p35 = pneg %p29
      %p36 = scmp.eq.s32.totalorder %s20, 1
      %p37 = por %p35, %p36
      %p38 = scmp.ne.s32.totalorder %s30, %s33
      %p39 = scmp.eq.s32.totalorder %s20, 0
      %p40 = por %p38, %p39
      %p41 = scmp.ne.s32.totalorder %s30, %s33
      %p42 = scmp.eq.s32.totalorder %s25, 1
      %p43 = por %p41, %p42
      %p44 = scmp.ne.s32.totalorder %s33, %s34
      %p45 = scmp.eq.s32.totalorder %s25, 0
      %p46 = por %p44, %p45
      %p47 = scmp.ne.s32.totalorder %s33, %s34
      %p48 = scmp.eq.s32.totalorder %s26, 1
      %p49 = por %p47, %p48
      %p51 = scmp.ne.s32.totalorder %s34, %s50
      %p52 = scmp.eq.s32.totalorder %s26, 0
      %p53 = por %p51, %p52
      %s54 = ssub.s32 %s20, %s27
      %p55 = scmp.eq.s32.totalorder %s54, 0
      %s57 = sadd.s32 %s56, 1
      %s58 = scalar_select %p55, %s56, %s57
      %p61 = pneg %p55
      %p62 = scmp.eq.s32.totalorder %s20, 1
      %p63 = por %p61, %p62
      %p64 = scmp.ne.s32.totalorder %s56, %s59
      %p65 = scmp.eq.s32.totalorder %s20, 0
      %p66 = por %p64, %p65
      %p67 = scmp.ne.s32.totalorder %s56, %s59
      %p68 = scmp.eq.s32.totalorder %s25, 1
      %p69 = por %p67, %p68
      %p70 = scmp.ne.s32.totalorder %s59, %s60
      %p71 = scmp.eq.s32.totalorder %s25, 0
      %p72 = por %p70, %p71
      %p73 = scmp.ne.s32.totalorder %s59, %s60
      %p74 = scmp.eq.s32.totalorder %s26, 1
      %p75 = por %p73, %p74
      %p77 = scmp.ne.s32.totalorder %s60, %s76
      %p78 = scmp.eq.s32.totalorder %s26, 0
      %p79 = por %p77, %p78
      %s81 = sadd.s32 %s80, 1
      %p84 = scmp.eq.s32.totalorder %s20, 1
      %p85 = scmp.ne.s32.totalorder %s80, %s82
      %p86 = scmp.eq.s32.totalorder %s20, 0
      %p87 = por %p85, %p86
      %p88 = scmp.ne.s32.totalorder %s80, %s82
      %p89 = scmp.eq.s32.totalorder %s25, 1
      %p90 = por %p88, %p89
      %p91 = scmp.ne.s32.totalorder %s82, %s83
      %p92 = scmp.eq.s32.totalorder %s25, 0
      %p93 = por %p91, %p92
      %p94 = scmp.ne.s32.totalorder %s82, %s83
      %p95 = scmp.eq.s32.totalorder %s26, 1
      %p96 = por %p94, %p95
      %p98 = scmp.ne.s32.totalorder %s83, %s97
      %p99 = scmp.eq.s32.totalorder %s26, 0
      %p100 = por %p98, %p99
      %s102 = sadd.s32 %s101, 1
      %p105 = scmp.eq.s32.totalorder %s20, 1
      %p106 = scmp.ne.s32.totalorder %s101, %s103
      %p107 = scmp.eq.s32.totalorder %s20, 0
      %p108 = por %p106, %p107
      %p109 = scmp.ne.s32.totalorder %s101, %s103
      %p110 = scmp.eq.s32.totalorder %s25, 1
      %p111 = por %p109, %p110
      %p112 = scmp.ne.s32.totalorder %s103, %s104
      %p113 = scmp.eq.s32.totalorder %s25, 0
      %p114 = por %p112, %p113
      %p115 = scmp.ne.s32.totalorder %s103, %s104
      %p116 = scmp.eq.s32.totalorder %s26, 1
      %p117 = por %p115, %p116
      %p119 = scmp.ne.s32.totalorder %s104, %s118
      %p120 = scmp.eq.s32.totalorder %s26, 0
      %p121 = por %p119, %p120
      %s123 = sadd.s32 %s122, 1
      %p126 = scmp.eq.s32.totalorder %s20, 1
      %p127 = scmp.ne.s32.totalorder %s122, %s124
      %p128 = scmp.eq.s32.totalorder %s20, 0
      %p129 = por %p127, %p128
      %p130 = scmp.ne.s32.totalorder %s122, %s124
      %p131 = scmp.eq.s32.totalorder %s25, 1
      %p132 = por %p130, %p131
      %p133 = scmp.ne.s32.totalorder %s124, %s125
      %p134 = scmp.eq.s32.totalorder %s25, 0
      %p135 = por %p133, %p134
      %p136 = scmp.ne.s32.totalorder %s124, %s125
      %p137 = scmp.eq.s32.totalorder %s26, 1
      %p138 = por %p136, %p137
      %p140 = scmp.ne.s32.totalorder %s125, %s139
      %p141 = scmp.eq.s32.totalorder %s26, 0
      %p142 = por %p140, %p141
      %s144 = sadd.s32 %s143, 1
      %p147 = scmp.eq.s32.totalorder %s20, 1
      %p148 = scmp.ne.s32.totalorder %s143, %s145
      %p149 = scmp.eq.s32.totalorder %s20, 0
      %p150 = por %p148, %p149
      %p151 = scmp.ne.s32.totalorder %s143, %s145
      %p152 = scmp.eq.s32.totalorder %s25, 1
      %p153 = por %p151, %p152
      %p154 = scmp.ne.s32.totalorder %s145, %s146
      %p155 = scmp.eq.s32.totalorder %s25, 0
      %p156 = por %p154, %p155
      %p157 = scmp.ne.s32.totalorder %s145, %s146
      %p158 = scmp.eq.s32.totalorder %s26, 1
      %p159 = por %p157, %p158
      %p161 = scmp.ne.s32.totalorder %s146, %s160
      %p162 = scmp.eq.s32.totalorder %s26, 0
      %p163 = por %p161, %p162
      %s165 = sadd.s32 %s164, 1
      %p168 = scmp.eq.s32.totalorder %s20, 1
      %p169 = scmp.ne.s32.totalorder %s164, %s166
      %p170 = scmp.eq.s32.totalorder %s20, 0
      %p171 = por %p169, %p170
      %p172 = scmp.ne.s32.totalorder %s164, %s166
      %p173 = scmp.eq.s32.totalorder %s25, 1
      %p174 = por %p172, %p173
      %p175 = scmp.ne.s32.totalorder %s166, %s167
      %p176 = scmp.eq.s32.totalorder %s25, 0
      %p177 = por %p175, %p176
      %p178 = scmp.ne.s32.totalorder %s166, %s167
      %p179 = scmp.eq.s32.totalorder %s26, 1
      %p180 = por %p178, %p179
      %p182 = scmp.ne.s32.totalorder %s167, %s181
      %p183 = scmp.eq.s32.totalorder %s26, 0
      %p184 = por %p182, %p183
      %s186 = sadd.s32 %s185, 1
      %p189 = scmp.eq.s32.totalorder %s20, 1
      %p190 = scmp.ne.s32.totalorder %s185, %s187
      %p191 = scmp.eq.s32.totalorder %s20, 0
      %p192 = por %p190, %p191
      %p193 = scmp.ne.s32.totalorder %s185, %s187
      %p194 = scmp.eq.s32.totalorder %s25, 1
      %p195 = por %p193, %p194
      %p196 = scmp.ne.s32.totalorder %s187, %s188
      %p197 = scmp.eq.s32.totalorder %s25, 0
      %p198 = por %p196, %p197
      %p199 = scmp.ne.s32.totalorder %s187, %s188
      %p200 = scmp.eq.s32.totalorder %s26, 1
      %p201 = por %p199, %p200
      %p203 = scmp.ne.s32.totalorder %s188, %s202
      %p204 = scmp.eq.s32.totalorder %s26, 0
      %p205 = por %p203, %p204
      %s206 = ssub.s32 %s20, %s27
      %p207 = scmp.eq.s32.totalorder %s206, 0
      %s209 = sadd.s32 %s208, 1
      %s210 = scalar_select %p207, %s208, %s209
      %p213 = pneg %p207
      %p214 = scmp.eq.s32.totalorder %s20, 1
      %p215 = por %p213, %p214
      %p216 = scmp.ne.s32.totalorder %s208, %s211
      %p217 = scmp.eq.s32.totalorder %s20, 0
      %p218 = por %p216, %p217
      %p219 = scmp.ne.s32.totalorder %s208, %s211
      %p220 = scmp.eq.s32.totalorder %s25, 1
      %p221 = por %p219, %p220
      %p222 = scmp.ne.s32.totalorder %s211, %s212
      %p223 = scmp.eq.s32.totalorder %s25, 0
      %p224 = por %p222, %p223
      %p225 = scmp.ne.s32.totalorder %s211, %s212
      %p226 = scmp.eq.s32.totalorder %s26, 1
      %p227 = por %p225, %p226
      %p229 = scmp.ne.s32.totalorder %s212, %s228
      %p230 = scmp.eq.s32.totalorder %s26, 0
      %p231 = por %p229, %p230
      %s233 = sadd.s32 %s232, 1
      %p236 = scmp.eq.s32.totalorder %s20, 1
      %p237 = scmp.ne.s32.totalorder %s232, %s234
      %p238 = scmp.eq.s32.totalorder %s20, 0
      %p239 = por %p237, %p238
      %p240 = scmp.ne.s32.totalorder %s232, %s234
      %p241 = scmp.eq.s32.totalorder %s25, 1
      %p242 = por %p240, %p241
      %p243 = scmp.ne.s32.totalorder %s234, %s235
      %p244 = scmp.eq.s32.totalorder %s25, 0
      %p245 = por %p243, %p244
      %p246 = scmp.ne.s32.totalorder %s234, %s235
      %p247 = scmp.eq.s32.totalorder %s26, 1
      %p248 = por %p246, %p247
      %p250 = scmp.ne.s32.totalorder %s235, %s249
      %p251 = scmp.eq.s32.totalorder %s26, 0
      %p252 = por %p250, %p251
      %p253 = scmp.le.s32.totalorder 1, %s20
      %p254 = scmp.lt.s32.totalorder %s20, 3
      %p255 = pnand %p253, %p254
      %p256 = pneg %p255
      // Predicated region
      $region9: #{tpu_custom_call.1} parent=5 // pred_check
        _
      $region10: #{tpu_custom_call.1} parent=5 // pred_check_branch
        %258 = sbr.rel (%p255) target = $region12
      $region11: #{tpu_custom_call.1} parent=5 // pred_region
        %s259 = ssub.s32 %s20, 1
        // Predicated region
        $region13: #{tpu_custom_call.1} parent=11 // pred_check
          %p260 = pneg %p93
        $region14: #{tpu_custom_call.1} parent=11 // pred_check_branch
          %262 = sbr.rel (%p260) target = $region16
        $region15: #{tpu_custom_call.1} parent=11 // pred_region
          _
        $region16: #{tpu_custom_call.1} parent=11 // pred_fallthru
          _
        // Predicated region
        $region17: #{tpu_custom_call.1} parent=11 // pred_check
          %p263 = pneg %p114
        $region18: #{tpu_custom_call.1} parent=11 // pred_check_branch
          %265 = sbr.rel (%p263) target = $region20
        $region19: #{tpu_custom_call.1} parent=11 // pred_region
          _
        $region20: #{tpu_custom_call.1} parent=11 // pred_fallthru
          _
        // Predicated region
        $region21: #{tpu_custom_call.1} parent=11 // pred_check
          %p266 = pneg %p135
        $region22: #{tpu_custom_call.1} parent=11 // pred_check_branch
          %268 = sbr.rel (%p266) target = $region24
        $region23: #{tpu_custom_call.1} parent=11 // pred_region
          _
        $region24: #{tpu_custom_call.1} parent=11 // pred_fallthru
          _
        // Predicated region
        $region25: #{tpu_custom_call.1} parent=11 // pred_check
          %p269 = pneg %p156
        $region26: #{tpu_custom_call.1} parent=11 // pred_check_branch
          %271 = sbr.rel (%p269) target = $region28
        $region27: #{tpu_custom_call.1} parent=11 // pred_region
          _
        $region28: #{tpu_custom_call.1} parent=11 // pred_fallthru
          _
        // Predicated region
        $region29: #{tpu_custom_call.1} parent=11 // pred_check
          %p272 = pneg %p177
        $region30: #{tpu_custom_call.1} parent=11 // pred_check_branch
          %274 = sbr.rel (%p272) target = $region32
        $region31: #{tpu_custom_call.1} parent=11 // pred_region
          _
        $region32: #{tpu_custom_call.1} parent=11 // pred_fallthru
          _
        // Predicated region
        $region33: #{tpu_custom_call.1} parent=11 // pred_check
          %p275 = pneg %p198
        $region34: #{tpu_custom_call.1} parent=11 // pred_check_branch
          %277 = sbr.rel (%p275) target = $region36
        $region35: #{tpu_custom_call.1} parent=11 // pred_region
          _
        $region36: #{tpu_custom_call.1} parent=11 // pred_fallthru
          _
      $region12: #{tpu_custom_call.1} parent=5 // pred_fallthru
        _
      %p278 = scmp.lt.s32.totalorder %s20, 2
      // Predicated region
      $region37: #{tpu_custom_call.1} parent=5 // pred_check
        %p279 = pneg %p278
      $region38: #{tpu_custom_call.1} parent=5 // pred_check_branch
        %281 = sbr.rel (%p279) target = $region40
      $region39: #{tpu_custom_call.1} parent=5 // pred_region
        // Predicated region
        $region41: #{tpu_custom_call.1} parent=39 // pred_check
          %p282 = pneg %p40
        $region42: #{tpu_custom_call.1} parent=39 // pred_check_branch
          %284 = sbr.rel (%p282) target = $region44
        $region43: #{tpu_custom_call.1} parent=39 // pred_region
          %s285 = sand.u32 %s30, 1
          %s286 = sand.u32 %s30, 1
          %s287 = smul.addr %s286, 1024
          %s288 = scalar_lea.vmem [#allocation3], %s287
          %s289 = smul.u32 16, %s20
          %s290 = smul.addr %s289, 8
          %s291 = scalar_lea.vmem %s0, %s290
          // Predicated region
          $region45: #{tpu_custom_call.1} parent=43 // pred_check
            _
          $region46: #{tpu_custom_call.1} parent=43 // pred_check_branch
            %293 = sbr.rel (0) target = $region48
          $region47: #{tpu_custom_call.1} parent=43 // pred_region
            // Predicated region
            $region49: #{tpu_custom_call.1} parent=47 // pred_check
              _
            $region50: #{tpu_custom_call.1} parent=47 // pred_check_branch
              %295 = sbr.rel (0) target = $region52
            $region51: #{tpu_custom_call.1} parent=47 // pred_region
              // Predicated region
              $region64: #{tpu_custom_call.1} parent=51 // pred_check
                _
              $region65: #{tpu_custom_call.1} parent=51 // pred_check_branch
                %564 = sbr.rel (0) target = $region67
              $region66: #{tpu_custom_call.1} parent=51 // pred_region
                loop: start=0, step=1, limit=1
                $region68: #{tpu_custom_call.1} parent=66 // loop_pre_header
                  _
                $region69: #{tpu_custom_call.1} parent=66 // loop_header
                  %s566 = sphi 0, %s570
                  %p567 = scmp.ge.s32.totalorder %s566, 1
                  %s571 = sphi %s291, %s291
                  %s572 = sphi %s288, %s288
                $region70: #{tpu_custom_call.1} parent=66 // loop_header_branch
                  %569 = sbr.rel (%p567) target = $region74
                $region71: #{tpu_custom_call.1} parent=66 // loop_body
                  %v573 = vld [vmem:[%s571] sm:$0xff]
                  %574 = vst [vmem:[%s572] sm:$0xff] %v573
                  %v575 = vld [vmem:[%s571 + $0x8] sm:$0xff]
                  %576 = vst [vmem:[%s572 + $0x8] sm:$0xff] %v575
                  %v577 = vld [vmem:[%s571 + $0x10] sm:$0xff]
                  %578 = vst [vmem:[%s572 + $0x10] sm:$0xff] %v577
                  %v579 = vld [vmem:[%s571 + $0x18] sm:$0xff]
                  %580 = vst [vmem:[%s572 + $0x18] sm:$0xff] %v579
                  %v581 = vld [vmem:[%s571 + $0x20] sm:$0xff]
                  %582 = vst [vmem:[%s572 + $0x20] sm:$0xff] %v581
                  %v583 = vld [vmem:[%s571 + $0x28] sm:$0xff]
                  %584 = vst [vmem:[%s572 + $0x28] sm:$0xff] %v583
                  %v585 = vld [vmem:[%s571 + $0x30] sm:$0xff]
                  %586 = vst [vmem:[%s572 + $0x30] sm:$0xff] %v585
                  %v587 = vld [vmem:[%s571 + $0x38] sm:$0xff]
                  %588 = vst [vmem:[%s572 + $0x38] sm:$0xff] %v587
                  %v589 = vld [vmem:[%s571 + $0x40] sm:$0xff]
                  %590 = vst [vmem:[%s572 + $0x40] sm:$0xff] %v589
                  %v591 = vld [vmem:[%s571 + $0x48] sm:$0xff]
                  %592 = vst [vmem:[%s572 + $0x48] sm:$0xff] %v591
                  %v593 = vld [vmem:[%s571 + $0x50] sm:$0xff]
                  %594 = vst [vmem:[%s572 + $0x50] sm:$0xff] %v593
                  %v595 = vld [vmem:[%s571 + $0x58] sm:$0xff]
                  %596 = vst [vmem:[%s572 + $0x58] sm:$0xff] %v595
                  %v597 = vld [vmem:[%s571 + $0x60] sm:$0xff]
                  %598 = vst [vmem:[%s572 + $0x60] sm:$0xff] %v597
                  %v599 = vld [vmem:[%s571 + $0x68] sm:$0xff]
                  %600 = vst [vmem:[%s572 + $0x68] sm:$0xff] %v599
                  %v601 = vld [vmem:[%s571 + $0x70] sm:$0xff]
                  %602 = vst [vmem:[%s572 + $0x70] sm:$0xff] %v601
                  %v603 = vld [vmem:[%s571 + $0x78] sm:$0xff]
                  %604 = vst [vmem:[%s572 + $0x78] sm:$0xff] %v603
                  %v605 = vld [vmem:[%s571 + $0x100] sm:$0xff]
                  %606 = vst [vmem:[%s572 + $0x80] sm:$0xff] %v605
                  %v607 = vld [vmem:[%s571 + $0x108] sm:$0xff]
                  %608 = vst [vmem:[%s572 + $0x88] sm:$0xff] %v607
                  %v609 = vld [vmem:[%s571 + $0x110] sm:$0xff]
                  %610 = vst [vmem:[%s572 + $0x90] sm:$0xff] %v609
                  %v611 = vld [vmem:[%s571 + $0x118] sm:$0xff]
                  %612 = vst [vmem:[%s572 + $0x98] sm:$0xff] %v611
                  %v613 = vld [vmem:[%s571 + $0x120] sm:$0xff]
                  %614 = vst [vmem:[%s572 + $0xa0] sm:$0xff] %v613
                  %v615 = vld [vmem:[%s571 + $0x128] sm:$0xff]
                  %616 = vst [vmem:[%s572 + $0xa8] sm:$0xff] %v615
                  %v617 = vld [vmem:[%s571 + $0x130] sm:$0xff]
                  %618 = vst [vmem:[%s572 + $0xb0] sm:$0xff] %v617
                  %v619 = vld [vmem:[%s571 + $0x138] sm:$0xff]
                  %620 = vst [vmem:[%s572 + $0xb8] sm:$0xff] %v619
                  %v621 = vld [vmem:[%s571 + $0x140] sm:$0xff]
                  %622 = vst [vmem:[%s572 + $0xc0] sm:$0xff] %v621
                  %v623 = vld [vmem:[%s571 + $0x148] sm:$0xff]
                  %624 = vst [vmem:[%s572 + $0xc8] sm:$0xff] %v623
                  %v625 = vld [vmem:[%s571 + $0x150] sm:$0xff]
                  %626 = vst [vmem:[%s572 + $0xd0] sm:$0xff] %v625
                  %v627 = vld [vmem:[%s571 + $0x158] sm:$0xff]
                  %628 = vst [vmem:[%s572 + $0xd8] sm:$0xff] %v627
                  %v629 = vld [vmem:[%s571 + $0x160] sm:$0xff]
                  %630 = vst [vmem:[%s572 + $0xe0] sm:$0xff] %v629
                  %v631 = vld [vmem:[%s571 + $0x168] sm:$0xff]
                  %632 = vst [vmem:[%s572 + $0xe8] sm:$0xff] %v631
                  %v633 = vld [vmem:[%s571 + $0x170] sm:$0xff]
                  %634 = vst [vmem:[%s572 + $0xf0] sm:$0xff] %v633
                  %v635 = vld [vmem:[%s571 + $0x178] sm:$0xff]
                  %636 = vst [vmem:[%s572 + $0xf8] sm:$0xff] %v635
                  %v637 = vld [vmem:[%s571 + $0x200] sm:$0xff]
                  %638 = vst [vmem:[%s572 + $0x100] sm:$0xff] %v637
                  %v639 = vld [vmem:[%s571 + $0x208] sm:$0xff]
                  %640 = vst [vmem:[%s572 + $0x108] sm:$0xff] %v639
                  %v641 = vld [vmem:[%s571 + $0x210] sm:$0xff]
                  %642 = vst [vmem:[%s572 + $0x110] sm:$0xff] %v641
                  %v643 = vld [vmem:[%s571 + $0x218] sm:$0xff]
                  %644 = vst [vmem:[%s572 + $0x118] sm:$0xff] %v643
                  %v645 = vld [vmem:[%s571 + $0x220] sm:$0xff]
                  %646 = vst [vmem:[%s572 + $0x120] sm:$0xff] %v645
                  %v647 = vld [vmem:[%s571 + $0x228] sm:$0xff]
                  %648 = vst [vmem:[%s572 + $0x128] sm:$0xff] %v647
                  %v649 = vld [vmem:[%s571 + $0x230] sm:$0xff]
                  %650 = vst [vmem:[%s572 + $0x130] sm:$0xff] %v649
                  %v651 = vld [vmem:[%s571 + $0x238] sm:$0xff]
                  %652 = vst [vmem:[%s572 + $0x138] sm:$0xff] %v651
                  %v653 = vld [vmem:[%s571 + $0x240] sm:$0xff]
                  %654 = vst [vmem:[%s572 + $0x140] sm:$0xff] %v653
                  %v655 = vld [vmem:[%s571 + $0x248] sm:$0xff]
                  %656 = vst [vmem:[%s572 + $0x148] sm:$0xff] %v655
                  %v657 = vld [vmem:[%s571 + $0x250] sm:$0xff]
                  %658 = vst [vmem:[%s572 + $0x150] sm:$0xff] %v657
                  %v659 = vld [vmem:[%s571 + $0x258] sm:$0xff]
                  %660 = vst [vmem:[%s572 + $0x158] sm:$0xff] %v659
                  %v661 = vld [vmem:[%s571 + $0x260] sm:$0xff]
                  %662 = vst [vmem:[%s572 + $0x160] sm:$0xff] %v661
                  %v663 = vld [vmem:[%s571 + $0x268] sm:$0xff]
                  %664 = vst [vmem:[%s572 + $0x168] sm:$0xff] %v663
                  %v665 = vld [vmem:[%s571 + $0x270] sm:$0xff]
                  %666 = vst [vmem:[%s572 + $0x170] sm:$0xff] %v665
                  %v667 = vld [vmem:[%s571 + $0x278] sm:$0xff]
                  %668 = vst [vmem:[%s572 + $0x178] sm:$0xff] %v667
                  %v669 = vld [vmem:[%s571 + $0x300] sm:$0xff]
                  %670 = vst [vmem:[%s572 + $0x180] sm:$0xff] %v669
                  %v671 = vld [vmem:[%s571 + $0x308] sm:$0xff]
                  %672 = vst [vmem:[%s572 + $0x188] sm:$0xff] %v671
                  %v673 = vld [vmem:[%s571 + $0x310] sm:$0xff]
                  %674 = vst [vmem:[%s572 + $0x190] sm:$0xff] %v673
                  %v675 = vld [vmem:[%s571 + $0x318] sm:$0xff]
                  %676 = vst [vmem:[%s572 + $0x198] sm:$0xff] %v675
                  %v677 = vld [vmem:[%s571 + $0x320] sm:$0xff]
                  %678 = vst [vmem:[%s572 + $0x1a0] sm:$0xff] %v677
                  %v679 = vld [vmem:[%s571 + $0x328] sm:$0xff]
                  %680 = vst [vmem:[%s572 + $0x1a8] sm:$0xff] %v679
                  %v681 = vld [vmem:[%s571 + $0x330] sm:$0xff]
                  %682 = vst [vmem:[%s572 + $0x1b0] sm:$0xff] %v681
                  %v683 = vld [vmem:[%s571 + $0x338] sm:$0xff]
                  %684 = vst [vmem:[%s572 + $0x1b8] sm:$0xff] %v683
                  %v685 = vld [vmem:[%s571 + $0x340] sm:$0xff]
                  %686 = vst [vmem:[%s572 + $0x1c0] sm:$0xff] %v685
                  %v687 = vld [vmem:[%s571 + $0x348] sm:$0xff]
                  %688 = vst [vmem:[%s572 + $0x1c8] sm:$0xff] %v687
                  %v689 = vld [vmem:[%s571 + $0x350] sm:$0xff]
                  %690 = vst [vmem:[%s572 + $0x1d0] sm:$0xff] %v689
                  %v691 = vld [vmem:[%s571 + $0x358] sm:$0xff]
                  %692 = vst [vmem:[%s572 + $0x1d8] sm:$0xff] %v691
                  %v693 = vld [vmem:[%s571 + $0x360] sm:$0xff]
                  %694 = vst [vmem:[%s572 + $0x1e0] sm:$0xff] %v693
                  %v695 = vld [vmem:[%s571 + $0x368] sm:$0xff]
                  %696 = vst [vmem:[%s572 + $0x1e8] sm:$0xff] %v695
                  %v697 = vld [vmem:[%s571 + $0x370] sm:$0xff]
                  %698 = vst [vmem:[%s572 + $0x1f0] sm:$0xff] %v697
                  %v699 = vld [vmem:[%s571 + $0x378] sm:$0xff]
                  %700 = vst [vmem:[%s572 + $0x1f8] sm:$0xff] %v699
                  %v701 = vld [vmem:[%s571 + $0x400] sm:$0xff]
                  %702 = vst [vmem:[%s572 + $0x200] sm:$0xff] %v701
                  %v703 = vld [vmem:[%s571 + $0x408] sm:$0xff]
                  %704 = vst [vmem:[%s572 + $0x208] sm:$0xff] %v703
                  %v705 = vld [vmem:[%s571 + $0x410] sm:$0xff]
                  %706 = vst [vmem:[%s572 + $0x210] sm:$0xff] %v705
                  %v707 = vld [vmem:[%s571 + $0x418] sm:$0xff]
                  %708 = vst [vmem:[%s572 + $0x218] sm:$0xff] %v707
                  %v709 = vld [vmem:[%s571 + $0x420] sm:$0xff]
                  %710 = vst [vmem:[%s572 + $0x220] sm:$0xff] %v709
                  %v711 = vld [vmem:[%s571 + $0x428] sm:$0xff]
                  %712 = vst [vmem:[%s572 + $0x228] sm:$0xff] %v711
                  %v713 = vld [vmem:[%s571 + $0x430] sm:$0xff]
                  %714 = vst [vmem:[%s572 + $0x230] sm:$0xff] %v713
                  %v715 = vld [vmem:[%s571 + $0x438] sm:$0xff]
                  %716 = vst [vmem:[%s572 + $0x238] sm:$0xff] %v715
                  %v717 = vld [vmem:[%s571 + $0x440] sm:$0xff]
                  %718 = vst [vmem:[%s572 + $0x240] sm:$0xff] %v717
                  %v719 = vld [vmem:[%s571 + $0x448] sm:$0xff]
                  %720 = vst [vmem:[%s572 + $0x248] sm:$0xff] %v719
                  %v721 = vld [vmem:[%s571 + $0x450] sm:$0xff]
                  %722 = vst [vmem:[%s572 + $0x250] sm:$0xff] %v721
                  %v723 = vld [vmem:[%s571 + $0x458] sm:$0xff]
                  %724 = vst [vmem:[%s572 + $0x258] sm:$0xff] %v723
                  %v725 = vld [vmem:[%s571 + $0x460] sm:$0xff]
                  %726 = vst [vmem:[%s572 + $0x260] sm:$0xff] %v725
                  %v727 = vld [vmem:[%s571 + $0x468] sm:$0xff]
                  %728 = vst [vmem:[%s572 + $0x268] sm:$0xff] %v727
                  %v729 = vld [vmem:[%s571 + $0x470] sm:$0xff]
                  %730 = vst [vmem:[%s572 + $0x270] sm:$0xff] %v729
                  %v731 = vld [vmem:[%s571 + $0x478] sm:$0xff]
                  %732 = vst [vmem:[%s572 + $0x278] sm:$0xff] %v731
                  %v733 = vld [vmem:[%s571 + $0x500] sm:$0xff]
                  %734 = vst [vmem:[%s572 + $0x280] sm:$0xff] %v733
                  %v735 = vld [vmem:[%s571 + $0x508] sm:$0xff]
                  %736 = vst [vmem:[%s572 + $0x288] sm:$0xff] %v735
                  %v737 = vld [vmem:[%s571 + $0x510] sm:$0xff]
                  %738 = vst [vmem:[%s572 + $0x290] sm:$0xff] %v737
                  %v739 = vld [vmem:[%s571 + $0x518] sm:$0xff]
                  %740 = vst [vmem:[%s572 + $0x298] sm:$0xff] %v739
                  %v741 = vld [vmem:[%s571 + $0x520] sm:$0xff]
                  %742 = vst [vmem:[%s572 + $0x2a0] sm:$0xff] %v741
                  %v743 = vld [vmem:[%s571 + $0x528] sm:$0xff]
                  %744 = vst [vmem:[%s572 + $0x2a8] sm:$0xff] %v743
                  %v745 = vld [vmem:[%s571 + $0x530] sm:$0xff]
                  %746 = vst [vmem:[%s572 + $0x2b0] sm:$0xff] %v745
                  %v747 = vld [vmem:[%s571 + $0x538] sm:$0xff]
                  %748 = vst [vmem:[%s572 + $0x2b8] sm:$0xff] %v747
                  %v749 = vld [vmem:[%s571 + $0x540] sm:$0xff]
                  %750 = vst [vmem:[%s572 + $0x2c0] sm:$0xff] %v749
                  %v751 = vld [vmem:[%s571 + $0x548] sm:$0xff]
                  %752 = vst [vmem:[%s572 + $0x2c8] sm:$0xff] %v751
                  %v753 = vld [vmem:[%s571 + $0x550] sm:$0xff]
                  %754 = vst [vmem:[%s572 + $0x2d0] sm:$0xff] %v753
                  %v755 = vld [vmem:[%s571 + $0x558] sm:$0xff]
                  %756 = vst [vmem:[%s572 + $0x2d8] sm:$0xff] %v755
                  %v757 = vld [vmem:[%s571 + $0x560] sm:$0xff]
                  %758 = vst [vmem:[%s572 + $0x2e0] sm:$0xff] %v757
                  %v759 = vld [vmem:[%s571 + $0x568] sm:$0xff]
                  %760 = vst [vmem:[%s572 + $0x2e8] sm:$0xff] %v759
                  %v761 = vld [vmem:[%s571 + $0x570] sm:$0xff]
                  %762 = vst [vmem:[%s572 + $0x2f0] sm:$0xff] %v761
                  %v763 = vld [vmem:[%s571 + $0x578] sm:$0xff]
                  %764 = vst [vmem:[%s572 + $0x2f8] sm:$0xff] %v763
                  %v765 = vld [vmem:[%s571 + $0x600] sm:$0xff]
                  %766 = vst [vmem:[%s572 + $0x300] sm:$0xff] %v765
                  %v767 = vld [vmem:[%s571 + $0x608] sm:$0xff]
                  %768 = vst [vmem:[%s572 + $0x308] sm:$0xff] %v767
                  %v769 = vld [vmem:[%s571 + $0x610] sm:$0xff]
                  %770 = vst [vmem:[%s572 + $0x310] sm:$0xff] %v769
                  %v771 = vld [vmem:[%s571 + $0x618] sm:$0xff]
                  %772 = vst [vmem:[%s572 + $0x318] sm:$0xff] %v771
                  %v773 = vld [vmem:[%s571 + $0x620] sm:$0xff]
                  %774 = vst [vmem:[%s572 + $0x320] sm:$0xff] %v773
                  %v775 = vld [vmem:[%s571 + $0x628] sm:$0xff]
                  %776 = vst [vmem:[%s572 + $0x328] sm:$0xff] %v775
                  %v777 = vld [vmem:[%s571 + $0x630] sm:$0xff]
                  %778 = vst [vmem:[%s572 + $0x330] sm:$0xff] %v777
                  %v779 = vld [vmem:[%s571 + $0x638] sm:$0xff]
                  %780 = vst [vmem:[%s572 + $0x338] sm:$0xff] %v779
                  %v781 = vld [vmem:[%s571 + $0x640] sm:$0xff]
                  %782 = vst [vmem:[%s572 + $0x340] sm:$0xff] %v781
                  %v783 = vld [vmem:[%s571 + $0x648] sm:$0xff]
                  %784 = vst [vmem:[%s572 + $0x348] sm:$0xff] %v783
                  %v785 = vld [vmem:[%s571 + $0x650] sm:$0xff]
                  %786 = vst [vmem:[%s572 + $0x350] sm:$0xff] %v785
                  %v787 = vld [vmem:[%s571 + $0x658] sm:$0xff]
                  %788 = vst [vmem:[%s572 + $0x358] sm:$0xff] %v787
                  %v789 = vld [vmem:[%s571 + $0x660] sm:$0xff]
                  %790 = vst [vmem:[%s572 + $0x360] sm:$0xff] %v789
                  %v791 = vld [vmem:[%s571 + $0x668] sm:$0xff]
                  %792 = vst [vmem:[%s572 + $0x368] sm:$0xff] %v791
                  %v793 = vld [vmem:[%s571 + $0x670] sm:$0xff]
                  %794 = vst [vmem:[%s572 + $0x370] sm:$0xff] %v793
                  %v795 = vld [vmem:[%s571 + $0x678] sm:$0xff]
                  %796 = vst [vmem:[%s572 + $0x378] sm:$0xff] %v795
                  %v797 = vld [vmem:[%s571 + $0x700] sm:$0xff]
                  %798 = vst [vmem:[%s572 + $0x380] sm:$0xff] %v797
                  %v799 = vld [vmem:[%s571 + $0x708] sm:$0xff]
                  %800 = vst [vmem:[%s572 + $0x388] sm:$0xff] %v799
                  %v801 = vld [vmem:[%s571 + $0x710] sm:$0xff]
                  %802 = vst [vmem:[%s572 + $0x390] sm:$0xff] %v801
                  %v803 = vld [vmem:[%s571 + $0x718] sm:$0xff]
                  %804 = vst [vmem:[%s572 + $0x398] sm:$0xff] %v803
                  %v805 = vld [vmem:[%s571 + $0x720] sm:$0xff]
                  %806 = vst [vmem:[%s572 + $0x3a0] sm:$0xff] %v805
                  %v807 = vld [vmem:[%s571 + $0x728] sm:$0xff]
                  %808 = vst [vmem:[%s572 + $0x3a8] sm:$0xff] %v807
                  %v809 = vld [vmem:[%s571 + $0x730] sm:$0xff]
                  %810 = vst [vmem:[%s572 + $0x3b0] sm:$0xff] %v809
                  %v811 = vld [vmem:[%s571 + $0x738] sm:$0xff]
                  %812 = vst [vmem:[%s572 + $0x3b8] sm:$0xff] %v811
                  %v813 = vld [vmem:[%s571 + $0x740] sm:$0xff]
                  %814 = vst [vmem:[%s572 + $0x3c0] sm:$0xff] %v813
                  %v815 = vld [vmem:[%s571 + $0x748] sm:$0xff]
                  %816 = vst [vmem:[%s572 + $0x3c8] sm:$0xff] %v815
                  %v817 = vld [vmem:[%s571 + $0x750] sm:$0xff]
                  %818 = vst [vmem:[%s572 + $0x3d0] sm:$0xff] %v817
                  %v819 = vld [vmem:[%s571 + $0x758] sm:$0xff]
                  %820 = vst [vmem:[%s572 + $0x3d8] sm:$0xff] %v819
                  %v821 = vld [vmem:[%s571 + $0x760] sm:$0xff]
                  %822 = vst [vmem:[%s572 + $0x3e0] sm:$0xff] %v821
                  %v823 = vld [vmem:[%s571 + $0x768] sm:$0xff]
                  %824 = vst [vmem:[%s572 + $0x3e8] sm:$0xff] %v823
                  %v825 = vld [vmem:[%s571 + $0x770] sm:$0xff]
                  %826 = vst [vmem:[%s572 + $0x3f0] sm:$0xff] %v825
                  %v827 = vld [vmem:[%s571 + $0x778] sm:$0xff]
                  %828 = vst [vmem:[%s572 + $0x3f8] sm:$0xff] %v827
                $region72: #{tpu_custom_call.1} parent=66 // loop_footer
                  %s570 = sadd.s32 1, %s566
                $region73: #{tpu_custom_call.1} parent=66 // loop_footer_branch
                  %565 = sbr.rel target = $region69
                $region74: #{tpu_custom_call.1} parent=66 // loop_exit
                  _
              $region67: #{tpu_custom_call.1} parent=51 // pred_fallthru
                _
              // Predicated region
              $region75: #{tpu_custom_call.1} parent=51 // pred_check
                _
              $region76: #{tpu_custom_call.1} parent=51 // pred_check_branch
                %830 = sbr.rel target = $region78
              $region77: #{tpu_custom_call.1} parent=51 // pred_region
                _
              $region78: #{tpu_custom_call.1} parent=51 // pred_fallthru
                _
            $region52: #{tpu_custom_call.1} parent=47 // pred_fallthru
              _
            // Predicated region
            $region53: #{tpu_custom_call.1} parent=47 // pred_check
              _
            $region54: #{tpu_custom_call.1} parent=47 // pred_check_branch
              %297 = sbr.rel target = $region56
            $region55: #{tpu_custom_call.1} parent=47 // pred_region
              loop: start=0, step=1, limit=1
              $region57: #{tpu_custom_call.1} parent=55 // loop_pre_header
                _
              $region58: #{tpu_custom_call.1} parent=55 // loop_header
                %s300 = sphi 0, %s304
                %p301 = scmp.ge.s32.totalorder %s300, 1
                %s305 = sphi %s291, %s291
                %s306 = sphi %s288, %s288
              $region59: #{tpu_custom_call.1} parent=55 // loop_header_branch
                %303 = sbr.rel (%p301) target = $region63
              $region60: #{tpu_custom_call.1} parent=55 // loop_body
                %v307 = vld [vmem:[%s305] sm:$0xff]
                %308 = vst [vmem:[%s306] sm:$0xff] %v307
                %v309 = vld [vmem:[%s305 + $0x8] sm:$0xff]
                %310 = vst [vmem:[%s306 + $0x8] sm:$0xff] %v309
                %v311 = vld [vmem:[%s305 + $0x10] sm:$0xff]
                %312 = vst [vmem:[%s306 + $0x10] sm:$0xff] %v311
                %v313 = vld [vmem:[%s305 + $0x18] sm:$0xff]
                %314 = vst [vmem:[%s306 + $0x18] sm:$0xff] %v313
                %v315 = vld [vmem:[%s305 + $0x20] sm:$0xff]
                %316 = vst [vmem:[%s306 + $0x20] sm:$0xff] %v315
                %v317 = vld [vmem:[%s305 + $0x28] sm:$0xff]
                %318 = vst [vmem:[%s306 + $0x28] sm:$0xff] %v317
                %v319 = vld [vmem:[%s305 + $0x30] sm:$0xff]
                %320 = vst [vmem:[%s306 + $0x30] sm:$0xff] %v319
                %v321 = vld [vmem:[%s305 + $0x38] sm:$0xff]
                %322 = vst [vmem:[%s306 + $0x38] sm:$0xff] %v321
                %v323 = vld [vmem:[%s305 + $0x40] sm:$0xff]
                %324 = vst [vmem:[%s306 + $0x40] sm:$0xff] %v323
                %v325 = vld [vmem:[%s305 + $0x48] sm:$0xff]
                %326 = vst [vmem:[%s306 + $0x48] sm:$0xff] %v325
                %v327 = vld [vmem:[%s305 + $0x50] sm:$0xff]
                %328 = vst [vmem:[%s306 + $0x50] sm:$0xff] %v327
                %v329 = vld [vmem:[%s305 + $0x58] sm:$0xff]
                %330 = vst [vmem:[%s306 + $0x58] sm:$0xff] %v329
                %v331 = vld [vmem:[%s305 + $0x60] sm:$0xff]
                %332 = vst [vmem:[%s306 + $0x60] sm:$0xff] %v331
                %v333 = vld [vmem:[%s305 + $0x68] sm:$0xff]
                %334 = vst [vmem:[%s306 + $0x68] sm:$0xff] %v333
                %v335 = vld [vmem:[%s305 + $0x70] sm:$0xff]
                %336 = vst [vmem:[%s306 + $0x70] sm:$0xff] %v335
                %v337 = vld [vmem:[%s305 + $0x78] sm:$0xff]
                %338 = vst [vmem:[%s306 + $0x78] sm:$0xff] %v337
                %v339 = vld [vmem:[%s305 + $0x100] sm:$0xff]
                %340 = vst [vmem:[%s306 + $0x80] sm:$0xff] %v339
                %v341 = vld [vmem:[%s305 + $0x108] sm:$0xff]
                %342 = vst [vmem:[%s306 + $0x88] sm:$0xff] %v341
                %v343 = vld [vmem:[%s305 + $0x110] sm:$0xff]
                %344 = vst [vmem:[%s306 + $0x90] sm:$0xff] %v343
                %v345 = vld [vmem:[%s305 + $0x118] sm:$0xff]
                %346 = vst [vmem:[%s306 + $0x98] sm:$0xff] %v345
                %v347 = vld [vmem:[%s305 + $0x120] sm:$0xff]
                %348 = vst [vmem:[%s306 + $0xa0] sm:$0xff] %v347
                %v349 = vld [vmem:[%s305 + $0x128] sm:$0xff]
                %350 = vst [vmem:[%s306 + $0xa8] sm:$0xff] %v349
                %v351 = vld [vmem:[%s305 + $0x130] sm:$0xff]
                %352 = vst [vmem:[%s306 + $0xb0] sm:$0xff] %v351
                %v353 = vld [vmem:[%s305 + $0x138] sm:$0xff]
                %354 = vst [vmem:[%s306 + $0xb8] sm:$0xff] %v353
                %v355 = vld [vmem:[%s305 + $0x140] sm:$0xff]
                %356 = vst [vmem:[%s306 + $0xc0] sm:$0xff] %v355
                %v357 = vld [vmem:[%s305 + $0x148] sm:$0xff]
                %358 = vst [vmem:[%s306 + $0xc8] sm:$0xff] %v357
                %v359 = vld [vmem:[%s305 + $0x150] sm:$0xff]
                %360 = vst [vmem:[%s306 + $0xd0] sm:$0xff] %v359
                %v361 = vld [vmem:[%s305 + $0x158] sm:$0xff]
                %362 = vst [vmem:[%s306 + $0xd8] sm:$0xff] %v361
                %v363 = vld [vmem:[%s305 + $0x160] sm:$0xff]
                %364 = vst [vmem:[%s306 + $0xe0] sm:$0xff] %v363
                %v365 = vld [vmem:[%s305 + $0x168] sm:$0xff]
                %366 = vst [vmem:[%s306 + $0xe8] sm:$0xff] %v365
                %v367 = vld [vmem:[%s305 + $0x170] sm:$0xff]
                %368 = vst [vmem:[%s306 + $0xf0] sm:$0xff] %v367
                %v369 = vld [vmem:[%s305 + $0x178] sm:$0xff]
                %370 = vst [vmem:[%s306 + $0xf8] sm:$0xff] %v369
                %v371 = vld [vmem:[%s305 + $0x200] sm:$0xff]
                %372 = vst [vmem:[%s306 + $0x100] sm:$0xff] %v371
                %v373 = vld [vmem:[%s305 + $0x208] sm:$0xff]
                %374 = vst [vmem:[%s306 + $0x108] sm:$0xff] %v373
                %v375 = vld [vmem:[%s305 + $0x210] sm:$0xff]
                %376 = vst [vmem:[%s306 + $0x110] sm:$0xff] %v375
                %v377 = vld [vmem:[%s305 + $0x218] sm:$0xff]
                %378 = vst [vmem:[%s306 + $0x118] sm:$0xff] %v377
                %v379 = vld [vmem:[%s305 + $0x220] sm:$0xff]
                %380 = vst [vmem:[%s306 + $0x120] sm:$0xff] %v379
                %v381 = vld [vmem:[%s305 + $0x228] sm:$0xff]
                %382 = vst [vmem:[%s306 + $0x128] sm:$0xff] %v381
                %v383 = vld [vmem:[%s305 + $0x230] sm:$0xff]
                %384 = vst [vmem:[%s306 + $0x130] sm:$0xff] %v383
                %v385 = vld [vmem:[%s305 + $0x238] sm:$0xff]
                %386 = vst [vmem:[%s306 + $0x138] sm:$0xff] %v385
                %v387 = vld [vmem:[%s305 + $0x240] sm:$0xff]
                %388 = vst [vmem:[%s306 + $0x140] sm:$0xff] %v387
                %v389 = vld [vmem:[%s305 + $0x248] sm:$0xff]
                %390 = vst [vmem:[%s306 + $0x148] sm:$0xff] %v389
                %v391 = vld [vmem:[%s305 + $0x250] sm:$0xff]
                %392 = vst [vmem:[%s306 + $0x150] sm:$0xff] %v391
                %v393 = vld [vmem:[%s305 + $0x258] sm:$0xff]
                %394 = vst [vmem:[%s306 + $0x158] sm:$0xff] %v393
                %v395 = vld [vmem:[%s305 + $0x260] sm:$0xff]
                %396 = vst [vmem:[%s306 + $0x160] sm:$0xff] %v395
                %v397 = vld [vmem:[%s305 + $0x268] sm:$0xff]
                %398 = vst [vmem:[%s306 + $0x168] sm:$0xff] %v397
                %v399 = vld [vmem:[%s305 + $0x270] sm:$0xff]
                %400 = vst [vmem:[%s306 + $0x170] sm:$0xff] %v399
                %v401 = vld [vmem:[%s305 + $0x278] sm:$0xff]
                %402 = vst [vmem:[%s306 + $0x178] sm:$0xff] %v401
                %v403 = vld [vmem:[%s305 + $0x300] sm:$0xff]
                %404 = vst [vmem:[%s306 + $0x180] sm:$0xff] %v403
                %v405 = vld [vmem:[%s305 + $0x308] sm:$0xff]
                %406 = vst [vmem:[%s306 + $0x188] sm:$0xff] %v405
                %v407 = vld [vmem:[%s305 + $0x310] sm:$0xff]
                %408 = vst [vmem:[%s306 + $0x190] sm:$0xff] %v407
                %v409 = vld [vmem:[%s305 + $0x318] sm:$0xff]
                %410 = vst [vmem:[%s306 + $0x198] sm:$0xff] %v409
                %v411 = vld [vmem:[%s305 + $0x320] sm:$0xff]
                %412 = vst [vmem:[%s306 + $0x1a0] sm:$0xff] %v411
                %v413 = vld [vmem:[%s305 + $0x328] sm:$0xff]
                %414 = vst [vmem:[%s306 + $0x1a8] sm:$0xff] %v413
                %v415 = vld [vmem:[%s305 + $0x330] sm:$0xff]
                %416 = vst [vmem:[%s306 + $0x1b0] sm:$0xff] %v415
                %v417 = vld [vmem:[%s305 + $0x338] sm:$0xff]
                %418 = vst [vmem:[%s306 + $0x1b8] sm:$0xff] %v417
                %v419 = vld [vmem:[%s305 + $0x340] sm:$0xff]
                %420 = vst [vmem:[%s306 + $0x1c0] sm:$0xff] %v419
                %v421 = vld [vmem:[%s305 + $0x348] sm:$0xff]
                %422 = vst [vmem:[%s306 + $0x1c8] sm:$0xff] %v421
                %v423 = vld [vmem:[%s305 + $0x350] sm:$0xff]
                %424 = vst [vmem:[%s306 + $0x1d0] sm:$0xff] %v423
                %v425 = vld [vmem:[%s305 + $0x358] sm:$0xff]
                %426 = vst [vmem:[%s306 + $0x1d8] sm:$0xff] %v425
                %v427 = vld [vmem:[%s305 + $0x360] sm:$0xff]
                %428 = vst [vmem:[%s306 + $0x1e0] sm:$0xff] %v427
                %v429 = vld [vmem:[%s305 + $0x368] sm:$0xff]
                %430 = vst [vmem:[%s306 + $0x1e8] sm:$0xff] %v429
                %v431 = vld [vmem:[%s305 + $0x370] sm:$0xff]
                %432 = vst [vmem:[%s306 + $0x1f0] sm:$0xff] %v431
                %v433 = vld [vmem:[%s305 + $0x378] sm:$0xff]
                %434 = vst [vmem:[%s306 + $0x1f8] sm:$0xff] %v433
                %v435 = vld [vmem:[%s305 + $0x400] sm:$0xff]
                %436 = vst [vmem:[%s306 + $0x200] sm:$0xff] %v435
                %v437 = vld [vmem:[%s305 + $0x408] sm:$0xff]
                %438 = vst [vmem:[%s306 + $0x208] sm:$0xff] %v437
                %v439 = vld [vmem:[%s305 + $0x410] sm:$0xff]
                %440 = vst [vmem:[%s306 + $0x210] sm:$0xff] %v439
                %v441 = vld [vmem:[%s305 + $0x418] sm:$0xff]
                %442 = vst [vmem:[%s306 + $0x218] sm:$0xff] %v441
                %v443 = vld [vmem:[%s305 + $0x420] sm:$0xff]
                %444 = vst [vmem:[%s306 + $0x220] sm:$0xff] %v443
                %v445 = vld [vmem:[%s305 + $0x428] sm:$0xff]
                %446 = vst [vmem:[%s306 + $0x228] sm:$0xff] %v445
                %v447 = vld [vmem:[%s305 + $0x430] sm:$0xff]
                %448 = vst [vmem:[%s306 + $0x230] sm:$0xff] %v447
                %v449 = vld [vmem:[%s305 + $0x438] sm:$0xff]
                %450 = vst [vmem:[%s306 + $0x238] sm:$0xff] %v449
                %v451 = vld [vmem:[%s305 + $0x440] sm:$0xff]
                %452 = vst [vmem:[%s306 + $0x240] sm:$0xff] %v451
                %v453 = vld [vmem:[%s305 + $0x448] sm:$0xff]
                %454 = vst [vmem:[%s306 + $0x248] sm:$0xff] %v453
                %v455 = vld [vmem:[%s305 + $0x450] sm:$0xff]
                %456 = vst [vmem:[%s306 + $0x250] sm:$0xff] %v455
                %v457 = vld [vmem:[%s305 + $0x458] sm:$0xff]
                %458 = vst [vmem:[%s306 + $0x258] sm:$0xff] %v457
                %v459 = vld [vmem:[%s305 + $0x460] sm:$0xff]
                %460 = vst [vmem:[%s306 + $0x260] sm:$0xff] %v459
                %v461 = vld [vmem:[%s305 + $0x468] sm:$0xff]
                %462 = vst [vmem:[%s306 + $0x268] sm:$0xff] %v461
                %v463 = vld [vmem:[%s305 + $0x470] sm:$0xff]
                %464 = vst [vmem:[%s306 + $0x270] sm:$0xff] %v463
                %v465 = vld [vmem:[%s305 + $0x478] sm:$0xff]
                %466 = vst [vmem:[%s306 + $0x278] sm:$0xff] %v465
                %v467 = vld [vmem:[%s305 + $0x500] sm:$0xff]
                %468 = vst [vmem:[%s306 + $0x280] sm:$0xff] %v467
                %v469 = vld [vmem:[%s305 + $0x508] sm:$0xff]
                %470 = vst [vmem:[%s306 + $0x288] sm:$0xff] %v469
                %v471 = vld [vmem:[%s305 + $0x510] sm:$0xff]
                %472 = vst [vmem:[%s306 + $0x290] sm:$0xff] %v471
                %v473 = vld [vmem:[%s305 + $0x518] sm:$0xff]
                %474 = vst [vmem:[%s306 + $0x298] sm:$0xff] %v473
                %v475 = vld [vmem:[%s305 + $0x520] sm:$0xff]
                %476 = vst [vmem:[%s306 + $0x2a0] sm:$0xff] %v475
                %v477 = vld [vmem:[%s305 + $0x528] sm:$0xff]
                %478 = vst [vmem:[%s306 + $0x2a8] sm:$0xff] %v477
                %v479 = vld [vmem:[%s305 + $0x530] sm:$0xff]
                %480 = vst [vmem:[%s306 + $0x2b0] sm:$0xff] %v479
                %v481 = vld [vmem:[%s305 + $0x538] sm:$0xff]
                %482 = vst [vmem:[%s306 + $0x2b8] sm:$0xff] %v481
                %v483 = vld [vmem:[%s305 + $0x540] sm:$0xff]
                %484 = vst [vmem:[%s306 + $0x2c0] sm:$0xff] %v483
                %v485 = vld [vmem:[%s305 + $0x548] sm:$0xff]
                %486 = vst [vmem:[%s306 + $0x2c8] sm:$0xff] %v485
                %v487 = vld [vmem:[%s305 + $0x550] sm:$0xff]
                %488 = vst [vmem:[%s306 + $0x2d0] sm:$0xff] %v487
                %v489 = vld [vmem:[%s305 + $0x558] sm:$0xff]
                %490 = vst [vmem:[%s306 + $0x2d8] sm:$0xff] %v489
                %v491 = vld [vmem:[%s305 + $0x560] sm:$0xff]
                %492 = vst [vmem:[%s306 + $0x2e0] sm:$0xff] %v491
                %v493 = vld [vmem:[%s305 + $0x568] sm:$0xff]
                %494 = vst [vmem:[%s306 + $0x2e8] sm:$0xff] %v493
                %v495 = vld [vmem:[%s305 + $0x570] sm:$0xff]
                %496 = vst [vmem:[%s306 + $0x2f0] sm:$0xff] %v495
                %v497 = vld [vmem:[%s305 + $0x578] sm:$0xff]
                %498 = vst [vmem:[%s306 + $0x2f8] sm:$0xff] %v497
                %v499 = vld [vmem:[%s305 + $0x600] sm:$0xff]
                %500 = vst [vmem:[%s306 + $0x300] sm:$0xff] %v499
                %v501 = vld [vmem:[%s305 + $0x608] sm:$0xff]
                %502 = vst [vmem:[%s306 + $0x308] sm:$0xff] %v501
                %v503 = vld [vmem:[%s305 + $0x610] sm:$0xff]
                %504 = vst [vmem:[%s306 + $0x310] sm:$0xff] %v503
                %v505 = vld [vmem:[%s305 + $0x618] sm:$0xff]
                %506 = vst [vmem:[%s306 + $0x318] sm:$0xff] %v505
                %v507 = vld [vmem:[%s305 + $0x620] sm:$0xff]
                %508 = vst [vmem:[%s306 + $0x320] sm:$0xff] %v507
                %v509 = vld [vmem:[%s305 + $0x628] sm:$0xff]
                %510 = vst [vmem:[%s306 + $0x328] sm:$0xff] %v509
                %v511 = vld [vmem:[%s305 + $0x630] sm:$0xff]
                %512 = vst [vmem:[%s306 + $0x330] sm:$0xff] %v511
                %v513 = vld [vmem:[%s305 + $0x638] sm:$0xff]
                %514 = vst [vmem:[%s306 + $0x338] sm:$0xff] %v513
                %v515 = vld [vmem:[%s305 + $0x640] sm:$0xff]
                %516 = vst [vmem:[%s306 + $0x340] sm:$0xff] %v515
                %v517 = vld [vmem:[%s305 + $0x648] sm:$0xff]
                %518 = vst [vmem:[%s306 + $0x348] sm:$0xff] %v517
                %v519 = vld [vmem:[%s305 + $0x650] sm:$0xff]
                %520 = vst [vmem:[%s306 + $0x350] sm:$0xff] %v519
                %v521 = vld [vmem:[%s305 + $0x658] sm:$0xff]
                %522 = vst [vmem:[%s306 + $0x358] sm:$0xff] %v521
                %v523 = vld [vmem:[%s305 + $0x660] sm:$0xff]
                %524 = vst [vmem:[%s306 + $0x360] sm:$0xff] %v523
                %v525 = vld [vmem:[%s305 + $0x668] sm:$0xff]
                %526 = vst [vmem:[%s306 + $0x368] sm:$0xff] %v525
                %v527 = vld [vmem:[%s305 + $0x670] sm:$0xff]
                %528 = vst [vmem:[%s306 + $0x370] sm:$0xff] %v527
                %v529 = vld [vmem:[%s305 + $0x678] sm:$0xff]
                %530 = vst [vmem:[%s306 + $0x378] sm:$0xff] %v529
                %v531 = vld [vmem:[%s305 + $0x700] sm:$0xff]
                %532 = vst [vmem:[%s306 + $0x380] sm:$0xff] %v531
                %v533 = vld [vmem:[%s305 + $0x708] sm:$0xff]
                %534 = vst [vmem:[%s306 + $0x388] sm:$0xff] %v533
                %v535 = vld [vmem:[%s305 + $0x710] sm:$0xff]
                %536 = vst [vmem:[%s306 + $0x390] sm:$0xff] %v535
                %v537 = vld [vmem:[%s305 + $0x718] sm:$0xff]
                %538 = vst [vmem:[%s306 + $0x398] sm:$0xff] %v537
                %v539 = vld [vmem:[%s305 + $0x720] sm:$0xff]
                %540 = vst [vmem:[%s306 + $0x3a0] sm:$0xff] %v539
                %v541 = vld [vmem:[%s305 + $0x728] sm:$0xff]
                %542 = vst [vmem:[%s306 + $0x3a8] sm:$0xff] %v541
                %v543 = vld [vmem:[%s305 + $0x730] sm:$0xff]
                %544 = vst [vmem:[%s306 + $0x3b0] sm:$0xff] %v543
                %v545 = vld [vmem:[%s305 + $0x738] sm:$0xff]
                %546 = vst [vmem:[%s306 + $0x3b8] sm:$0xff] %v545
                %v547 = vld [vmem:[%s305 + $0x740] sm:$0xff]
                %548 = vst [vmem:[%s306 + $0x3c0] sm:$0xff] %v547
                %v549 = vld [vmem:[%s305 + $0x748] sm:$0xff]
                %550 = vst [vmem:[%s306 + $0x3c8] sm:$0xff] %v549
                %v551 = vld [vmem:[%s305 + $0x750] sm:$0xff]
                %552 = vst [vmem:[%s306 + $0x3d0] sm:$0xff] %v551
                %v553 = vld [vmem:[%s305 + $0x758] sm:$0xff]
                %554 = vst [vmem:[%s306 + $0x3d8] sm:$0xff] %v553
                %v555 = vld [vmem:[%s305 + $0x760] sm:$0xff]
                %556 = vst [vmem:[%s306 + $0x3e0] sm:$0xff] %v555
                %v557 = vld [vmem:[%s305 + $0x768] sm:$0xff]
                %558 = vst [vmem:[%s306 + $0x3e8] sm:$0xff] %v557
                %v559 = vld [vmem:[%s305 + $0x770] sm:$0xff]
                %560 = vst [vmem:[%s306 + $0x3f0] sm:$0xff] %v559
                %v561 = vld [vmem:[%s305 + $0x778] sm:$0xff]
                %562 = vst [vmem:[%s306 + $0x3f8] sm:$0xff] %v561
              $region61: #{tpu_custom_call.1} parent=55 // loop_footer
                %s304 = sadd.s32 1, %s300
              $region62: #{tpu_custom_call.1} parent=55 // loop_footer_branch
                %299 = sbr.rel target = $region58
              $region63: #{tpu_custom_call.1} parent=55 // loop_exit
                _
            $region56: #{tpu_custom_call.1} parent=47 // pred_fallthru
              _
          $region48: #{tpu_custom_call.1} parent=43 // pred_fallthru
            _
          %831 = vnop
        $region44: #{tpu_custom_call.1} parent=39 // pred_fallthru
          _
        // Predicated region
        $region79: #{tpu_custom_call.1} parent=39 // pred_check
          %p832 = pneg %p66
        $region80: #{tpu_custom_call.1} parent=39 // pred_check_branch
          %834 = sbr.rel (%p832) target = $region82
        $region81: #{tpu_custom_call.1} parent=39 // pred_region
          %s835 = smul.u32 16, %s20
          %p836 = scmp.lt.s32.totalorder %s835, 31
          %s837 = scalar_select %p836, %s835, 31
          %s838 = smul.addr %s837, 4
          %s839 = scalar_lea.vmem %s1, %s838
          %s840 = smul.u32 16, %s20
        $region82: #{tpu_custom_call.1} parent=39 // pred_fallthru
          _
      $region40: #{tpu_custom_call.1} parent=5 // pred_fallthru
        _
      %p841 = scmp.le.s32.totalorder 1, %s20
      %p842 = scmp.lt.s32.totalorder %s20, 3
      %p843 = pnand %p841, %p842
      %p844 = pneg %p843
      // Predicated region
      $region83: #{tpu_custom_call.1} parent=5 // pred_check
        _
      $region84: #{tpu_custom_call.1} parent=5 // pred_check_branch
        %846 = sbr.rel (%p843) target = $region86
      $region85: #{tpu_custom_call.1} parent=5 // pred_region
        %s847 = ssub.s32 %s20, 1
        %s848 = sand.u32 %s33, 1
        %s849 = sand.u32 %s33, 1
        %s850 = smul.addr %s849, 1024
        %s851 = scalar_lea.vmem [#allocation3], %s850
        // Predicated region
        $region87: #{tpu_custom_call.1} parent=85 // pred_check
          %p852 = pneg %p46
        $region88: #{tpu_custom_call.1} parent=85 // pred_check_branch
          %854 = sbr.rel (%p852) target = $region90
        $region89: #{tpu_custom_call.1} parent=85 // pred_region
          _
        $region90: #{tpu_custom_call.1} parent=85 // pred_fallthru
          _
        %s855 = sand.u32 %s33, 1
        %s856 = sand.u32 %s33, 1
        %s857 = smul.addr %s856, 1024
        %s858 = scalar_lea.vmem [#allocation3], %s857
        %p859 = pneg %p46
        %p860 = pneg %p43
        %s861 = smul.u32 16, %s25
        %p862 = scmp.lt.s32.totalorder %s861, 31
        %s863 = scalar_select %p862, %s861, 31
        %s864 = smul.addr %s863, 4
        %s865 = scalar_lea.vmem %s1, %s864
        %p866 = pneg %p72
        %p867 = pneg %p69
        %p868 = pneg %p93
        %p869 = pneg %p90
        %p870 = pneg %p114
        %p871 = pneg %p111
        %p872 = pneg %p135
        %p873 = pneg %p132
        %p874 = pneg %p156
        %p875 = pneg %p153
        %p876 = pneg %p177
        %p877 = pneg %p174
        %p878 = pneg %p198
        %p879 = pneg %p195
        %p880 = pneg %p224
        %p881 = pneg %p221
        %s882 = sand.u32 %s211, 1
        %s883 = scalar_lea.sflag [#allocation5], %s882
        %s884 = sand.u32 %s211, 1
        %s885 = smul.addr %s884, 8
        %s886 = scalar_lea.vmem [#allocation4], %s885
        %p887 = pneg %p245
        %p888 = pneg %p242
        %s889 = smul.u32 16, %s25
        %s890 = smul.u32 16, %s25
        %p891 = scmp.lt.s32.totalorder %s890, 31
        %s892 = scalar_select %p891, %s890, 31
        %s893 = smul.addr %s892, 4
        %s894 = scalar_lea.vmem %s1, %s893
        %s895 = smul.u32 16, %s25
        %p897 = scmp.eq.s32.totalorder %s25, 0
        // Predicated region
        $region91: #{tpu_custom_call.1} parent=85 // pred_check
          %p898 = pneg %p897
        $region92: #{tpu_custom_call.1} parent=85 // pred_check_branch
          %900 = sbr.rel (%p898) target = $region94
        $region93: #{tpu_custom_call.1} parent=85 // pred_region
          %901 = vst [vmem:[#allocation2] sm:$0xff] 0.0
        $region94: #{tpu_custom_call.1} parent=85 // pred_fallthru
          _
        %v902 = vld [vmem:[%s851] sm:$0xff]
        %v903 = vld [vmem:[%s851 + $0x8] sm:$0xff]
        %v904 = vld [vmem:[%s851 + $0x10] sm:$0xff]
        %v905 = vld [vmem:[%s851 + $0x18] sm:$0xff]
        %v906 = vld [vmem:[%s851 + $0x20] sm:$0xff]
        %v907 = vld [vmem:[%s851 + $0x28] sm:$0xff]
        %v908 = vld [vmem:[%s851 + $0x30] sm:$0xff]
        %v909 = vld [vmem:[%s851 + $0x38] sm:$0xff]
        %v910 = vld [vmem:[%s851 + $0x40] sm:$0xff]
        %v911 = vld [vmem:[%s851 + $0x48] sm:$0xff]
        %v912 = vld [vmem:[%s851 + $0x50] sm:$0xff]
        %v913 = vld [vmem:[%s851 + $0x58] sm:$0xff]
        %v914 = vld [vmem:[%s851 + $0x60] sm:$0xff]
        %v915 = vld [vmem:[%s851 + $0x68] sm:$0xff]
        %v916 = vld [vmem:[%s851 + $0x70] sm:$0xff]
        %v917 = vld [vmem:[%s851 + $0x78] sm:$0xff]
        %v918 = vld [vmem:[%s851 + $0x80] sm:$0xff]
        %v919 = vld [vmem:[%s851 + $0x88] sm:$0xff]
        %v920 = vld [vmem:[%s851 + $0x90] sm:$0xff]
        %v921 = vld [vmem:[%s851 + $0x98] sm:$0xff]
        %v922 = vld [vmem:[%s851 + $0xa0] sm:$0xff]
        %v923 = vld [vmem:[%s851 + $0xa8] sm:$0xff]
        %v924 = vld [vmem:[%s851 + $0xb0] sm:$0xff]
        %v925 = vld [vmem:[%s851 + $0xb8] sm:$0xff]
        %v926 = vld [vmem:[%s851 + $0xc0] sm:$0xff]
        %v927 = vld [vmem:[%s851 + $0xc8] sm:$0xff]
        %v928 = vld [vmem:[%s851 + $0xd0] sm:$0xff]
        %v929 = vld [vmem:[%s851 + $0xd8] sm:$0xff]
        %v930 = vld [vmem:[%s851 + $0xe0] sm:$0xff]
        %v931 = vld [vmem:[%s851 + $0xe8] sm:$0xff]
        %v932 = vld [vmem:[%s851 + $0xf0] sm:$0xff]
        %v933 = vld [vmem:[%s851 + $0xf8] sm:$0xff]
        %v934 = vld [vmem:[%s851 + $0x100] sm:$0xff]
        %v935 = vld [vmem:[%s851 + $0x108] sm:$0xff]
        %v936 = vld [vmem:[%s851 + $0x110] sm:$0xff]
        %v937 = vld [vmem:[%s851 + $0x118] sm:$0xff]
        %v938 = vld [vmem:[%s851 + $0x120] sm:$0xff]
        %v939 = vld [vmem:[%s851 + $0x128] sm:$0xff]
        %v940 = vld [vmem:[%s851 + $0x130] sm:$0xff]
        %v941 = vld [vmem:[%s851 + $0x138] sm:$0xff]
        %v942 = vld [vmem:[%s851 + $0x140] sm:$0xff]
        %v943 = vld [vmem:[%s851 + $0x148] sm:$0xff]
        %v944 = vld [vmem:[%s851 + $0x150] sm:$0xff]
        %v945 = vld [vmem:[%s851 + $0x158] sm:$0xff]
        %v946 = vld [vmem:[%s851 + $0x160] sm:$0xff]
        %v947 = vld [vmem:[%s851 + $0x168] sm:$0xff]
        %v948 = vld [vmem:[%s851 + $0x170] sm:$0xff]
        %v949 = vld [vmem:[%s851 + $0x178] sm:$0xff]
        %v950 = vld [vmem:[%s851 + $0x180] sm:$0xff]
        %v951 = vld [vmem:[%s851 + $0x188] sm:$0xff]
        %v952 = vld [vmem:[%s851 + $0x190] sm:$0xff]
        %v953 = vld [vmem:[%s851 + $0x198] sm:$0xff]
        %v954 = vld [vmem:[%s851 + $0x1a0] sm:$0xff]
        %v955 = vld [vmem:[%s851 + $0x1a8] sm:$0xff]
        %v956 = vld [vmem:[%s851 + $0x1b0] sm:$0xff]
        %v957 = vld [vmem:[%s851 + $0x1b8] sm:$0xff]
        %v958 = vld [vmem:[%s851 + $0x1c0] sm:$0xff]
        %v959 = vld [vmem:[%s851 + $0x1c8] sm:$0xff]
        %v960 = vld [vmem:[%s851 + $0x1d0] sm:$0xff]
        %v961 = vld [vmem:[%s851 + $0x1d8] sm:$0xff]
        %v962 = vld [vmem:[%s851 + $0x1e0] sm:$0xff]
        %v963 = vld [vmem:[%s851 + $0x1e8] sm:$0xff]
        %v964 = vld [vmem:[%s851 + $0x1f0] sm:$0xff]
        %v965 = vld [vmem:[%s851 + $0x1f8] sm:$0xff]
        %v966 = vld [vmem:[%s851 + $0x200] sm:$0xff]
        %v967 = vld [vmem:[%s851 + $0x208] sm:$0xff]
        %v968 = vld [vmem:[%s851 + $0x210] sm:$0xff]
        %v969 = vld [vmem:[%s851 + $0x218] sm:$0xff]
        %v970 = vld [vmem:[%s851 + $0x220] sm:$0xff]
        %v971 = vld [vmem:[%s851 + $0x228] sm:$0xff]
        %v972 = vld [vmem:[%s851 + $0x230] sm:$0xff]
        %v973 = vld [vmem:[%s851 + $0x238] sm:$0xff]
        %v974 = vld [vmem:[%s851 + $0x240] sm:$0xff]
        %v975 = vld [vmem:[%s851 + $0x248] sm:$0xff]
        %v976 = vld [vmem:[%s851 + $0x250] sm:$0xff]
        %v977 = vld [vmem:[%s851 + $0x258] sm:$0xff]
        %v978 = vld [vmem:[%s851 + $0x260] sm:$0xff]
        %v979 = vld [vmem:[%s851 + $0x268] sm:$0xff]
        %v980 = vld [vmem:[%s851 + $0x270] sm:$0xff]
        %v981 = vld [vmem:[%s851 + $0x278] sm:$0xff]
        %v982 = vld [vmem:[%s851 + $0x280] sm:$0xff]
        %v983 = vld [vmem:[%s851 + $0x288] sm:$0xff]
        %v984 = vld [vmem:[%s851 + $0x290] sm:$0xff]
        %v985 = vld [vmem:[%s851 + $0x298] sm:$0xff]
        %v986 = vld [vmem:[%s851 + $0x2a0] sm:$0xff]
        %v987 = vld [vmem:[%s851 + $0x2a8] sm:$0xff]
        %v988 = vld [vmem:[%s851 + $0x2b0] sm:$0xff]
        %v989 = vld [vmem:[%s851 + $0x2b8] sm:$0xff]
        %v990 = vld [vmem:[%s851 + $0x2c0] sm:$0xff]
        %v991 = vld [vmem:[%s851 + $0x2c8] sm:$0xff]
        %v992 = vld [vmem:[%s851 + $0x2d0] sm:$0xff]
        %v993 = vld [vmem:[%s851 + $0x2d8] sm:$0xff]
        %v994 = vld [vmem:[%s851 + $0x2e0] sm:$0xff]
        %v995 = vld [vmem:[%s851 + $0x2e8] sm:$0xff]
        %v996 = vld [vmem:[%s851 + $0x2f0] sm:$0xff]
        %v997 = vld [vmem:[%s851 + $0x2f8] sm:$0xff]
        %v998 = vld [vmem:[%s851 + $0x300] sm:$0xff]
        %v999 = vld [vmem:[%s851 + $0x308] sm:$0xff]
        %v1000 = vld [vmem:[%s851 + $0x310] sm:$0xff]
        %v1001 = vld [vmem:[%s851 + $0x318] sm:$0xff]
        %v1002 = vld [vmem:[%s851 + $0x320] sm:$0xff]
        %v1003 = vld [vmem:[%s851 + $0x328] sm:$0xff]
        %v1004 = vld [vmem:[%s851 + $0x330] sm:$0xff]
        %v1005 = vld [vmem:[%s851 + $0x338] sm:$0xff]
        %v1006 = vld [vmem:[%s851 + $0x340] sm:$0xff]
        %v1007 = vld [vmem:[%s851 + $0x348] sm:$0xff]
        %v1008 = vld [vmem:[%s851 + $0x350] sm:$0xff]
        %v1009 = vld [vmem:[%s851 + $0x358] sm:$0xff]
        %v1010 = vld [vmem:[%s851 + $0x360] sm:$0xff]
        %v1011 = vld [vmem:[%s851 + $0x368] sm:$0xff]
        %v1012 = vld [vmem:[%s851 + $0x370] sm:$0xff]
        %v1013 = vld [vmem:[%s851 + $0x378] sm:$0xff]
        %v1014 = vld [vmem:[%s851 + $0x380] sm:$0xff]
        %v1015 = vld [vmem:[%s851 + $0x388] sm:$0xff]
        %v1016 = vld [vmem:[%s851 + $0x390] sm:$0xff]
        %v1017 = vld [vmem:[%s851 + $0x398] sm:$0xff]
        %v1018 = vld [vmem:[%s851 + $0x3a0] sm:$0xff]
        %v1019 = vld [vmem:[%s851 + $0x3a8] sm:$0xff]
        %v1020 = vld [vmem:[%s851 + $0x3b0] sm:$0xff]
        %v1021 = vld [vmem:[%s851 + $0x3b8] sm:$0xff]
        %v1022 = vld [vmem:[%s851 + $0x3c0] sm:$0xff]
        %v1023 = vld [vmem:[%s851 + $0x3c8] sm:$0xff]
        %v1024 = vld [vmem:[%s851 + $0x3d0] sm:$0xff]
        %v1025 = vld [vmem:[%s851 + $0x3d8] sm:$0xff]
        %v1026 = vld [vmem:[%s851 + $0x3e0] sm:$0xff]
        %v1027 = vld [vmem:[%s851 + $0x3e8] sm:$0xff]
        %v1028 = vld [vmem:[%s851 + $0x3f0] sm:$0xff]
        %v1029 = vld [vmem:[%s851 + $0x3f8] sm:$0xff]
        %vm1030 = vcmask 523264
        %v1031 = vsel %vm1030, %v902, 0.0
        %1032 = vadd.xlane.f32.xlu0 %v1031
        %v1033 = vpop.xlane.xlu0 %1032
        %v1034 = vsel %vm1030, %v903, 0.0
        %1035 = vadd.xlane.f32.xlu0 %v1034
        %v1036 = vpop.xlane.xlu0 %1035
        %v1037 = vsel %vm1030, %v904, 0.0
        %1038 = vadd.xlane.f32.xlu0 %v1037
        %v1039 = vpop.xlane.xlu0 %1038
        %v1040 = vsel %vm1030, %v905, 0.0
        %1041 = vadd.xlane.f32.xlu0 %v1040
        %v1042 = vpop.xlane.xlu0 %1041
        %v1043 = vsel %vm1030, %v906, 0.0
        %1044 = vadd.xlane.f32.xlu0 %v1043
        %v1045 = vpop.xlane.xlu0 %1044
        %v1046 = vsel %vm1030, %v907, 0.0
        %1047 = vadd.xlane.f32.xlu0 %v1046
        %v1048 = vpop.xlane.xlu0 %1047
        %v1049 = vsel %vm1030, %v908, 0.0
        %1050 = vadd.xlane.f32.xlu0 %v1049
        %v1051 = vpop.xlane.xlu0 %1050
        %v1052 = vsel %vm1030, %v909, 0.0
        %1053 = vadd.xlane.f32.xlu0 %v1052
        %v1054 = vpop.xlane.xlu0 %1053
        %v1055 = vsel %vm1030, %v910, 0.0
        %1056 = vadd.xlane.f32.xlu0 %v1055
        %v1057 = vpop.xlane.xlu0 %1056
        %v1058 = vsel %vm1030, %v911, 0.0
        %1059 = vadd.xlane.f32.xlu0 %v1058
        %v1060 = vpop.xlane.xlu0 %1059
        %v1061 = vsel %vm1030, %v912, 0.0
        %1062 = vadd.xlane.f32.xlu0 %v1061
        %v1063 = vpop.xlane.xlu0 %1062
        %v1064 = vsel %vm1030, %v913, 0.0
        %1065 = vadd.xlane.f32.xlu0 %v1064
        %v1066 = vpop.xlane.xlu0 %1065
        %v1067 = vsel %vm1030, %v914, 0.0
        %1068 = vadd.xlane.f32.xlu0 %v1067
        %v1069 = vpop.xlane.xlu0 %1068
        %v1070 = vsel %vm1030, %v915, 0.0
        %1071 = vadd.xlane.f32.xlu0 %v1070
        %v1072 = vpop.xlane.xlu0 %1071
        %v1073 = vsel %vm1030, %v916, 0.0
        %1074 = vadd.xlane.f32.xlu0 %v1073
        %v1075 = vpop.xlane.xlu0 %1074
        %v1076 = vsel %vm1030, %v917, 0.0
        %1077 = vadd.xlane.f32.xlu0 %v1076
        %v1078 = vpop.xlane.xlu0 %1077
        %v1079 = vsel %vm1030, %v918, 0.0
        %1080 = vadd.xlane.f32.xlu0 %v1079
        %v1081 = vpop.xlane.xlu0 %1080
        %v1082 = vsel %vm1030, %v919, 0.0
        %1083 = vadd.xlane.f32.xlu0 %v1082
        %v1084 = vpop.xlane.xlu0 %1083
        %v1085 = vsel %vm1030, %v920, 0.0
        %1086 = vadd.xlane.f32.xlu0 %v1085
        %v1087 = vpop.xlane.xlu0 %1086
        %v1088 = vsel %vm1030, %v921, 0.0
        %1089 = vadd.xlane.f32.xlu0 %v1088
        %v1090 = vpop.xlane.xlu0 %1089
        %v1091 = vsel %vm1030, %v922, 0.0
        %1092 = vadd.xlane.f32.xlu0 %v1091
        %v1093 = vpop.xlane.xlu0 %1092
        %v1094 = vsel %vm1030, %v923, 0.0
        %1095 = vadd.xlane.f32.xlu0 %v1094
        %v1096 = vpop.xlane.xlu0 %1095
        %v1097 = vsel %vm1030, %v924, 0.0
        %1098 = vadd.xlane.f32.xlu0 %v1097
        %v1099 = vpop.xlane.xlu0 %1098
        %v1100 = vsel %vm1030, %v925, 0.0
        %1101 = vadd.xlane.f32.xlu0 %v1100
        %v1102 = vpop.xlane.xlu0 %1101
        %v1103 = vsel %vm1030, %v926, 0.0
        %1104 = vadd.xlane.f32.xlu0 %v1103
        %v1105 = vpop.xlane.xlu0 %1104
        %v1106 = vsel %vm1030, %v927, 0.0
        %1107 = vadd.xlane.f32.xlu0 %v1106
        %v1108 = vpop.xlane.xlu0 %1107
        %v1109 = vsel %vm1030, %v928, 0.0
        %1110 = vadd.xlane.f32.xlu0 %v1109
        %v1111 = vpop.xlane.xlu0 %1110
        %v1112 = vsel %vm1030, %v929, 0.0
        %1113 = vadd.xlane.f32.xlu0 %v1112
        %v1114 = vpop.xlane.xlu0 %1113
        %v1115 = vsel %vm1030, %v930, 0.0
        %1116 = vadd.xlane.f32.xlu0 %v1115
        %v1117 = vpop.xlane.xlu0 %1116
        %v1118 = vsel %vm1030, %v931, 0.0
        %1119 = vadd.xlane.f32.xlu0 %v1118
        %v1120 = vpop.xlane.xlu0 %1119
        %v1121 = vsel %vm1030, %v932, 0.0
        %1122 = vadd.xlane.f32.xlu0 %v1121
        %v1123 = vpop.xlane.xlu0 %1122
        %v1124 = vsel %vm1030, %v933, 0.0
        %1125 = vadd.xlane.f32.xlu0 %v1124
        %v1126 = vpop.xlane.xlu0 %1125
        %v1127 = vsel %vm1030, %v934, 0.0
        %1128 = vadd.xlane.f32.xlu0 %v1127
        %v1129 = vpop.xlane.xlu0 %1128
        %v1130 = vsel %vm1030, %v935, 0.0
        %1131 = vadd.xlane.f32.xlu0 %v1130
        %v1132 = vpop.xlane.xlu0 %1131
        %v1133 = vsel %vm1030, %v936, 0.0
        %1134 = vadd.xlane.f32.xlu0 %v1133
        %v1135 = vpop.xlane.xlu0 %1134
        %v1136 = vsel %vm1030, %v937, 0.0
        %1137 = vadd.xlane.f32.xlu0 %v1136
        %v1138 = vpop.xlane.xlu0 %1137
        %v1139 = vsel %vm1030, %v938, 0.0
        %1140 = vadd.xlane.f32.xlu0 %v1139
        %v1141 = vpop.xlane.xlu0 %1140
        %v1142 = vsel %vm1030, %v939, 0.0
        %1143 = vadd.xlane.f32.xlu0 %v1142
        %v1144 = vpop.xlane.xlu0 %1143
        %v1145 = vsel %vm1030, %v940, 0.0
        %1146 = vadd.xlane.f32.xlu0 %v1145
        %v1147 = vpop.xlane.xlu0 %1146
        %v1148 = vsel %vm1030, %v941, 0.0
        %1149 = vadd.xlane.f32.xlu0 %v1148
        %v1150 = vpop.xlane.xlu0 %1149
        %v1151 = vsel %vm1030, %v942, 0.0
        %1152 = vadd.xlane.f32.xlu0 %v1151
        %v1153 = vpop.xlane.xlu0 %1152
        %v1154 = vsel %vm1030, %v943, 0.0
        %1155 = vadd.xlane.f32.xlu0 %v1154
        %v1156 = vpop.xlane.xlu0 %1155
        %v1157 = vsel %vm1030, %v944, 0.0
        %1158 = vadd.xlane.f32.xlu0 %v1157
        %v1159 = vpop.xlane.xlu0 %1158
        %v1160 = vsel %vm1030, %v945, 0.0
        %1161 = vadd.xlane.f32.xlu0 %v1160
        %v1162 = vpop.xlane.xlu0 %1161
        %v1163 = vsel %vm1030, %v946, 0.0
        %1164 = vadd.xlane.f32.xlu0 %v1163
        %v1165 = vpop.xlane.xlu0 %1164
        %v1166 = vsel %vm1030, %v947, 0.0
        %1167 = vadd.xlane.f32.xlu0 %v1166
        %v1168 = vpop.xlane.xlu0 %1167
        %v1169 = vsel %vm1030, %v948, 0.0
        %1170 = vadd.xlane.f32.xlu0 %v1169
        %v1171 = vpop.xlane.xlu0 %1170
        %v1172 = vsel %vm1030, %v949, 0.0
        %1173 = vadd.xlane.f32.xlu0 %v1172
        %v1174 = vpop.xlane.xlu0 %1173
        %v1175 = vsel %vm1030, %v950, 0.0
        %1176 = vadd.xlane.f32.xlu0 %v1175
        %v1177 = vpop.xlane.xlu0 %1176
        %v1178 = vsel %vm1030, %v951, 0.0
        %1179 = vadd.xlane.f32.xlu0 %v1178
        %v1180 = vpop.xlane.xlu0 %1179
        %v1181 = vsel %vm1030, %v952, 0.0
        %1182 = vadd.xlane.f32.xlu0 %v1181
        %v1183 = vpop.xlane.xlu0 %1182
        %v1184 = vsel %vm1030, %v953, 0.0
        %1185 = vadd.xlane.f32.xlu0 %v1184
        %v1186 = vpop.xlane.xlu0 %1185
        %v1187 = vsel %vm1030, %v954, 0.0
        %1188 = vadd.xlane.f32.xlu0 %v1187
        %v1189 = vpop.xlane.xlu0 %1188
        %v1190 = vsel %vm1030, %v955, 0.0
        %1191 = vadd.xlane.f32.xlu0 %v1190
        %v1192 = vpop.xlane.xlu0 %1191
        %v1193 = vsel %vm1030, %v956, 0.0
        %1194 = vadd.xlane.f32.xlu0 %v1193
        %v1195 = vpop.xlane.xlu0 %1194
        %v1196 = vsel %vm1030, %v957, 0.0
        %1197 = vadd.xlane.f32.xlu0 %v1196
        %v1198 = vpop.xlane.xlu0 %1197
        %v1199 = vsel %vm1030, %v958, 0.0
        %1200 = vadd.xlane.f32.xlu0 %v1199
        %v1201 = vpop.xlane.xlu0 %1200
        %v1202 = vsel %vm1030, %v959, 0.0
        %1203 = vadd.xlane.f32.xlu0 %v1202
        %v1204 = vpop.xlane.xlu0 %1203
        %v1205 = vsel %vm1030, %v960, 0.0
        %1206 = vadd.xlane.f32.xlu0 %v1205
        %v1207 = vpop.xlane.xlu0 %1206
        %v1208 = vsel %vm1030, %v961, 0.0
        %1209 = vadd.xlane.f32.xlu0 %v1208
        %v1210 = vpop.xlane.xlu0 %1209
        %v1211 = vsel %vm1030, %v962, 0.0
        %1212 = vadd.xlane.f32.xlu0 %v1211
        %v1213 = vpop.xlane.xlu0 %1212
        %v1214 = vsel %vm1030, %v963, 0.0
        %1215 = vadd.xlane.f32.xlu0 %v1214
        %v1216 = vpop.xlane.xlu0 %1215
        %v1217 = vsel %vm1030, %v964, 0.0
        %1218 = vadd.xlane.f32.xlu0 %v1217
        %v1219 = vpop.xlane.xlu0 %1218
        %v1220 = vsel %vm1030, %v965, 0.0
        %1221 = vadd.xlane.f32.xlu0 %v1220
        %v1222 = vpop.xlane.xlu0 %1221
        %v1223 = vsel %vm1030, %v966, 0.0
        %1224 = vadd.xlane.f32.xlu0 %v1223
        %v1225 = vpop.xlane.xlu0 %1224
        %v1226 = vsel %vm1030, %v967, 0.0
        %1227 = vadd.xlane.f32.xlu0 %v1226
        %v1228 = vpop.xlane.xlu0 %1227
        %v1229 = vsel %vm1030, %v968, 0.0
        %1230 = vadd.xlane.f32.xlu0 %v1229
        %v1231 = vpop.xlane.xlu0 %1230
        %v1232 = vsel %vm1030, %v969, 0.0
        %1233 = vadd.xlane.f32.xlu0 %v1232
        %v1234 = vpop.xlane.xlu0 %1233
        %v1235 = vsel %vm1030, %v970, 0.0
        %1236 = vadd.xlane.f32.xlu0 %v1235
        %v1237 = vpop.xlane.xlu0 %1236
        %v1238 = vsel %vm1030, %v971, 0.0
        %1239 = vadd.xlane.f32.xlu0 %v1238
        %v1240 = vpop.xlane.xlu0 %1239
        %v1241 = vsel %vm1030, %v972, 0.0
        %1242 = vadd.xlane.f32.xlu0 %v1241
        %v1243 = vpop.xlane.xlu0 %1242
        %v1244 = vsel %vm1030, %v973, 0.0
        %1245 = vadd.xlane.f32.xlu0 %v1244
        %v1246 = vpop.xlane.xlu0 %1245
        %v1247 = vsel %vm1030, %v974, 0.0
        %1248 = vadd.xlane.f32.xlu0 %v1247
        %v1249 = vpop.xlane.xlu0 %1248
        %v1250 = vsel %vm1030, %v975, 0.0
        %1251 = vadd.xlane.f32.xlu0 %v1250
        %v1252 = vpop.xlane.xlu0 %1251
        %v1253 = vsel %vm1030, %v976, 0.0
        %1254 = vadd.xlane.f32.xlu0 %v1253
        %v1255 = vpop.xlane.xlu0 %1254
        %v1256 = vsel %vm1030, %v977, 0.0
        %1257 = vadd.xlane.f32.xlu0 %v1256
        %v1258 = vpop.xlane.xlu0 %1257
        %v1259 = vsel %vm1030, %v978, 0.0
        %1260 = vadd.xlane.f32.xlu0 %v1259
        %v1261 = vpop.xlane.xlu0 %1260
        %v1262 = vsel %vm1030, %v979, 0.0
        %1263 = vadd.xlane.f32.xlu0 %v1262
        %v1264 = vpop.xlane.xlu0 %1263
        %v1265 = vsel %vm1030, %v980, 0.0
        %1266 = vadd.xlane.f32.xlu0 %v1265
        %v1267 = vpop.xlane.xlu0 %1266
        %v1268 = vsel %vm1030, %v981, 0.0
        %1269 = vadd.xlane.f32.xlu0 %v1268
        %v1270 = vpop.xlane.xlu0 %1269
        %v1271 = vsel %vm1030, %v982, 0.0
        %1272 = vadd.xlane.f32.xlu0 %v1271
        %v1273 = vpop.xlane.xlu0 %1272
        %v1274 = vsel %vm1030, %v983, 0.0
        %1275 = vadd.xlane.f32.xlu0 %v1274
        %v1276 = vpop.xlane.xlu0 %1275
        %v1277 = vsel %vm1030, %v984, 0.0
        %1278 = vadd.xlane.f32.xlu0 %v1277
        %v1279 = vpop.xlane.xlu0 %1278
        %v1280 = vsel %vm1030, %v985, 0.0
        %1281 = vadd.xlane.f32.xlu0 %v1280
        %v1282 = vpop.xlane.xlu0 %1281
        %v1283 = vsel %vm1030, %v986, 0.0
        %1284 = vadd.xlane.f32.xlu0 %v1283
        %v1285 = vpop.xlane.xlu0 %1284
        %v1286 = vsel %vm1030, %v987, 0.0
        %1287 = vadd.xlane.f32.xlu0 %v1286
        %v1288 = vpop.xlane.xlu0 %1287
        %v1289 = vsel %vm1030, %v988, 0.0
        %1290 = vadd.xlane.f32.xlu0 %v1289
        %v1291 = vpop.xlane.xlu0 %1290
        %v1292 = vsel %vm1030, %v989, 0.0
        %1293 = vadd.xlane.f32.xlu0 %v1292
        %v1294 = vpop.xlane.xlu0 %1293
        %v1295 = vsel %vm1030, %v990, 0.0
        %1296 = vadd.xlane.f32.xlu0 %v1295
        %v1297 = vpop.xlane.xlu0 %1296
        %v1298 = vsel %vm1030, %v991, 0.0
        %1299 = vadd.xlane.f32.xlu0 %v1298
        %v1300 = vpop.xlane.xlu0 %1299
        %v1301 = vsel %vm1030, %v992, 0.0
        %1302 = vadd.xlane.f32.xlu0 %v1301
        %v1303 = vpop.xlane.xlu0 %1302
        %v1304 = vsel %vm1030, %v993, 0.0
        %1305 = vadd.xlane.f32.xlu0 %v1304
        %v1306 = vpop.xlane.xlu0 %1305
        %v1307 = vsel %vm1030, %v994, 0.0
        %1308 = vadd.xlane.f32.xlu0 %v1307
        %v1309 = vpop.xlane.xlu0 %1308
        %v1310 = vsel %vm1030, %v995, 0.0
        %1311 = vadd.xlane.f32.xlu0 %v1310
        %v1312 = vpop.xlane.xlu0 %1311
        %v1313 = vsel %vm1030, %v996, 0.0
        %1314 = vadd.xlane.f32.xlu0 %v1313
        %v1315 = vpop.xlane.xlu0 %1314
        %v1316 = vsel %vm1030, %v997, 0.0
        %1317 = vadd.xlane.f32.xlu0 %v1316
        %v1318 = vpop.xlane.xlu0 %1317
        %v1319 = vsel %vm1030, %v998, 0.0
        %1320 = vadd.xlane.f32.xlu0 %v1319
        %v1321 = vpop.xlane.xlu0 %1320
        %v1322 = vsel %vm1030, %v999, 0.0
        %1323 = vadd.xlane.f32.xlu0 %v1322
        %v1324 = vpop.xlane.xlu0 %1323
        %v1325 = vsel %vm1030, %v1000, 0.0
        %1326 = vadd.xlane.f32.xlu0 %v1325
        %v1327 = vpop.xlane.xlu0 %1326
        %v1328 = vsel %vm1030, %v1001, 0.0
        %1329 = vadd.xlane.f32.xlu0 %v1328
        %v1330 = vpop.xlane.xlu0 %1329
        %v1331 = vsel %vm1030, %v1002, 0.0
        %1332 = vadd.xlane.f32.xlu0 %v1331
        %v1333 = vpop.xlane.xlu0 %1332
        %v1334 = vsel %vm1030, %v1003, 0.0
        %1335 = vadd.xlane.f32.xlu0 %v1334
        %v1336 = vpop.xlane.xlu0 %1335
        %v1337 = vsel %vm1030, %v1004, 0.0
        %1338 = vadd.xlane.f32.xlu0 %v1337
        %v1339 = vpop.xlane.xlu0 %1338
        %v1340 = vsel %vm1030, %v1005, 0.0
        %1341 = vadd.xlane.f32.xlu0 %v1340
        %v1342 = vpop.xlane.xlu0 %1341
        %v1343 = vsel %vm1030, %v1006, 0.0
        %1344 = vadd.xlane.f32.xlu0 %v1343
        %v1345 = vpop.xlane.xlu0 %1344
        %v1346 = vsel %vm1030, %v1007, 0.0
        %1347 = vadd.xlane.f32.xlu0 %v1346
        %v1348 = vpop.xlane.xlu0 %1347
        %v1349 = vsel %vm1030, %v1008, 0.0
        %1350 = vadd.xlane.f32.xlu0 %v1349
        %v1351 = vpop.xlane.xlu0 %1350
        %v1352 = vsel %vm1030, %v1009, 0.0
        %1353 = vadd.xlane.f32.xlu0 %v1352
        %v1354 = vpop.xlane.xlu0 %1353
        %v1355 = vsel %vm1030, %v1010, 0.0
        %1356 = vadd.xlane.f32.xlu0 %v1355
        %v1357 = vpop.xlane.xlu0 %1356
        %v1358 = vsel %vm1030, %v1011, 0.0
        %1359 = vadd.xlane.f32.xlu0 %v1358
        %v1360 = vpop.xlane.xlu0 %1359
        %v1361 = vsel %vm1030, %v1012, 0.0
        %1362 = vadd.xlane.f32.xlu0 %v1361
        %v1363 = vpop.xlane.xlu0 %1362
        %v1364 = vsel %vm1030, %v1013, 0.0
        %1365 = vadd.xlane.f32.xlu0 %v1364
        %v1366 = vpop.xlane.xlu0 %1365
        %v1367 = vsel %vm1030, %v1014, 0.0
        %1368 = vadd.xlane.f32.xlu0 %v1367
        %v1369 = vpop.xlane.xlu0 %1368
        %v1370 = vsel %vm1030, %v1015, 0.0
        %1371 = vadd.xlane.f32.xlu0 %v1370
        %v1372 = vpop.xlane.xlu0 %1371
        %v1373 = vsel %vm1030, %v1016, 0.0
        %1374 = vadd.xlane.f32.xlu0 %v1373
        %v1375 = vpop.xlane.xlu0 %1374
        %v1376 = vsel %vm1030, %v1017, 0.0
        %1377 = vadd.xlane.f32.xlu0 %v1376
        %v1378 = vpop.xlane.xlu0 %1377
        %v1379 = vsel %vm1030, %v1018, 0.0
        %1380 = vadd.xlane.f32.xlu0 %v1379
        %v1381 = vpop.xlane.xlu0 %1380
        %v1382 = vsel %vm1030, %v1019, 0.0
        %1383 = vadd.xlane.f32.xlu0 %v1382
        %v1384 = vpop.xlane.xlu0 %1383
        %v1385 = vsel %vm1030, %v1020, 0.0
        %1386 = vadd.xlane.f32.xlu0 %v1385
        %v1387 = vpop.xlane.xlu0 %1386
        %v1388 = vsel %vm1030, %v1021, 0.0
        %1389 = vadd.xlane.f32.xlu0 %v1388
        %v1390 = vpop.xlane.xlu0 %1389
        %v1391 = vsel %vm1030, %v1022, 0.0
        %1392 = vadd.xlane.f32.xlu0 %v1391
        %v1393 = vpop.xlane.xlu0 %1392
        %v1394 = vsel %vm1030, %v1023, 0.0
        %1395 = vadd.xlane.f32.xlu0 %v1394
        %v1396 = vpop.xlane.xlu0 %1395
        %v1397 = vsel %vm1030, %v1024, 0.0
        %1398 = vadd.xlane.f32.xlu0 %v1397
        %v1399 = vpop.xlane.xlu0 %1398
        %v1400 = vsel %vm1030, %v1025, 0.0
        %1401 = vadd.xlane.f32.xlu0 %v1400
        %v1402 = vpop.xlane.xlu0 %1401
        %v1403 = vsel %vm1030, %v1026, 0.0
        %1404 = vadd.xlane.f32.xlu0 %v1403
        %v1405 = vpop.xlane.xlu0 %1404
        %v1406 = vsel %vm1030, %v1027, 0.0
        %1407 = vadd.xlane.f32.xlu0 %v1406
        %v1408 = vpop.xlane.xlu0 %1407
        %v1409 = vsel %vm1030, %v1028, 0.0
        %1410 = vadd.xlane.f32.xlu0 %v1409
        %v1411 = vpop.xlane.xlu0 %1410
        %v1412 = vsel %vm1030, %v1029, 0.0
        %1413 = vadd.xlane.f32.xlu0 %v1412
        %v1414 = vpop.xlane.xlu0 %1413
        %v1415 = vmul.f32 %v1033, 0.015625
        %v1416 = vmul.f32 %v1036, 0.015625
        %v1417 = vmul.f32 %v1039, 0.015625
        %v1418 = vmul.f32 %v1042, 0.015625
        %v1419 = vmul.f32 %v1045, 0.015625
        %v1420 = vmul.f32 %v1048, 0.015625
        %v1421 = vmul.f32 %v1051, 0.015625
        %v1422 = vmul.f32 %v1054, 0.015625
        %v1423 = vmul.f32 %v1057, 0.015625
        %v1424 = vmul.f32 %v1060, 0.015625
        %v1425 = vmul.f32 %v1063, 0.015625
        %v1426 = vmul.f32 %v1066, 0.015625
        %v1427 = vmul.f32 %v1069, 0.015625
        %v1428 = vmul.f32 %v1072, 0.015625
        %v1429 = vmul.f32 %v1075, 0.015625
        %v1430 = vmul.f32 %v1078, 0.015625
        %v1431 = vmul.f32 %v1081, 0.015625
        %v1432 = vmul.f32 %v1084, 0.015625
        %v1433 = vmul.f32 %v1087, 0.015625
        %v1434 = vmul.f32 %v1090, 0.015625
        %v1435 = vmul.f32 %v1093, 0.015625
        %v1436 = vmul.f32 %v1096, 0.015625
        %v1437 = vmul.f32 %v1099, 0.015625
        %v1438 = vmul.f32 %v1102, 0.015625
        %v1439 = vmul.f32 %v1105, 0.015625
        %v1440 = vmul.f32 %v1108, 0.015625
        %v1441 = vmul.f32 %v1111, 0.015625
        %v1442 = vmul.f32 %v1114, 0.015625
        %v1443 = vmul.f32 %v1117, 0.015625
        %v1444 = vmul.f32 %v1120, 0.015625
        %v1445 = vmul.f32 %v1123, 0.015625
        %v1446 = vmul.f32 %v1126, 0.015625
        %v1447 = vmul.f32 %v1129, 0.015625
        %v1448 = vmul.f32 %v1132, 0.015625
        %v1449 = vmul.f32 %v1135, 0.015625
        %v1450 = vmul.f32 %v1138, 0.015625
        %v1451 = vmul.f32 %v1141, 0.015625
        %v1452 = vmul.f32 %v1144, 0.015625
        %v1453 = vmul.f32 %v1147, 0.015625
        %v1454 = vmul.f32 %v1150, 0.015625
        %v1455 = vmul.f32 %v1153, 0.015625
        %v1456 = vmul.f32 %v1156, 0.015625
        %v1457 = vmul.f32 %v1159, 0.015625
        %v1458 = vmul.f32 %v1162, 0.015625
        %v1459 = vmul.f32 %v1165, 0.015625
        %v1460 = vmul.f32 %v1168, 0.015625
        %v1461 = vmul.f32 %v1171, 0.015625
        %v1462 = vmul.f32 %v1174, 0.015625
        %v1463 = vmul.f32 %v1177, 0.015625
        %v1464 = vmul.f32 %v1180, 0.015625
        %v1465 = vmul.f32 %v1183, 0.015625
        %v1466 = vmul.f32 %v1186, 0.015625
        %v1467 = vmul.f32 %v1189, 0.015625
        %v1468 = vmul.f32 %v1192, 0.015625
        %v1469 = vmul.f32 %v1195, 0.015625
        %v1470 = vmul.f32 %v1198, 0.015625
        %v1471 = vmul.f32 %v1201, 0.015625
        %v1472 = vmul.f32 %v1204, 0.015625
        %v1473 = vmul.f32 %v1207, 0.015625
        %v1474 = vmul.f32 %v1210, 0.015625
        %v1475 = vmul.f32 %v1213, 0.015625
        %v1476 = vmul.f32 %v1216, 0.015625
        %v1477 = vmul.f32 %v1219, 0.015625
        %v1478 = vmul.f32 %v1222, 0.015625
        %v1479 = vmul.f32 %v1225, 0.015625
        %v1480 = vmul.f32 %v1228, 0.015625
        %v1481 = vmul.f32 %v1231, 0.015625
        %v1482 = vmul.f32 %v1234, 0.015625
        %v1483 = vmul.f32 %v1237, 0.015625
        %v1484 = vmul.f32 %v1240, 0.015625
        %v1485 = vmul.f32 %v1243, 0.015625
        %v1486 = vmul.f32 %v1246, 0.015625
        %v1487 = vmul.f32 %v1249, 0.015625
        %v1488 = vmul.f32 %v1252, 0.015625
        %v1489 = vmul.f32 %v1255, 0.015625
        %v1490 = vmul.f32 %v1258, 0.015625
        %v1491 = vmul.f32 %v1261, 0.015625
        %v1492 = vmul.f32 %v1264, 0.015625
        %v1493 = vmul.f32 %v1267, 0.015625
        %v1494 = vmul.f32 %v1270, 0.015625
        %v1495 = vmul.f32 %v1273, 0.015625
        %v1496 = vmul.f32 %v1276, 0.015625
        %v1497 = vmul.f32 %v1279, 0.015625
        %v1498 = vmul.f32 %v1282, 0.015625
        %v1499 = vmul.f32 %v1285, 0.015625
        %v1500 = vmul.f32 %v1288, 0.015625
        %v1501 = vmul.f32 %v1291, 0.015625
        %v1502 = vmul.f32 %v1294, 0.015625
        %v1503 = vmul.f32 %v1297, 0.015625
        %v1504 = vmul.f32 %v1300, 0.015625
        %v1505 = vmul.f32 %v1303, 0.015625
        %v1506 = vmul.f32 %v1306, 0.015625
        %v1507 = vmul.f32 %v1309, 0.015625
        %v1508 = vmul.f32 %v1312, 0.015625
        %v1509 = vmul.f32 %v1315, 0.015625
        %v1510 = vmul.f32 %v1318, 0.015625
        %v1511 = vmul.f32 %v1321, 0.015625
        %v1512 = vmul.f32 %v1324, 0.015625
        %v1513 = vmul.f32 %v1327, 0.015625
        %v1514 = vmul.f32 %v1330, 0.015625
        %v1515 = vmul.f32 %v1333, 0.015625
        %v1516 = vmul.f32 %v1336, 0.015625
        %v1517 = vmul.f32 %v1339, 0.015625
        %v1518 = vmul.f32 %v1342, 0.015625
        %v1519 = vmul.f32 %v1345, 0.015625
        %v1520 = vmul.f32 %v1348, 0.015625
        %v1521 = vmul.f32 %v1351, 0.015625
        %v1522 = vmul.f32 %v1354, 0.015625
        %v1523 = vmul.f32 %v1357, 0.015625
        %v1524 = vmul.f32 %v1360, 0.015625
        %v1525 = vmul.f32 %v1363, 0.015625
        %v1526 = vmul.f32 %v1366, 0.015625
        %v1527 = vmul.f32 %v1369, 0.015625
        %v1528 = vmul.f32 %v1372, 0.015625
        %v1529 = vmul.f32 %v1375, 0.015625
        %v1530 = vmul.f32 %v1378, 0.015625
        %v1531 = vmul.f32 %v1381, 0.015625
        %v1532 = vmul.f32 %v1384, 0.015625
        %v1533 = vmul.f32 %v1387, 0.015625
        %v1534 = vmul.f32 %v1390, 0.015625
        %v1535 = vmul.f32 %v1393, 0.015625
        %v1536 = vmul.f32 %v1396, 0.015625
        %v1537 = vmul.f32 %v1399, 0.015625
        %v1538 = vmul.f32 %v1402, 0.015625
        %v1539 = vmul.f32 %v1405, 0.015625
        %v1540 = vmul.f32 %v1408, 0.015625
        %v1541 = vmul.f32 %v1411, 0.015625
        %v1542 = vmul.f32 %v1414, 0.015625
        %v1671 = vlaneseq
        %v1672 = vand.u32 %v1671, 127
        %v1673 = vlaneseq
        %v1674 = vshrl.u32 %v1673, 7
        %v1675 = vsub.s32 %v1672, %v1674
        %v1676 = vrot.slane %v1415, %v1675
        %v1677 = vadd.s32 %v1672, 4294967288
        %v1678 = vlaneseq
        %v1679 = vshrl.u32 %v1678, 7
        %v1680 = vsub.s32 %v1677, %v1679
        %v1681 = vrot.slane %v1416, %v1680
        %vm1682 = vcmask 130112
        %v1683 = vsel %vm1682, %v1681, %v1676
        %v1684 = vadd.s32 %v1672, 4294967280
        %v1685 = vlaneseq
        %v1686 = vshrl.u32 %v1685, 7
        %v1687 = vsub.s32 %v1684, %v1686
        %v1688 = vrot.slane %v1417, %v1687
        %vm1689 = vcmask 195712
        %v1690 = vsel %vm1689, %v1688, %v1683
        %v1691 = vadd.s32 %v1672, 4294967272
        %v1692 = vlaneseq
        %v1693 = vshrl.u32 %v1692, 7
        %v1694 = vsub.s32 %v1691, %v1693
        %v1695 = vrot.slane %v1418, %v1694
        %vm1696 = vcmask 261312
        %v1697 = vsel %vm1696, %v1695, %v1690
        %v1698 = vadd.s32 %v1672, 4294967264
        %v1699 = vlaneseq
        %v1700 = vshrl.u32 %v1699, 7
        %v1701 = vsub.s32 %v1698, %v1700
        %v1702 = vrot.slane %v1419, %v1701
        %vm1703 = vcmask 326912
        %v1704 = vsel %vm1703, %v1702, %v1697
        %v1705 = vadd.s32 %v1672, 4294967256
        %v1706 = vlaneseq
        %v1707 = vshrl.u32 %v1706, 7
        %v1708 = vsub.s32 %v1705, %v1707
        %v1709 = vrot.slane %v1420, %v1708
        %vm1710 = vcmask 392512
        %v1711 = vsel %vm1710, %v1709, %v1704
        %v1712 = vadd.s32 %v1672, 4294967248
        %v1713 = vlaneseq
        %v1714 = vshrl.u32 %v1713, 7
        %v1715 = vsub.s32 %v1712, %v1714
        %v1716 = vrot.slane %v1421, %v1715
        %vm1717 = vcmask 458112
        %v1718 = vsel %vm1717, %v1716, %v1711
        %v1719 = vadd.s32 %v1672, 4294967240
        %v1720 = vlaneseq
        %v1721 = vshrl.u32 %v1720, 7
        %v1722 = vsub.s32 %v1719, %v1721
        %v1723 = vrot.slane %v1422, %v1722
        %vm1724 = vcmask 523712
        %v1725 = vsel %vm1724, %v1723, %v1718
        %v1726 = vadd.s32 %v1672, 4294967232
        %v1727 = vlaneseq
        %v1728 = vshrl.u32 %v1727, 7
        %v1729 = vsub.s32 %v1726, %v1728
        %v1730 = vrot.slane %v1423, %v1729
        %vm1731 = vcmask 589312
        %v1732 = vsel %vm1731, %v1730, %v1725
        %v1733 = vadd.s32 %v1672, 4294967224
        %v1734 = vlaneseq
        %v1735 = vshrl.u32 %v1734, 7
        %v1736 = vsub.s32 %v1733, %v1735
        %v1737 = vrot.slane %v1424, %v1736
        %vm1738 = vcmask 654912
        %v1739 = vsel %vm1738, %v1737, %v1732
        %v1740 = vadd.s32 %v1672, 4294967216
        %v1741 = vlaneseq
        %v1742 = vshrl.u32 %v1741, 7
        %v1743 = vsub.s32 %v1740, %v1742
        %v1744 = vrot.slane %v1425, %v1743
        %vm1745 = vcmask 720512
        %v1746 = vsel %vm1745, %v1744, %v1739
        %v1747 = vadd.s32 %v1672, 4294967208
        %v1748 = vlaneseq
        %v1749 = vshrl.u32 %v1748, 7
        %v1750 = vsub.s32 %v1747, %v1749
        %v1751 = vrot.slane %v1426, %v1750
        %vm1752 = vcmask 786112
        %v1753 = vsel %vm1752, %v1751, %v1746
        %v1754 = vadd.s32 %v1672, 4294967200
        %v1755 = vlaneseq
        %v1756 = vshrl.u32 %v1755, 7
        %v1757 = vsub.s32 %v1754, %v1756
        %v1758 = vrot.slane %v1427, %v1757
        %vm1759 = vcmask 851712
        %v1760 = vsel %vm1759, %v1758, %v1753
        %v1761 = vadd.s32 %v1672, 4294967192
        %v1762 = vlaneseq
        %v1763 = vshrl.u32 %v1762, 7
        %v1764 = vsub.s32 %v1761, %v1763
        %v1765 = vrot.slane %v1428, %v1764
        %vm1766 = vcmask 917312
        %v1767 = vsel %vm1766, %v1765, %v1760
        %v1768 = vadd.s32 %v1672, 4294967184
        %v1769 = vlaneseq
        %v1770 = vshrl.u32 %v1769, 7
        %v1771 = vsub.s32 %v1768, %v1770
        %v1772 = vrot.slane %v1429, %v1771
        %vm1773 = vcmask 982912
        %v1774 = vsel %vm1773, %v1772, %v1767
        %v1775 = vadd.s32 %v1672, 4294967176
        %v1776 = vlaneseq
        %v1777 = vshrl.u32 %v1776, 7
        %v1778 = vsub.s32 %v1775, %v1777
        %v1779 = vrot.slane %v1430, %v1778
        %vm1780 = vcmask 1048512
        %v1781 = vsel %vm1780, %v1779, %v1774
        %v1782 = vlaneseq
        %v1783 = vshrl.u32 %v1782, 7
        %v1784 = vsub.s32 %v1672, %v1783
        %v1785 = vrot.slane %v1431, %v1784
        %v1786 = vlaneseq
        %v1787 = vshrl.u32 %v1786, 7
        %v1788 = vsub.s32 %v1677, %v1787
        %v1789 = vrot.slane %v1432, %v1788
        %v1790 = vsel %vm1682, %v1789, %v1785
        %v1791 = vlaneseq
        %v1792 = vshrl.u32 %v1791, 7
        %v1793 = vsub.s32 %v1684, %v1792
        %v1794 = vrot.slane %v1433, %v1793
        %v1795 = vsel %vm1689, %v1794, %v1790
        %v1796 = vlaneseq
        %v1797 = vshrl.u32 %v1796, 7
        %v1798 = vsub.s32 %v1691, %v1797
        %v1799 = vrot.slane %v1434, %v1798
        %v1800 = vsel %vm1696, %v1799, %v1795
        %v1801 = vlaneseq
        %v1802 = vshrl.u32 %v1801, 7
        %v1803 = vsub.s32 %v1698, %v1802
        %v1804 = vrot.slane %v1435, %v1803
        %v1805 = vsel %vm1703, %v1804, %v1800
        %v1806 = vlaneseq
        %v1807 = vshrl.u32 %v1806, 7
        %v1808 = vsub.s32 %v1705, %v1807
        %v1809 = vrot.slane %v1436, %v1808
        %v1810 = vsel %vm1710, %v1809, %v1805
        %v1811 = vlaneseq
        %v1812 = vshrl.u32 %v1811, 7
        %v1813 = vsub.s32 %v1712, %v1812
        %v1814 = vrot.slane %v1437, %v1813
        %v1815 = vsel %vm1717, %v1814, %v1810
        %v1816 = vlaneseq
        %v1817 = vshrl.u32 %v1816, 7
        %v1818 = vsub.s32 %v1719, %v1817
        %v1819 = vrot.slane %v1438, %v1818
        %v1820 = vsel %vm1724, %v1819, %v1815
        %v1821 = vlaneseq
        %v1822 = vshrl.u32 %v1821, 7
        %v1823 = vsub.s32 %v1726, %v1822
        %v1824 = vrot.slane %v1439, %v1823
        %v1825 = vsel %vm1731, %v1824, %v1820
        %v1826 = vlaneseq
        %v1827 = vshrl.u32 %v1826, 7
        %v1828 = vsub.s32 %v1733, %v1827
        %v1829 = vrot.slane %v1440, %v1828
        %v1830 = vsel %vm1738, %v1829, %v1825
        %v1831 = vlaneseq
        %v1832 = vshrl.u32 %v1831, 7
        %v1833 = vsub.s32 %v1740, %v1832
        %v1834 = vrot.slane %v1441, %v1833
        %v1835 = vsel %vm1745, %v1834, %v1830
        %v1836 = vlaneseq
        %v1837 = vshrl.u32 %v1836, 7
        %v1838 = vsub.s32 %v1747, %v1837
        %v1839 = vrot.slane %v1442, %v1838
        %v1840 = vsel %vm1752, %v1839, %v1835
        %v1841 = vlaneseq
        %v1842 = vshrl.u32 %v1841, 7
        %v1843 = vsub.s32 %v1754, %v1842
        %v1844 = vrot.slane %v1443, %v1843
        %v1845 = vsel %vm1759, %v1844, %v1840
        %v1846 = vlaneseq
        %v1847 = vshrl.u32 %v1846, 7
        %v1848 = vsub.s32 %v1761, %v1847
        %v1849 = vrot.slane %v1444, %v1848
        %v1850 = vsel %vm1766, %v1849, %v1845
        %v1851 = vlaneseq
        %v1852 = vshrl.u32 %v1851, 7
        %v1853 = vsub.s32 %v1768, %v1852
        %v1854 = vrot.slane %v1445, %v1853
        %v1855 = vsel %vm1773, %v1854, %v1850
        %v1856 = vlaneseq
        %v1857 = vshrl.u32 %v1856, 7
        %v1858 = vsub.s32 %v1775, %v1857
        %v1859 = vrot.slane %v1446, %v1858
        %v1860 = vsel %vm1780, %v1859, %v1855
        %v1861 = vlaneseq
        %v1862 = vshrl.u32 %v1861, 7
        %v1863 = vsub.s32 %v1672, %v1862
        %v1864 = vrot.slane %v1447, %v1863
        %v1865 = vlaneseq
        %v1866 = vshrl.u32 %v1865, 7
        %v1867 = vsub.s32 %v1677, %v1866
        %v1868 = vrot.slane %v1448, %v1867
        %v1869 = vsel %vm1682, %v1868, %v1864
        %v1870 = vlaneseq
        %v1871 = vshrl.u32 %v1870, 7
        %v1872 = vsub.s32 %v1684, %v1871
        %v1873 = vrot.slane %v1449, %v1872
        %v1874 = vsel %vm1689, %v1873, %v1869
        %v1875 = vlaneseq
        %v1876 = vshrl.u32 %v1875, 7
        %v1877 = vsub.s32 %v1691, %v1876
        %v1878 = vrot.slane %v1450, %v1877
        %v1879 = vsel %vm1696, %v1878, %v1874
        %v1880 = vlaneseq
        %v1881 = vshrl.u32 %v1880, 7
        %v1882 = vsub.s32 %v1698, %v1881
        %v1883 = vrot.slane %v1451, %v1882
        %v1884 = vsel %vm1703, %v1883, %v1879
        %v1885 = vlaneseq
        %v1886 = vshrl.u32 %v1885, 7
        %v1887 = vsub.s32 %v1705, %v1886
        %v1888 = vrot.slane %v1452, %v1887
        %v1889 = vsel %vm1710, %v1888, %v1884
        %v1890 = vlaneseq
        %v1891 = vshrl.u32 %v1890, 7
        %v1892 = vsub.s32 %v1712, %v1891
        %v1893 = vrot.slane %v1453, %v1892
        %v1894 = vsel %vm1717, %v1893, %v1889
        %v1895 = vlaneseq
        %v1896 = vshrl.u32 %v1895, 7
        %v1897 = vsub.s32 %v1719, %v1896
        %v1898 = vrot.slane %v1454, %v1897
        %v1899 = vsel %vm1724, %v1898, %v1894
        %v1900 = vlaneseq
        %v1901 = vshrl.u32 %v1900, 7
        %v1902 = vsub.s32 %v1726, %v1901
        %v1903 = vrot.slane %v1455, %v1902
        %v1904 = vsel %vm1731, %v1903, %v1899
        %v1905 = vlaneseq
        %v1906 = vshrl.u32 %v1905, 7
        %v1907 = vsub.s32 %v1733, %v1906
        %v1908 = vrot.slane %v1456, %v1907
        %v1909 = vsel %vm1738, %v1908, %v1904
        %v1910 = vlaneseq
        %v1911 = vshrl.u32 %v1910, 7
        %v1912 = vsub.s32 %v1740, %v1911
        %v1913 = vrot.slane %v1457, %v1912
        %v1914 = vsel %vm1745, %v1913, %v1909
        %v1915 = vlaneseq
        %v1916 = vshrl.u32 %v1915, 7
        %v1917 = vsub.s32 %v1747, %v1916
        %v1918 = vrot.slane %v1458, %v1917
        %v1919 = vsel %vm1752, %v1918, %v1914
        %v1920 = vlaneseq
        %v1921 = vshrl.u32 %v1920, 7
        %v1922 = vsub.s32 %v1754, %v1921
        %v1923 = vrot.slane %v1459, %v1922
        %v1924 = vsel %vm1759, %v1923, %v1919
        %v1925 = vlaneseq
        %v1926 = vshrl.u32 %v1925, 7
        %v1927 = vsub.s32 %v1761, %v1926
        %v1928 = vrot.slane %v1460, %v1927
        %v1929 = vsel %vm1766, %v1928, %v1924
        %v1930 = vlaneseq
        %v1931 = vshrl.u32 %v1930, 7
        %v1932 = vsub.s32 %v1768, %v1931
        %v1933 = vrot.slane %v1461, %v1932
        %v1934 = vsel %vm1773, %v1933, %v1929
        %v1935 = vlaneseq
        %v1936 = vshrl.u32 %v1935, 7
        %v1937 = vsub.s32 %v1775, %v1936
        %v1938 = vrot.slane %v1462, %v1937
        %v1939 = vsel %vm1780, %v1938, %v1934
        %v1940 = vlaneseq
        %v1941 = vshrl.u32 %v1940, 7
        %v1942 = vsub.s32 %v1672, %v1941
        %v1943 = vrot.slane %v1463, %v1942
        %v1944 = vlaneseq
        %v1945 = vshrl.u32 %v1944, 7
        %v1946 = vsub.s32 %v1677, %v1945
        %v1947 = vrot.slane %v1464, %v1946
        %v1948 = vsel %vm1682, %v1947, %v1943
        %v1949 = vlaneseq
        %v1950 = vshrl.u32 %v1949, 7
        %v1951 = vsub.s32 %v1684, %v1950
        %v1952 = vrot.slane %v1465, %v1951
        %v1953 = vsel %vm1689, %v1952, %v1948
        %v1954 = vlaneseq
        %v1955 = vshrl.u32 %v1954, 7
        %v1956 = vsub.s32 %v1691, %v1955
        %v1957 = vrot.slane %v1466, %v1956
        %v1958 = vsel %vm1696, %v1957, %v1953
        %v1959 = vlaneseq
        %v1960 = vshrl.u32 %v1959, 7
        %v1961 = vsub.s32 %v1698, %v1960
        %v1962 = vrot.slane %v1467, %v1961
        %v1963 = vsel %vm1703, %v1962, %v1958
        %v1964 = vlaneseq
        %v1965 = vshrl.u32 %v1964, 7
        %v1966 = vsub.s32 %v1705, %v1965
        %v1967 = vrot.slane %v1468, %v1966
        %v1968 = vsel %vm1710, %v1967, %v1963
        %v1969 = vlaneseq
        %v1970 = vshrl.u32 %v1969, 7
        %v1971 = vsub.s32 %v1712, %v1970
        %v1972 = vrot.slane %v1469, %v1971
        %v1973 = vsel %vm1717, %v1972, %v1968
        %v1974 = vlaneseq
        %v1975 = vshrl.u32 %v1974, 7
        %v1976 = vsub.s32 %v1719, %v1975
        %v1977 = vrot.slane %v1470, %v1976
        %v1978 = vsel %vm1724, %v1977, %v1973
        %v1979 = vlaneseq
        %v1980 = vshrl.u32 %v1979, 7
        %v1981 = vsub.s32 %v1726, %v1980
        %v1982 = vrot.slane %v1471, %v1981
        %v1983 = vsel %vm1731, %v1982, %v1978
        %v1984 = vlaneseq
        %v1985 = vshrl.u32 %v1984, 7
        %v1986 = vsub.s32 %v1733, %v1985
        %v1987 = vrot.slane %v1472, %v1986
        %v1988 = vsel %vm1738, %v1987, %v1983
        %v1989 = vlaneseq
        %v1990 = vshrl.u32 %v1989, 7
        %v1991 = vsub.s32 %v1740, %v1990
        %v1992 = vrot.slane %v1473, %v1991
        %v1993 = vsel %vm1745, %v1992, %v1988
        %v1994 = vlaneseq
        %v1995 = vshrl.u32 %v1994, 7
        %v1996 = vsub.s32 %v1747, %v1995
        %v1997 = vrot.slane %v1474, %v1996
        %v1998 = vsel %vm1752, %v1997, %v1993
        %v1999 = vlaneseq
        %v2000 = vshrl.u32 %v1999, 7
        %v2001 = vsub.s32 %v1754, %v2000
        %v2002 = vrot.slane %v1475, %v2001
        %v2003 = vsel %vm1759, %v2002, %v1998
        %v2004 = vlaneseq
        %v2005 = vshrl.u32 %v2004, 7
        %v2006 = vsub.s32 %v1761, %v2005
        %v2007 = vrot.slane %v1476, %v2006
        %v2008 = vsel %vm1766, %v2007, %v2003
        %v2009 = vlaneseq
        %v2010 = vshrl.u32 %v2009, 7
        %v2011 = vsub.s32 %v1768, %v2010
        %v2012 = vrot.slane %v1477, %v2011
        %v2013 = vsel %vm1773, %v2012, %v2008
        %v2014 = vlaneseq
        %v2015 = vshrl.u32 %v2014, 7
        %v2016 = vsub.s32 %v1775, %v2015
        %v2017 = vrot.slane %v1478, %v2016
        %v2018 = vsel %vm1780, %v2017, %v2013
        %v2019 = vlaneseq
        %v2020 = vshrl.u32 %v2019, 7
        %v2021 = vsub.s32 %v1672, %v2020
        %v2022 = vrot.slane %v1479, %v2021
        %v2023 = vlaneseq
        %v2024 = vshrl.u32 %v2023, 7
        %v2025 = vsub.s32 %v1677, %v2024
        %v2026 = vrot.slane %v1480, %v2025
        %v2027 = vsel %vm1682, %v2026, %v2022
        %v2028 = vlaneseq
        %v2029 = vshrl.u32 %v2028, 7
        %v2030 = vsub.s32 %v1684, %v2029
        %v2031 = vrot.slane %v1481, %v2030
        %v2032 = vsel %vm1689, %v2031, %v2027
        %v2033 = vlaneseq
        %v2034 = vshrl.u32 %v2033, 7
        %v2035 = vsub.s32 %v1691, %v2034
        %v2036 = vrot.slane %v1482, %v2035
        %v2037 = vsel %vm1696, %v2036, %v2032
        %v2038 = vlaneseq
        %v2039 = vshrl.u32 %v2038, 7
        %v2040 = vsub.s32 %v1698, %v2039
        %v2041 = vrot.slane %v1483, %v2040
        %v2042 = vsel %vm1703, %v2041, %v2037
        %v2043 = vlaneseq
        %v2044 = vshrl.u32 %v2043, 7
        %v2045 = vsub.s32 %v1705, %v2044
        %v2046 = vrot.slane %v1484, %v2045
        %v2047 = vsel %vm1710, %v2046, %v2042
        %v2048 = vlaneseq
        %v2049 = vshrl.u32 %v2048, 7
        %v2050 = vsub.s32 %v1712, %v2049
        %v2051 = vrot.slane %v1485, %v2050
        %v2052 = vsel %vm1717, %v2051, %v2047
        %v2053 = vlaneseq
        %v2054 = vshrl.u32 %v2053, 7
        %v2055 = vsub.s32 %v1719, %v2054
        %v2056 = vrot.slane %v1486, %v2055
        %v2057 = vsel %vm1724, %v2056, %v2052
        %v2058 = vlaneseq
        %v2059 = vshrl.u32 %v2058, 7
        %v2060 = vsub.s32 %v1726, %v2059
        %v2061 = vrot.slane %v1487, %v2060
        %v2062 = vsel %vm1731, %v2061, %v2057
        %v2063 = vlaneseq
        %v2064 = vshrl.u32 %v2063, 7
        %v2065 = vsub.s32 %v1733, %v2064
        %v2066 = vrot.slane %v1488, %v2065
        %v2067 = vsel %vm1738, %v2066, %v2062
        %v2068 = vlaneseq
        %v2069 = vshrl.u32 %v2068, 7
        %v2070 = vsub.s32 %v1740, %v2069
        %v2071 = vrot.slane %v1489, %v2070
        %v2072 = vsel %vm1745, %v2071, %v2067
        %v2073 = vlaneseq
        %v2074 = vshrl.u32 %v2073, 7
        %v2075 = vsub.s32 %v1747, %v2074
        %v2076 = vrot.slane %v1490, %v2075
        %v2077 = vsel %vm1752, %v2076, %v2072
        %v2078 = vlaneseq
        %v2079 = vshrl.u32 %v2078, 7
        %v2080 = vsub.s32 %v1754, %v2079
        %v2081 = vrot.slane %v1491, %v2080
        %v2082 = vsel %vm1759, %v2081, %v2077
        %v2083 = vlaneseq
        %v2084 = vshrl.u32 %v2083, 7
        %v2085 = vsub.s32 %v1761, %v2084
        %v2086 = vrot.slane %v1492, %v2085
        %v2087 = vsel %vm1766, %v2086, %v2082
        %v2088 = vlaneseq
        %v2089 = vshrl.u32 %v2088, 7
        %v2090 = vsub.s32 %v1768, %v2089
        %v2091 = vrot.slane %v1493, %v2090
        %v2092 = vsel %vm1773, %v2091, %v2087
        %v2093 = vlaneseq
        %v2094 = vshrl.u32 %v2093, 7
        %v2095 = vsub.s32 %v1775, %v2094
        %v2096 = vrot.slane %v1494, %v2095
        %v2097 = vsel %vm1780, %v2096, %v2092
        %v2098 = vlaneseq
        %v2099 = vshrl.u32 %v2098, 7
        %v2100 = vsub.s32 %v1672, %v2099
        %v2101 = vrot.slane %v1495, %v2100
        %v2102 = vlaneseq
        %v2103 = vshrl.u32 %v2102, 7
        %v2104 = vsub.s32 %v1677, %v2103
        %v2105 = vrot.slane %v1496, %v2104
        %v2106 = vsel %vm1682, %v2105, %v2101
        %v2107 = vlaneseq
        %v2108 = vshrl.u32 %v2107, 7
        %v2109 = vsub.s32 %v1684, %v2108
        %v2110 = vrot.slane %v1497, %v2109
        %v2111 = vsel %vm1689, %v2110, %v2106
        %v2112 = vlaneseq
        %v2113 = vshrl.u32 %v2112, 7
        %v2114 = vsub.s32 %v1691, %v2113
        %v2115 = vrot.slane %v1498, %v2114
        %v2116 = vsel %vm1696, %v2115, %v2111
        %v2117 = vlaneseq
        %v2118 = vshrl.u32 %v2117, 7
        %v2119 = vsub.s32 %v1698, %v2118
        %v2120 = vrot.slane %v1499, %v2119
        %v2121 = vsel %vm1703, %v2120, %v2116
        %v2122 = vlaneseq
        %v2123 = vshrl.u32 %v2122, 7
        %v2124 = vsub.s32 %v1705, %v2123
        %v2125 = vrot.slane %v1500, %v2124
        %v2126 = vsel %vm1710, %v2125, %v2121
        %v2127 = vlaneseq
        %v2128 = vshrl.u32 %v2127, 7
        %v2129 = vsub.s32 %v1712, %v2128
        %v2130 = vrot.slane %v1501, %v2129
        %v2131 = vsel %vm1717, %v2130, %v2126
        %v2132 = vlaneseq
        %v2133 = vshrl.u32 %v2132, 7
        %v2134 = vsub.s32 %v1719, %v2133
        %v2135 = vrot.slane %v1502, %v2134
        %v2136 = vsel %vm1724, %v2135, %v2131
        %v2137 = vlaneseq
        %v2138 = vshrl.u32 %v2137, 7
        %v2139 = vsub.s32 %v1726, %v2138
        %v2140 = vrot.slane %v1503, %v2139
        %v2141 = vsel %vm1731, %v2140, %v2136
        %v2142 = vlaneseq
        %v2143 = vshrl.u32 %v2142, 7
        %v2144 = vsub.s32 %v1733, %v2143
        %v2145 = vrot.slane %v1504, %v2144
        %v2146 = vsel %vm1738, %v2145, %v2141
        %v2147 = vlaneseq
        %v2148 = vshrl.u32 %v2147, 7
        %v2149 = vsub.s32 %v1740, %v2148
        %v2150 = vrot.slane %v1505, %v2149
        %v2151 = vsel %vm1745, %v2150, %v2146
        %v2152 = vlaneseq
        %v2153 = vshrl.u32 %v2152, 7
        %v2154 = vsub.s32 %v1747, %v2153
        %v2155 = vrot.slane %v1506, %v2154
        %v2156 = vsel %vm1752, %v2155, %v2151
        %v2157 = vlaneseq
        %v2158 = vshrl.u32 %v2157, 7
        %v2159 = vsub.s32 %v1754, %v2158
        %v2160 = vrot.slane %v1507, %v2159
        %v2161 = vsel %vm1759, %v2160, %v2156
        %v2162 = vlaneseq
        %v2163 = vshrl.u32 %v2162, 7
        %v2164 = vsub.s32 %v1761, %v2163
        %v2165 = vrot.slane %v1508, %v2164
        %v2166 = vsel %vm1766, %v2165, %v2161
        %v2167 = vlaneseq
        %v2168 = vshrl.u32 %v2167, 7
        %v2169 = vsub.s32 %v1768, %v2168
        %v2170 = vrot.slane %v1509, %v2169
        %v2171 = vsel %vm1773, %v2170, %v2166
        %v2172 = vlaneseq
        %v2173 = vshrl.u32 %v2172, 7
        %v2174 = vsub.s32 %v1775, %v2173
        %v2175 = vrot.slane %v1510, %v2174
        %v2176 = vsel %vm1780, %v2175, %v2171
        %v2177 = vlaneseq
        %v2178 = vshrl.u32 %v2177, 7
        %v2179 = vsub.s32 %v1672, %v2178
        %v2180 = vrot.slane %v1511, %v2179
        %v2181 = vlaneseq
        %v2182 = vshrl.u32 %v2181, 7
        %v2183 = vsub.s32 %v1677, %v2182
        %v2184 = vrot.slane %v1512, %v2183
        %v2185 = vsel %vm1682, %v2184, %v2180
        %v2186 = vlaneseq
        %v2187 = vshrl.u32 %v2186, 7
        %v2188 = vsub.s32 %v1684, %v2187
        %v2189 = vrot.slane %v1513, %v2188
        %v2190 = vsel %vm1689, %v2189, %v2185
        %v2191 = vlaneseq
        %v2192 = vshrl.u32 %v2191, 7
        %v2193 = vsub.s32 %v1691, %v2192
        %v2194 = vrot.slane %v1514, %v2193
        %v2195 = vsel %vm1696, %v2194, %v2190
        %v2196 = vlaneseq
        %v2197 = vshrl.u32 %v2196, 7
        %v2198 = vsub.s32 %v1698, %v2197
        %v2199 = vrot.slane %v1515, %v2198
        %v2200 = vsel %vm1703, %v2199, %v2195
        %v2201 = vlaneseq
        %v2202 = vshrl.u32 %v2201, 7
        %v2203 = vsub.s32 %v1705, %v2202
        %v2204 = vrot.slane %v1516, %v2203
        %v2205 = vsel %vm1710, %v2204, %v2200
        %v2206 = vlaneseq
        %v2207 = vshrl.u32 %v2206, 7
        %v2208 = vsub.s32 %v1712, %v2207
        %v2209 = vrot.slane %v1517, %v2208
        %v2210 = vsel %vm1717, %v2209, %v2205
        %v2211 = vlaneseq
        %v2212 = vshrl.u32 %v2211, 7
        %v2213 = vsub.s32 %v1719, %v2212
        %v2214 = vrot.slane %v1518, %v2213
        %v2215 = vsel %vm1724, %v2214, %v2210
        %v2216 = vlaneseq
        %v2217 = vshrl.u32 %v2216, 7
        %v2218 = vsub.s32 %v1726, %v2217
        %v2219 = vrot.slane %v1519, %v2218
        %v2220 = vsel %vm1731, %v2219, %v2215
        %v2221 = vlaneseq
        %v2222 = vshrl.u32 %v2221, 7
        %v2223 = vsub.s32 %v1733, %v2222
        %v2224 = vrot.slane %v1520, %v2223
        %v2225 = vsel %vm1738, %v2224, %v2220
        %v2226 = vlaneseq
        %v2227 = vshrl.u32 %v2226, 7
        %v2228 = vsub.s32 %v1740, %v2227
        %v2229 = vrot.slane %v1521, %v2228
        %v2230 = vsel %vm1745, %v2229, %v2225
        %v2231 = vlaneseq
        %v2232 = vshrl.u32 %v2231, 7
        %v2233 = vsub.s32 %v1747, %v2232
        %v2234 = vrot.slane %v1522, %v2233
        %v2235 = vsel %vm1752, %v2234, %v2230
        %v2236 = vlaneseq
        %v2237 = vshrl.u32 %v2236, 7
        %v2238 = vsub.s32 %v1754, %v2237
        %v2239 = vrot.slane %v1523, %v2238
        %v2240 = vsel %vm1759, %v2239, %v2235
        %v2241 = vlaneseq
        %v2242 = vshrl.u32 %v2241, 7
        %v2243 = vsub.s32 %v1761, %v2242
        %v2244 = vrot.slane %v1524, %v2243
        %v2245 = vsel %vm1766, %v2244, %v2240
        %v2246 = vlaneseq
        %v2247 = vshrl.u32 %v2246, 7
        %v2248 = vsub.s32 %v1768, %v2247
        %v2249 = vrot.slane %v1525, %v2248
        %v2250 = vsel %vm1773, %v2249, %v2245
        %v2251 = vlaneseq
        %v2252 = vshrl.u32 %v2251, 7
        %v2253 = vsub.s32 %v1775, %v2252
        %v2254 = vrot.slane %v1526, %v2253
        %v2255 = vsel %vm1780, %v2254, %v2250
        %v2256 = vlaneseq
        %v2257 = vshrl.u32 %v2256, 7
        %v2258 = vsub.s32 %v1672, %v2257
        %v2259 = vrot.slane %v1527, %v2258
        %v2260 = vlaneseq
        %v2261 = vshrl.u32 %v2260, 7
        %v2262 = vsub.s32 %v1677, %v2261
        %v2263 = vrot.slane %v1528, %v2262
        %v2264 = vsel %vm1682, %v2263, %v2259
        %v2265 = vlaneseq
        %v2266 = vshrl.u32 %v2265, 7
        %v2267 = vsub.s32 %v1684, %v2266
        %v2268 = vrot.slane %v1529, %v2267
        %v2269 = vsel %vm1689, %v2268, %v2264
        %v2270 = vlaneseq
        %v2271 = vshrl.u32 %v2270, 7
        %v2272 = vsub.s32 %v1691, %v2271
        %v2273 = vrot.slane %v1530, %v2272
        %v2274 = vsel %vm1696, %v2273, %v2269
        %v2275 = vlaneseq
        %v2276 = vshrl.u32 %v2275, 7
        %v2277 = vsub.s32 %v1698, %v2276
        %v2278 = vrot.slane %v1531, %v2277
        %v2279 = vsel %vm1703, %v2278, %v2274
        %v2280 = vlaneseq
        %v2281 = vshrl.u32 %v2280, 7
        %v2282 = vsub.s32 %v1705, %v2281
        %v2283 = vrot.slane %v1532, %v2282
        %v2284 = vsel %vm1710, %v2283, %v2279
        %v2285 = vlaneseq
        %v2286 = vshrl.u32 %v2285, 7
        %v2287 = vsub.s32 %v1712, %v2286
        %v2288 = vrot.slane %v1533, %v2287
        %v2289 = vsel %vm1717, %v2288, %v2284
        %v2290 = vlaneseq
        %v2291 = vshrl.u32 %v2290, 7
        %v2292 = vsub.s32 %v1719, %v2291
        %v2293 = vrot.slane %v1534, %v2292
        %v2294 = vsel %vm1724, %v2293, %v2289
        %v2295 = vlaneseq
        %v2296 = vshrl.u32 %v2295, 7
        %v2297 = vsub.s32 %v1726, %v2296
        %v2298 = vrot.slane %v1535, %v2297
        %v2299 = vsel %vm1731, %v2298, %v2294
        %v2300 = vlaneseq
        %v2301 = vshrl.u32 %v2300, 7
        %v2302 = vsub.s32 %v1733, %v2301
        %v2303 = vrot.slane %v1536, %v2302
        %v2304 = vsel %vm1738, %v2303, %v2299
        %v2305 = vlaneseq
        %v2306 = vshrl.u32 %v2305, 7
        %v2307 = vsub.s32 %v1740, %v2306
        %v2308 = vrot.slane %v1537, %v2307
        %v2309 = vsel %vm1745, %v2308, %v2304
        %v2310 = vlaneseq
        %v2311 = vshrl.u32 %v2310, 7
        %v2312 = vsub.s32 %v1747, %v2311
        %v2313 = vrot.slane %v1538, %v2312
        %v2314 = vsel %vm1752, %v2313, %v2309
        %v2315 = vlaneseq
        %v2316 = vshrl.u32 %v2315, 7
        %v2317 = vsub.s32 %v1754, %v2316
        %v2318 = vrot.slane %v1539, %v2317
        %v2319 = vsel %vm1759, %v2318, %v2314
        %v2320 = vlaneseq
        %v2321 = vshrl.u32 %v2320, 7
        %v2322 = vsub.s32 %v1761, %v2321
        %v2323 = vrot.slane %v1540, %v2322
        %v2324 = vsel %vm1766, %v2323, %v2319
        %v2325 = vlaneseq
        %v2326 = vshrl.u32 %v2325, 7
        %v2327 = vsub.s32 %v1768, %v2326
        %v2328 = vrot.slane %v1541, %v2327
        %v2329 = vsel %vm1773, %v2328, %v2324
        %v2330 = vlaneseq
        %v2331 = vshrl.u32 %v2330, 7
        %v2332 = vsub.s32 %v1775, %v2331
        %v2333 = vrot.slane %v1542, %v2332
        %v2334 = vsel %vm1780, %v2333, %v2329
        %vm2335 = vcmask 1041409
        %v2336 = vsel %vm2335, %v1860, %v1781
        %vm2337 = vcmask 1042434
        %v2338 = vsel %vm2337, %v1939, %v2336
        %vm2339 = vcmask 1043459
        %v2340 = vsel %vm2339, %v2018, %v2338
        %vm2341 = vcmask 1044484
        %v2342 = vsel %vm2341, %v2097, %v2340
        %vm2343 = vcmask 1045509
        %v2344 = vsel %vm2343, %v2176, %v2342
        %vm2345 = vcmask 1046534
        %v2346 = vsel %vm2345, %v2255, %v2344
        %vm2347 = vcmask 1047559
        %v2348 = vsel %vm2347, %v2334, %v2346
        %2350 = vst [vmem:[%s886] sm:$0xff] %v2348
        %v2351 = vld [vmem:[#allocation2] sm:$0xff]
        %v2352 = vpack.c.bf16 %v1416, %v1415
        %v2353 = vpack.c.bf16 %v1418, %v1417
        %v2354 = vpack.c.bf16 %v1420, %v1419
        %v2355 = vpack.c.bf16 %v1422, %v1421
        %v2356 = vpack.c.bf16 %v1424, %v1423
        %v2357 = vpack.c.bf16 %v1426, %v1425
        %v2358 = vpack.c.bf16 %v1428, %v1427
        %v2359 = vpack.c.bf16 %v1430, %v1429
        %v2360 = vpack.c.bf16 %v1432, %v1431
        %v2361 = vpack.c.bf16 %v1434, %v1433
        %v2362 = vpack.c.bf16 %v1436, %v1435
        %v2363 = vpack.c.bf16 %v1438, %v1437
        %v2364 = vpack.c.bf16 %v1440, %v1439
        %v2365 = vpack.c.bf16 %v1442, %v1441
        %v2366 = vpack.c.bf16 %v1444, %v1443
        %v2367 = vpack.c.bf16 %v1446, %v1445
        %v2368 = vpack.c.bf16 %v1448, %v1447
        %v2369 = vpack.c.bf16 %v1450, %v1449
        %v2370 = vpack.c.bf16 %v1452, %v1451
        %v2371 = vpack.c.bf16 %v1454, %v1453
        %v2372 = vpack.c.bf16 %v1456, %v1455
        %v2373 = vpack.c.bf16 %v1458, %v1457
        %v2374 = vpack.c.bf16 %v1460, %v1459
        %v2375 = vpack.c.bf16 %v1462, %v1461
        %v2376 = vpack.c.bf16 %v1464, %v1463
        %v2377 = vpack.c.bf16 %v1466, %v1465
        %v2378 = vpack.c.bf16 %v1468, %v1467
        %v2379 = vpack.c.bf16 %v1470, %v1469
        %v2380 = vpack.c.bf16 %v1472, %v1471
        %v2381 = vpack.c.bf16 %v1474, %v1473
        %v2382 = vpack.c.bf16 %v1476, %v1475
        %v2383 = vpack.c.bf16 %v1478, %v1477
        %v2384 = vpack.c.bf16 %v1480, %v1479
        %v2385 = vpack.c.bf16 %v1482, %v1481
        %v2386 = vpack.c.bf16 %v1484, %v1483
        %v2387 = vpack.c.bf16 %v1486, %v1485
        %v2388 = vpack.c.bf16 %v1488, %v1487
        %v2389 = vpack.c.bf16 %v1490, %v1489
        %v2390 = vpack.c.bf16 %v1492, %v1491
        %v2391 = vpack.c.bf16 %v1494, %v1493
        %v2392 = vpack.c.bf16 %v1496, %v1495
        %v2393 = vpack.c.bf16 %v1498, %v1497
        %v2394 = vpack.c.bf16 %v1500, %v1499
        %v2395 = vpack.c.bf16 %v1502, %v1501
        %v2396 = vpack.c.bf16 %v1504, %v1503
        %v2397 = vpack.c.bf16 %v1506, %v1505
        %v2398 = vpack.c.bf16 %v1508, %v1507
        %v2399 = vpack.c.bf16 %v1510, %v1509
        %v2400 = vpack.c.bf16 %v1512, %v1511
        %v2401 = vpack.c.bf16 %v1514, %v1513
        %v2402 = vpack.c.bf16 %v1516, %v1515
        %v2403 = vpack.c.bf16 %v1518, %v1517
        %v2404 = vpack.c.bf16 %v1520, %v1519
        %v2405 = vpack.c.bf16 %v1522, %v1521
        %v2406 = vpack.c.bf16 %v1524, %v1523
        %v2407 = vpack.c.bf16 %v1526, %v1525
        %v2408 = vpack.c.bf16 %v1528, %v1527
        %v2409 = vpack.c.bf16 %v1530, %v1529
        %v2410 = vpack.c.bf16 %v1532, %v1531
        %v2411 = vpack.c.bf16 %v1534, %v1533
        %v2412 = vpack.c.bf16 %v1536, %v1535
        %v2413 = vpack.c.bf16 %v1538, %v1537
        %v2414 = vpack.c.bf16 %v1540, %v1539
        %v2415 = vpack.c.bf16 %v1542, %v1541
        %v2416 = vld [vmem:[%s894] sm:$0xf]
        %v2417 = vld [vmem:[%s894 + $0x4] sm:$0xf]
        %v2418 = vld [vmem:[%s894 + $0x8] sm:$0xf]
        %v2419 = vld [vmem:[%s894 + $0xc] sm:$0xf]
        %v2420 = vld [vmem:[%s894 + $0x10] sm:$0xf]
        %v2421 = vld [vmem:[%s894 + $0x14] sm:$0xf]
        %v2422 = vld [vmem:[%s894 + $0x18] sm:$0xf]
        %v2423 = vld [vmem:[%s894 + $0x1c] sm:$0xf]
        %v2424 = vld [vmem:[%s894 + $0x20] sm:$0xf]
        %v2425 = vld [vmem:[%s894 + $0x24] sm:$0xf]
        %v2426 = vld [vmem:[%s894 + $0x28] sm:$0xf]
        %v2427 = vld [vmem:[%s894 + $0x2c] sm:$0xf]
        %v2428 = vld [vmem:[%s894 + $0x30] sm:$0xf]
        %v2429 = vld [vmem:[%s894 + $0x34] sm:$0xf]
        %v2430 = vld [vmem:[%s894 + $0x38] sm:$0xf]
        %v2431 = vld [vmem:[%s894 + $0x3c] sm:$0xf]
        %v2496 = vunpack.c.l.b16 %v2352
        %v2497 = vunpack.c.h.b16 %v2352
        %v2498 = vunpack.c.l.b16 %v2353
        %v2499 = vunpack.c.h.b16 %v2353
        %v2500 = vunpack.c.l.b16 %v2354
        %v2501 = vunpack.c.h.b16 %v2354
        %v2502 = vunpack.c.l.b16 %v2355
        %v2503 = vunpack.c.h.b16 %v2355
        %v2504 = vunpack.c.l.b16 %v2356
        %v2505 = vunpack.c.h.b16 %v2356
        %v2506 = vunpack.c.l.b16 %v2357
        %v2507 = vunpack.c.h.b16 %v2357
        %v2508 = vunpack.c.l.b16 %v2358
        %v2509 = vunpack.c.h.b16 %v2358
        %v2510 = vunpack.c.l.b16 %v2359
        %v2511 = vunpack.c.h.b16 %v2359
        %v2512 = vunpack.c.l.b16 %v2360
        %v2513 = vunpack.c.h.b16 %v2360
        %v2514 = vunpack.c.l.b16 %v2361
        %v2515 = vunpack.c.h.b16 %v2361
        %v2516 = vunpack.c.l.b16 %v2362
        %v2517 = vunpack.c.h.b16 %v2362
        %v2518 = vunpack.c.l.b16 %v2363
        %v2519 = vunpack.c.h.b16 %v2363
        %v2520 = vunpack.c.l.b16 %v2364
        %v2521 = vunpack.c.h.b16 %v2364
        %v2522 = vunpack.c.l.b16 %v2365
        %v2523 = vunpack.c.h.b16 %v2365
        %v2524 = vunpack.c.l.b16 %v2366
        %v2525 = vunpack.c.h.b16 %v2366
        %v2526 = vunpack.c.l.b16 %v2367
        %v2527 = vunpack.c.h.b16 %v2367
        %v2528 = vunpack.c.l.b16 %v2368
        %v2529 = vunpack.c.h.b16 %v2368
        %v2530 = vunpack.c.l.b16 %v2369
        %v2531 = vunpack.c.h.b16 %v2369
        %v2532 = vunpack.c.l.b16 %v2370
        %v2533 = vunpack.c.h.b16 %v2370
        %v2534 = vunpack.c.l.b16 %v2371
        %v2535 = vunpack.c.h.b16 %v2371
        %v2536 = vunpack.c.l.b16 %v2372
        %v2537 = vunpack.c.h.b16 %v2372
        %v2538 = vunpack.c.l.b16 %v2373
        %v2539 = vunpack.c.h.b16 %v2373
        %v2540 = vunpack.c.l.b16 %v2374
        %v2541 = vunpack.c.h.b16 %v2374
        %v2542 = vunpack.c.l.b16 %v2375
        %v2543 = vunpack.c.h.b16 %v2375
        %v2544 = vunpack.c.l.b16 %v2376
        %v2545 = vunpack.c.h.b16 %v2376
        %v2546 = vunpack.c.l.b16 %v2377
        %v2547 = vunpack.c.h.b16 %v2377
        %v2548 = vunpack.c.l.b16 %v2378
        %v2549 = vunpack.c.h.b16 %v2378
        %v2550 = vunpack.c.l.b16 %v2379
        %v2551 = vunpack.c.h.b16 %v2379
        %v2552 = vunpack.c.l.b16 %v2380
        %v2553 = vunpack.c.h.b16 %v2380
        %v2554 = vunpack.c.l.b16 %v2381
        %v2555 = vunpack.c.h.b16 %v2381
        %v2556 = vunpack.c.l.b16 %v2382
        %v2557 = vunpack.c.h.b16 %v2382
        %v2558 = vunpack.c.l.b16 %v2383
        %v2559 = vunpack.c.h.b16 %v2383
        %v2560 = vunpack.c.l.b16 %v2384
        %v2561 = vunpack.c.h.b16 %v2384
        %v2562 = vunpack.c.l.b16 %v2385
        %v2563 = vunpack.c.h.b16 %v2385
        %v2564 = vunpack.c.l.b16 %v2386
        %v2565 = vunpack.c.h.b16 %v2386
        %v2566 = vunpack.c.l.b16 %v2387
        %v2567 = vunpack.c.h.b16 %v2387
        %v2568 = vunpack.c.l.b16 %v2388
        %v2569 = vunpack.c.h.b16 %v2388
        %v2570 = vunpack.c.l.b16 %v2389
        %v2571 = vunpack.c.h.b16 %v2389
        %v2572 = vunpack.c.l.b16 %v2390
        %v2573 = vunpack.c.h.b16 %v2390
        %v2574 = vunpack.c.l.b16 %v2391
        %v2575 = vunpack.c.h.b16 %v2391
        %v2576 = vunpack.c.l.b16 %v2392
        %v2577 = vunpack.c.h.b16 %v2392
        %v2578 = vunpack.c.l.b16 %v2393
        %v2579 = vunpack.c.h.b16 %v2393
        %v2580 = vunpack.c.l.b16 %v2394
        %v2581 = vunpack.c.h.b16 %v2394
        %v2582 = vunpack.c.l.b16 %v2395
        %v2583 = vunpack.c.h.b16 %v2395
        %v2584 = vunpack.c.l.b16 %v2396
        %v2585 = vunpack.c.h.b16 %v2396
        %v2586 = vunpack.c.l.b16 %v2397
        %v2587 = vunpack.c.h.b16 %v2397
        %v2588 = vunpack.c.l.b16 %v2398
        %v2589 = vunpack.c.h.b16 %v2398
        %v2590 = vunpack.c.l.b16 %v2399
        %v2591 = vunpack.c.h.b16 %v2399
        %v2592 = vunpack.c.l.b16 %v2400
        %v2593 = vunpack.c.h.b16 %v2400
        %v2594 = vunpack.c.l.b16 %v2401
        %v2595 = vunpack.c.h.b16 %v2401
        %v2596 = vunpack.c.l.b16 %v2402
        %v2597 = vunpack.c.h.b16 %v2402
        %v2598 = vunpack.c.l.b16 %v2403
        %v2599 = vunpack.c.h.b16 %v2403
        %v2600 = vunpack.c.l.b16 %v2404
        %v2601 = vunpack.c.h.b16 %v2404
        %v2602 = vunpack.c.l.b16 %v2405
        %v2603 = vunpack.c.h.b16 %v2405
        %v2604 = vunpack.c.l.b16 %v2406
        %v2605 = vunpack.c.h.b16 %v2406
        %v2606 = vunpack.c.l.b16 %v2407
        %v2607 = vunpack.c.h.b16 %v2407
        %v2608 = vunpack.c.l.b16 %v2408
        %v2609 = vunpack.c.h.b16 %v2408
        %v2610 = vunpack.c.l.b16 %v2409
        %v2611 = vunpack.c.h.b16 %v2409
        %v2612 = vunpack.c.l.b16 %v2410
        %v2613 = vunpack.c.h.b16 %v2410
        %v2614 = vunpack.c.l.b16 %v2411
        %v2615 = vunpack.c.h.b16 %v2411
        %v2616 = vunpack.c.l.b16 %v2412
        %v2617 = vunpack.c.h.b16 %v2412
        %v2618 = vunpack.c.l.b16 %v2413
        %v2619 = vunpack.c.h.b16 %v2413
        %v2620 = vunpack.c.l.b16 %v2414
        %v2621 = vunpack.c.h.b16 %v2414
        %v2622 = vunpack.c.l.b16 %v2415
        %v2623 = vunpack.c.h.b16 %v2415
        %v2624 = vlaneseq
        %v2625 = vshrl.u32 %v2624, 7
        %v2626 = vsub.s32 %v1672, %v2625
        %v2627 = vrot.slane %v2496, %v2626
        %v2628 = vlaneseq
        %v2629 = vshrl.u32 %v2628, 7
        %v2630 = vsub.s32 %v1677, %v2629
        %v2631 = vrot.slane %v2497, %v2630
        %v2632 = vsel %vm1682, %v2631, %v2627
        %v2633 = vlaneseq
        %v2634 = vshrl.u32 %v2633, 7
        %v2635 = vsub.s32 %v1684, %v2634
        %v2636 = vrot.slane %v2498, %v2635
        %v2637 = vsel %vm1689, %v2636, %v2632
        %v2638 = vlaneseq
        %v2639 = vshrl.u32 %v2638, 7
        %v2640 = vsub.s32 %v1691, %v2639
        %v2641 = vrot.slane %v2499, %v2640
        %v2642 = vsel %vm1696, %v2641, %v2637
        %v2643 = vlaneseq
        %v2644 = vshrl.u32 %v2643, 7
        %v2645 = vsub.s32 %v1698, %v2644
        %v2646 = vrot.slane %v2500, %v2645
        %v2647 = vsel %vm1703, %v2646, %v2642
        %v2648 = vlaneseq
        %v2649 = vshrl.u32 %v2648, 7
        %v2650 = vsub.s32 %v1705, %v2649
        %v2651 = vrot.slane %v2501, %v2650
        %v2652 = vsel %vm1710, %v2651, %v2647
        %v2653 = vlaneseq
        %v2654 = vshrl.u32 %v2653, 7
        %v2655 = vsub.s32 %v1712, %v2654
        %v2656 = vrot.slane %v2502, %v2655
        %v2657 = vsel %vm1717, %v2656, %v2652
        %v2658 = vlaneseq
        %v2659 = vshrl.u32 %v2658, 7
        %v2660 = vsub.s32 %v1719, %v2659
        %v2661 = vrot.slane %v2503, %v2660
        %v2662 = vsel %vm1724, %v2661, %v2657
        %v2663 = vlaneseq
        %v2664 = vshrl.u32 %v2663, 7
        %v2665 = vsub.s32 %v1726, %v2664
        %v2666 = vrot.slane %v2504, %v2665
        %v2667 = vsel %vm1731, %v2666, %v2662
        %v2668 = vlaneseq
        %v2669 = vshrl.u32 %v2668, 7
        %v2670 = vsub.s32 %v1733, %v2669
        %v2671 = vrot.slane %v2505, %v2670
        %v2672 = vsel %vm1738, %v2671, %v2667
        %v2673 = vlaneseq
        %v2674 = vshrl.u32 %v2673, 7
        %v2675 = vsub.s32 %v1740, %v2674
        %v2676 = vrot.slane %v2506, %v2675
        %v2677 = vsel %vm1745, %v2676, %v2672
        %v2678 = vlaneseq
        %v2679 = vshrl.u32 %v2678, 7
        %v2680 = vsub.s32 %v1747, %v2679
        %v2681 = vrot.slane %v2507, %v2680
        %v2682 = vsel %vm1752, %v2681, %v2677
        %v2683 = vlaneseq
        %v2684 = vshrl.u32 %v2683, 7
        %v2685 = vsub.s32 %v1754, %v2684
        %v2686 = vrot.slane %v2508, %v2685
        %v2687 = vsel %vm1759, %v2686, %v2682
        %v2688 = vlaneseq
        %v2689 = vshrl.u32 %v2688, 7
        %v2690 = vsub.s32 %v1761, %v2689
        %v2691 = vrot.slane %v2509, %v2690
        %v2692 = vsel %vm1766, %v2691, %v2687
        %v2693 = vlaneseq
        %v2694 = vshrl.u32 %v2693, 7
        %v2695 = vsub.s32 %v1768, %v2694
        %v2696 = vrot.slane %v2510, %v2695
        %v2697 = vsel %vm1773, %v2696, %v2692
        %v2698 = vlaneseq
        %v2699 = vshrl.u32 %v2698, 7
        %v2700 = vsub.s32 %v1775, %v2699
        %v2701 = vrot.slane %v2511, %v2700
        %v2702 = vsel %vm1780, %v2701, %v2697
        %v2703 = vlaneseq
        %v2704 = vshrl.u32 %v2703, 7
        %v2705 = vsub.s32 %v1672, %v2704
        %v2706 = vrot.slane %v2512, %v2705
        %v2707 = vlaneseq
        %v2708 = vshrl.u32 %v2707, 7
        %v2709 = vsub.s32 %v1677, %v2708
        %v2710 = vrot.slane %v2513, %v2709
        %v2711 = vsel %vm1682, %v2710, %v2706
        %v2712 = vlaneseq
        %v2713 = vshrl.u32 %v2712, 7
        %v2714 = vsub.s32 %v1684, %v2713
        %v2715 = vrot.slane %v2514, %v2714
        %v2716 = vsel %vm1689, %v2715, %v2711
        %v2717 = vlaneseq
        %v2718 = vshrl.u32 %v2717, 7
        %v2719 = vsub.s32 %v1691, %v2718
        %v2720 = vrot.slane %v2515, %v2719
        %v2721 = vsel %vm1696, %v2720, %v2716
        %v2722 = vlaneseq
        %v2723 = vshrl.u32 %v2722, 7
        %v2724 = vsub.s32 %v1698, %v2723
        %v2725 = vrot.slane %v2516, %v2724
        %v2726 = vsel %vm1703, %v2725, %v2721
        %v2727 = vlaneseq
        %v2728 = vshrl.u32 %v2727, 7
        %v2729 = vsub.s32 %v1705, %v2728
        %v2730 = vrot.slane %v2517, %v2729
        %v2731 = vsel %vm1710, %v2730, %v2726
        %v2732 = vlaneseq
        %v2733 = vshrl.u32 %v2732, 7
        %v2734 = vsub.s32 %v1712, %v2733
        %v2735 = vrot.slane %v2518, %v2734
        %v2736 = vsel %vm1717, %v2735, %v2731
        %v2737 = vlaneseq
        %v2738 = vshrl.u32 %v2737, 7
        %v2739 = vsub.s32 %v1719, %v2738
        %v2740 = vrot.slane %v2519, %v2739
        %v2741 = vsel %vm1724, %v2740, %v2736
        %v2742 = vlaneseq
        %v2743 = vshrl.u32 %v2742, 7
        %v2744 = vsub.s32 %v1726, %v2743
        %v2745 = vrot.slane %v2520, %v2744
        %v2746 = vsel %vm1731, %v2745, %v2741
        %v2747 = vlaneseq
        %v2748 = vshrl.u32 %v2747, 7
        %v2749 = vsub.s32 %v1733, %v2748
        %v2750 = vrot.slane %v2521, %v2749
        %v2751 = vsel %vm1738, %v2750, %v2746
        %v2752 = vlaneseq
        %v2753 = vshrl.u32 %v2752, 7
        %v2754 = vsub.s32 %v1740, %v2753
        %v2755 = vrot.slane %v2522, %v2754
        %v2756 = vsel %vm1745, %v2755, %v2751
        %v2757 = vlaneseq
        %v2758 = vshrl.u32 %v2757, 7
        %v2759 = vsub.s32 %v1747, %v2758
        %v2760 = vrot.slane %v2523, %v2759
        %v2761 = vsel %vm1752, %v2760, %v2756
        %v2762 = vlaneseq
        %v2763 = vshrl.u32 %v2762, 7
        %v2764 = vsub.s32 %v1754, %v2763
        %v2765 = vrot.slane %v2524, %v2764
        %v2766 = vsel %vm1759, %v2765, %v2761
        %v2767 = vlaneseq
        %v2768 = vshrl.u32 %v2767, 7
        %v2769 = vsub.s32 %v1761, %v2768
        %v2770 = vrot.slane %v2525, %v2769
        %v2771 = vsel %vm1766, %v2770, %v2766
        %v2772 = vlaneseq
        %v2773 = vshrl.u32 %v2772, 7
        %v2774 = vsub.s32 %v1768, %v2773
        %v2775 = vrot.slane %v2526, %v2774
        %v2776 = vsel %vm1773, %v2775, %v2771
        %v2777 = vlaneseq
        %v2778 = vshrl.u32 %v2777, 7
        %v2779 = vsub.s32 %v1775, %v2778
        %v2780 = vrot.slane %v2527, %v2779
        %v2781 = vsel %vm1780, %v2780, %v2776
        %v2782 = vlaneseq
        %v2783 = vshrl.u32 %v2782, 7
        %v2784 = vsub.s32 %v1672, %v2783
        %v2785 = vrot.slane %v2528, %v2784
        %v2786 = vlaneseq
        %v2787 = vshrl.u32 %v2786, 7
        %v2788 = vsub.s32 %v1677, %v2787
        %v2789 = vrot.slane %v2529, %v2788
        %v2790 = vsel %vm1682, %v2789, %v2785
        %v2791 = vlaneseq
        %v2792 = vshrl.u32 %v2791, 7
        %v2793 = vsub.s32 %v1684, %v2792
        %v2794 = vrot.slane %v2530, %v2793
        %v2795 = vsel %vm1689, %v2794, %v2790
        %v2796 = vlaneseq
        %v2797 = vshrl.u32 %v2796, 7
        %v2798 = vsub.s32 %v1691, %v2797
        %v2799 = vrot.slane %v2531, %v2798
        %v2800 = vsel %vm1696, %v2799, %v2795
        %v2801 = vlaneseq
        %v2802 = vshrl.u32 %v2801, 7
        %v2803 = vsub.s32 %v1698, %v2802
        %v2804 = vrot.slane %v2532, %v2803
        %v2805 = vsel %vm1703, %v2804, %v2800
        %v2806 = vlaneseq
        %v2807 = vshrl.u32 %v2806, 7
        %v2808 = vsub.s32 %v1705, %v2807
        %v2809 = vrot.slane %v2533, %v2808
        %v2810 = vsel %vm1710, %v2809, %v2805
        %v2811 = vlaneseq
        %v2812 = vshrl.u32 %v2811, 7
        %v2813 = vsub.s32 %v1712, %v2812
        %v2814 = vrot.slane %v2534, %v2813
        %v2815 = vsel %vm1717, %v2814, %v2810
        %v2816 = vlaneseq
        %v2817 = vshrl.u32 %v2816, 7
        %v2818 = vsub.s32 %v1719, %v2817
        %v2819 = vrot.slane %v2535, %v2818
        %v2820 = vsel %vm1724, %v2819, %v2815
        %v2821 = vlaneseq
        %v2822 = vshrl.u32 %v2821, 7
        %v2823 = vsub.s32 %v1726, %v2822
        %v2824 = vrot.slane %v2536, %v2823
        %v2825 = vsel %vm1731, %v2824, %v2820
        %v2826 = vlaneseq
        %v2827 = vshrl.u32 %v2826, 7
        %v2828 = vsub.s32 %v1733, %v2827
        %v2829 = vrot.slane %v2537, %v2828
        %v2830 = vsel %vm1738, %v2829, %v2825
        %v2831 = vlaneseq
        %v2832 = vshrl.u32 %v2831, 7
        %v2833 = vsub.s32 %v1740, %v2832
        %v2834 = vrot.slane %v2538, %v2833
        %v2835 = vsel %vm1745, %v2834, %v2830
        %v2836 = vlaneseq
        %v2837 = vshrl.u32 %v2836, 7
        %v2838 = vsub.s32 %v1747, %v2837
        %v2839 = vrot.slane %v2539, %v2838
        %v2840 = vsel %vm1752, %v2839, %v2835
        %v2841 = vlaneseq
        %v2842 = vshrl.u32 %v2841, 7
        %v2843 = vsub.s32 %v1754, %v2842
        %v2844 = vrot.slane %v2540, %v2843
        %v2845 = vsel %vm1759, %v2844, %v2840
        %v2846 = vlaneseq
        %v2847 = vshrl.u32 %v2846, 7
        %v2848 = vsub.s32 %v1761, %v2847
        %v2849 = vrot.slane %v2541, %v2848
        %v2850 = vsel %vm1766, %v2849, %v2845
        %v2851 = vlaneseq
        %v2852 = vshrl.u32 %v2851, 7
        %v2853 = vsub.s32 %v1768, %v2852
        %v2854 = vrot.slane %v2542, %v2853
        %v2855 = vsel %vm1773, %v2854, %v2850
        %v2856 = vlaneseq
        %v2857 = vshrl.u32 %v2856, 7
        %v2858 = vsub.s32 %v1775, %v2857
        %v2859 = vrot.slane %v2543, %v2858
        %v2860 = vsel %vm1780, %v2859, %v2855
        %v2861 = vlaneseq
        %v2862 = vshrl.u32 %v2861, 7
        %v2863 = vsub.s32 %v1672, %v2862
        %v2864 = vrot.slane %v2544, %v2863
        %v2865 = vlaneseq
        %v2866 = vshrl.u32 %v2865, 7
        %v2867 = vsub.s32 %v1677, %v2866
        %v2868 = vrot.slane %v2545, %v2867
        %v2869 = vsel %vm1682, %v2868, %v2864
        %v2870 = vlaneseq
        %v2871 = vshrl.u32 %v2870, 7
        %v2872 = vsub.s32 %v1684, %v2871
        %v2873 = vrot.slane %v2546, %v2872
        %v2874 = vsel %vm1689, %v2873, %v2869
        %v2875 = vlaneseq
        %v2876 = vshrl.u32 %v2875, 7
        %v2877 = vsub.s32 %v1691, %v2876
        %v2878 = vrot.slane %v2547, %v2877
        %v2879 = vsel %vm1696, %v2878, %v2874
        %v2880 = vlaneseq
        %v2881 = vshrl.u32 %v2880, 7
        %v2882 = vsub.s32 %v1698, %v2881
        %v2883 = vrot.slane %v2548, %v2882
        %v2884 = vsel %vm1703, %v2883, %v2879
        %v2885 = vlaneseq
        %v2886 = vshrl.u32 %v2885, 7
        %v2887 = vsub.s32 %v1705, %v2886
        %v2888 = vrot.slane %v2549, %v2887
        %v2889 = vsel %vm1710, %v2888, %v2884
        %v2890 = vlaneseq
        %v2891 = vshrl.u32 %v2890, 7
        %v2892 = vsub.s32 %v1712, %v2891
        %v2893 = vrot.slane %v2550, %v2892
        %v2894 = vsel %vm1717, %v2893, %v2889
        %v2895 = vlaneseq
        %v2896 = vshrl.u32 %v2895, 7
        %v2897 = vsub.s32 %v1719, %v2896
        %v2898 = vrot.slane %v2551, %v2897
        %v2899 = vsel %vm1724, %v2898, %v2894
        %v2900 = vlaneseq
        %v2901 = vshrl.u32 %v2900, 7
        %v2902 = vsub.s32 %v1726, %v2901
        %v2903 = vrot.slane %v2552, %v2902
        %v2904 = vsel %vm1731, %v2903, %v2899
        %v2905 = vlaneseq
        %v2906 = vshrl.u32 %v2905, 7
        %v2907 = vsub.s32 %v1733, %v2906
        %v2908 = vrot.slane %v2553, %v2907
        %v2909 = vsel %vm1738, %v2908, %v2904
        %v2910 = vlaneseq
        %v2911 = vshrl.u32 %v2910, 7
        %v2912 = vsub.s32 %v1740, %v2911
        %v2913 = vrot.slane %v2554, %v2912
        %v2914 = vsel %vm1745, %v2913, %v2909
        %v2915 = vlaneseq
        %v2916 = vshrl.u32 %v2915, 7
        %v2917 = vsub.s32 %v1747, %v2916
        %v2918 = vrot.slane %v2555, %v2917
        %v2919 = vsel %vm1752, %v2918, %v2914
        %v2920 = vlaneseq
        %v2921 = vshrl.u32 %v2920, 7
        %v2922 = vsub.s32 %v1754, %v2921
        %v2923 = vrot.slane %v2556, %v2922
        %v2924 = vsel %vm1759, %v2923, %v2919
        %v2925 = vlaneseq
        %v2926 = vshrl.u32 %v2925, 7
        %v2927 = vsub.s32 %v1761, %v2926
        %v2928 = vrot.slane %v2557, %v2927
        %v2929 = vsel %vm1766, %v2928, %v2924
        %v2930 = vlaneseq
        %v2931 = vshrl.u32 %v2930, 7
        %v2932 = vsub.s32 %v1768, %v2931
        %v2933 = vrot.slane %v2558, %v2932
        %v2934 = vsel %vm1773, %v2933, %v2929
        %v2935 = vlaneseq
        %v2936 = vshrl.u32 %v2935, 7
        %v2937 = vsub.s32 %v1775, %v2936
        %v2938 = vrot.slane %v2559, %v2937
        %v2939 = vsel %vm1780, %v2938, %v2934
        %v2940 = vlaneseq
        %v2941 = vshrl.u32 %v2940, 7
        %v2942 = vsub.s32 %v1672, %v2941
        %v2943 = vrot.slane %v2560, %v2942
        %v2944 = vlaneseq
        %v2945 = vshrl.u32 %v2944, 7
        %v2946 = vsub.s32 %v1677, %v2945
        %v2947 = vrot.slane %v2561, %v2946
        %v2948 = vsel %vm1682, %v2947, %v2943
        %v2949 = vlaneseq
        %v2950 = vshrl.u32 %v2949, 7
        %v2951 = vsub.s32 %v1684, %v2950
        %v2952 = vrot.slane %v2562, %v2951
        %v2953 = vsel %vm1689, %v2952, %v2948
        %v2954 = vlaneseq
        %v2955 = vshrl.u32 %v2954, 7
        %v2956 = vsub.s32 %v1691, %v2955
        %v2957 = vrot.slane %v2563, %v2956
        %v2958 = vsel %vm1696, %v2957, %v2953
        %v2959 = vlaneseq
        %v2960 = vshrl.u32 %v2959, 7
        %v2961 = vsub.s32 %v1698, %v2960
        %v2962 = vrot.slane %v2564, %v2961
        %v2963 = vsel %vm1703, %v2962, %v2958
        %v2964 = vlaneseq
        %v2965 = vshrl.u32 %v2964, 7
        %v2966 = vsub.s32 %v1705, %v2965
        %v2967 = vrot.slane %v2565, %v2966
        %v2968 = vsel %vm1710, %v2967, %v2963
        %v2969 = vlaneseq
        %v2970 = vshrl.u32 %v2969, 7
        %v2971 = vsub.s32 %v1712, %v2970
        %v2972 = vrot.slane %v2566, %v2971
        %v2973 = vsel %vm1717, %v2972, %v2968
        %v2974 = vlaneseq
        %v2975 = vshrl.u32 %v2974, 7
        %v2976 = vsub.s32 %v1719, %v2975
        %v2977 = vrot.slane %v2567, %v2976
        %v2978 = vsel %vm1724, %v2977, %v2973
        %v2979 = vlaneseq
        %v2980 = vshrl.u32 %v2979, 7
        %v2981 = vsub.s32 %v1726, %v2980
        %v2982 = vrot.slane %v2568, %v2981
        %v2983 = vsel %vm1731, %v2982, %v2978
        %v2984 = vlaneseq
        %v2985 = vshrl.u32 %v2984, 7
        %v2986 = vsub.s32 %v1733, %v2985
        %v2987 = vrot.slane %v2569, %v2986
        %v2988 = vsel %vm1738, %v2987, %v2983
        %v2989 = vlaneseq
        %v2990 = vshrl.u32 %v2989, 7
        %v2991 = vsub.s32 %v1740, %v2990
        %v2992 = vrot.slane %v2570, %v2991
        %v2993 = vsel %vm1745, %v2992, %v2988
        %v2994 = vlaneseq
        %v2995 = vshrl.u32 %v2994, 7
        %v2996 = vsub.s32 %v1747, %v2995
        %v2997 = vrot.slane %v2571, %v2996
        %v2998 = vsel %vm1752, %v2997, %v2993
        %v2999 = vlaneseq
        %v3000 = vshrl.u32 %v2999, 7
        %v3001 = vsub.s32 %v1754, %v3000
        %v3002 = vrot.slane %v2572, %v3001
        %v3003 = vsel %vm1759, %v3002, %v2998
        %v3004 = vlaneseq
        %v3005 = vshrl.u32 %v3004, 7
        %v3006 = vsub.s32 %v1761, %v3005
        %v3007 = vrot.slane %v2573, %v3006
        %v3008 = vsel %vm1766, %v3007, %v3003
        %v3009 = vlaneseq
        %v3010 = vshrl.u32 %v3009, 7
        %v3011 = vsub.s32 %v1768, %v3010
        %v3012 = vrot.slane %v2574, %v3011
        %v3013 = vsel %vm1773, %v3012, %v3008
        %v3014 = vlaneseq
        %v3015 = vshrl.u32 %v3014, 7
        %v3016 = vsub.s32 %v1775, %v3015
        %v3017 = vrot.slane %v2575, %v3016
        %v3018 = vsel %vm1780, %v3017, %v3013
        %v3019 = vlaneseq
        %v3020 = vshrl.u32 %v3019, 7
        %v3021 = vsub.s32 %v1672, %v3020
        %v3022 = vrot.slane %v2576, %v3021
        %v3023 = vlaneseq
        %v3024 = vshrl.u32 %v3023, 7
        %v3025 = vsub.s32 %v1677, %v3024
        %v3026 = vrot.slane %v2577, %v3025
        %v3027 = vsel %vm1682, %v3026, %v3022
        %v3028 = vlaneseq
        %v3029 = vshrl.u32 %v3028, 7
        %v3030 = vsub.s32 %v1684, %v3029
        %v3031 = vrot.slane %v2578, %v3030
        %v3032 = vsel %vm1689, %v3031, %v3027
        %v3033 = vlaneseq
        %v3034 = vshrl.u32 %v3033, 7
        %v3035 = vsub.s32 %v1691, %v3034
        %v3036 = vrot.slane %v2579, %v3035
        %v3037 = vsel %vm1696, %v3036, %v3032
        %v3038 = vlaneseq
        %v3039 = vshrl.u32 %v3038, 7
        %v3040 = vsub.s32 %v1698, %v3039
        %v3041 = vrot.slane %v2580, %v3040
        %v3042 = vsel %vm1703, %v3041, %v3037
        %v3043 = vlaneseq
        %v3044 = vshrl.u32 %v3043, 7
        %v3045 = vsub.s32 %v1705, %v3044
        %v3046 = vrot.slane %v2581, %v3045
        %v3047 = vsel %vm1710, %v3046, %v3042
        %v3048 = vlaneseq
        %v3049 = vshrl.u32 %v3048, 7
        %v3050 = vsub.s32 %v1712, %v3049
        %v3051 = vrot.slane %v2582, %v3050
        %v3052 = vsel %vm1717, %v3051, %v3047
        %v3053 = vlaneseq
        %v3054 = vshrl.u32 %v3053, 7
        %v3055 = vsub.s32 %v1719, %v3054
        %v3056 = vrot.slane %v2583, %v3055
        %v3057 = vsel %vm1724, %v3056, %v3052
        %v3058 = vlaneseq
        %v3059 = vshrl.u32 %v3058, 7
        %v3060 = vsub.s32 %v1726, %v3059
        %v3061 = vrot.slane %v2584, %v3060
        %v3062 = vsel %vm1731, %v3061, %v3057
        %v3063 = vlaneseq
        %v3064 = vshrl.u32 %v3063, 7
        %v3065 = vsub.s32 %v1733, %v3064
        %v3066 = vrot.slane %v2585, %v3065
        %v3067 = vsel %vm1738, %v3066, %v3062
        %v3068 = vlaneseq
        %v3069 = vshrl.u32 %v3068, 7
        %v3070 = vsub.s32 %v1740, %v3069
        %v3071 = vrot.slane %v2586, %v3070
        %v3072 = vsel %vm1745, %v3071, %v3067
        %v3073 = vlaneseq
        %v3074 = vshrl.u32 %v3073, 7
        %v3075 = vsub.s32 %v1747, %v3074
        %v3076 = vrot.slane %v2587, %v3075
        %v3077 = vsel %vm1752, %v3076, %v3072
        %v3078 = vlaneseq
        %v3079 = vshrl.u32 %v3078, 7
        %v3080 = vsub.s32 %v1754, %v3079
        %v3081 = vrot.slane %v2588, %v3080
        %v3082 = vsel %vm1759, %v3081, %v3077
        %v3083 = vlaneseq
        %v3084 = vshrl.u32 %v3083, 7
        %v3085 = vsub.s32 %v1761, %v3084
        %v3086 = vrot.slane %v2589, %v3085
        %v3087 = vsel %vm1766, %v3086, %v3082
        %v3088 = vlaneseq
        %v3089 = vshrl.u32 %v3088, 7
        %v3090 = vsub.s32 %v1768, %v3089
        %v3091 = vrot.slane %v2590, %v3090
        %v3092 = vsel %vm1773, %v3091, %v3087
        %v3093 = vlaneseq
        %v3094 = vshrl.u32 %v3093, 7
        %v3095 = vsub.s32 %v1775, %v3094
        %v3096 = vrot.slane %v2591, %v3095
        %v3097 = vsel %vm1780, %v3096, %v3092
        %v3098 = vlaneseq
        %v3099 = vshrl.u32 %v3098, 7
        %v3100 = vsub.s32 %v1672, %v3099
        %v3101 = vrot.slane %v2592, %v3100
        %v3102 = vlaneseq
        %v3103 = vshrl.u32 %v3102, 7
        %v3104 = vsub.s32 %v1677, %v3103
        %v3105 = vrot.slane %v2593, %v3104
        %v3106 = vsel %vm1682, %v3105, %v3101
        %v3107 = vlaneseq
        %v3108 = vshrl.u32 %v3107, 7
        %v3109 = vsub.s32 %v1684, %v3108
        %v3110 = vrot.slane %v2594, %v3109
        %v3111 = vsel %vm1689, %v3110, %v3106
        %v3112 = vlaneseq
        %v3113 = vshrl.u32 %v3112, 7
        %v3114 = vsub.s32 %v1691, %v3113
        %v3115 = vrot.slane %v2595, %v3114
        %v3116 = vsel %vm1696, %v3115, %v3111
        %v3117 = vlaneseq
        %v3118 = vshrl.u32 %v3117, 7
        %v3119 = vsub.s32 %v1698, %v3118
        %v3120 = vrot.slane %v2596, %v3119
        %v3121 = vsel %vm1703, %v3120, %v3116
        %v3122 = vlaneseq
        %v3123 = vshrl.u32 %v3122, 7
        %v3124 = vsub.s32 %v1705, %v3123
        %v3125 = vrot.slane %v2597, %v3124
        %v3126 = vsel %vm1710, %v3125, %v3121
        %v3127 = vlaneseq
        %v3128 = vshrl.u32 %v3127, 7
        %v3129 = vsub.s32 %v1712, %v3128
        %v3130 = vrot.slane %v2598, %v3129
        %v3131 = vsel %vm1717, %v3130, %v3126
        %v3132 = vlaneseq
        %v3133 = vshrl.u32 %v3132, 7
        %v3134 = vsub.s32 %v1719, %v3133
        %v3135 = vrot.slane %v2599, %v3134
        %v3136 = vsel %vm1724, %v3135, %v3131
        %v3137 = vlaneseq
        %v3138 = vshrl.u32 %v3137, 7
        %v3139 = vsub.s32 %v1726, %v3138
        %v3140 = vrot.slane %v2600, %v3139
        %v3141 = vsel %vm1731, %v3140, %v3136
        %v3142 = vlaneseq
        %v3143 = vshrl.u32 %v3142, 7
        %v3144 = vsub.s32 %v1733, %v3143
        %v3145 = vrot.slane %v2601, %v3144
        %v3146 = vsel %vm1738, %v3145, %v3141
        %v3147 = vlaneseq
        %v3148 = vshrl.u32 %v3147, 7
        %v3149 = vsub.s32 %v1740, %v3148
        %v3150 = vrot.slane %v2602, %v3149
        %v3151 = vsel %vm1745, %v3150, %v3146
        %v3152 = vlaneseq
        %v3153 = vshrl.u32 %v3152, 7
        %v3154 = vsub.s32 %v1747, %v3153
        %v3155 = vrot.slane %v2603, %v3154
        %v3156 = vsel %vm1752, %v3155, %v3151
        %v3157 = vlaneseq
        %v3158 = vshrl.u32 %v3157, 7
        %v3159 = vsub.s32 %v1754, %v3158
        %v3160 = vrot.slane %v2604, %v3159
        %v3161 = vsel %vm1759, %v3160, %v3156
        %v3162 = vlaneseq
        %v3163 = vshrl.u32 %v3162, 7
        %v3164 = vsub.s32 %v1761, %v3163
        %v3165 = vrot.slane %v2605, %v3164
        %v3166 = vsel %vm1766, %v3165, %v3161
        %v3167 = vlaneseq
        %v3168 = vshrl.u32 %v3167, 7
        %v3169 = vsub.s32 %v1768, %v3168
        %v3170 = vrot.slane %v2606, %v3169
        %v3171 = vsel %vm1773, %v3170, %v3166
        %v3172 = vlaneseq
        %v3173 = vshrl.u32 %v3172, 7
        %v3174 = vsub.s32 %v1775, %v3173
        %v3175 = vrot.slane %v2607, %v3174
        %v3176 = vsel %vm1780, %v3175, %v3171
        %v3177 = vlaneseq
        %v3178 = vshrl.u32 %v3177, 7
        %v3179 = vsub.s32 %v1672, %v3178
        %v3180 = vrot.slane %v2608, %v3179
        %v3181 = vlaneseq
        %v3182 = vshrl.u32 %v3181, 7
        %v3183 = vsub.s32 %v1677, %v3182
        %v3184 = vrot.slane %v2609, %v3183
        %v3185 = vsel %vm1682, %v3184, %v3180
        %v3186 = vlaneseq
        %v3187 = vshrl.u32 %v3186, 7
        %v3188 = vsub.s32 %v1684, %v3187
        %v3189 = vrot.slane %v2610, %v3188
        %v3190 = vsel %vm1689, %v3189, %v3185
        %v3191 = vlaneseq
        %v3192 = vshrl.u32 %v3191, 7
        %v3193 = vsub.s32 %v1691, %v3192
        %v3194 = vrot.slane %v2611, %v3193
        %v3195 = vsel %vm1696, %v3194, %v3190
        %v3196 = vlaneseq
        %v3197 = vshrl.u32 %v3196, 7
        %v3198 = vsub.s32 %v1698, %v3197
        %v3199 = vrot.slane %v2612, %v3198
        %v3200 = vsel %vm1703, %v3199, %v3195
        %v3201 = vlaneseq
        %v3202 = vshrl.u32 %v3201, 7
        %v3203 = vsub.s32 %v1705, %v3202
        %v3204 = vrot.slane %v2613, %v3203
        %v3205 = vsel %vm1710, %v3204, %v3200
        %v3206 = vlaneseq
        %v3207 = vshrl.u32 %v3206, 7
        %v3208 = vsub.s32 %v1712, %v3207
        %v3209 = vrot.slane %v2614, %v3208
        %v3210 = vsel %vm1717, %v3209, %v3205
        %v3211 = vlaneseq
        %v3212 = vshrl.u32 %v3211, 7
        %v3213 = vsub.s32 %v1719, %v3212
        %v3214 = vrot.slane %v2615, %v3213
        %v3215 = vsel %vm1724, %v3214, %v3210
        %v3216 = vlaneseq
        %v3217 = vshrl.u32 %v3216, 7
        %v3218 = vsub.s32 %v1726, %v3217
        %v3219 = vrot.slane %v2616, %v3218
        %v3220 = vsel %vm1731, %v3219, %v3215
        %v3221 = vlaneseq
        %v3222 = vshrl.u32 %v3221, 7
        %v3223 = vsub.s32 %v1733, %v3222
        %v3224 = vrot.slane %v2617, %v3223
        %v3225 = vsel %vm1738, %v3224, %v3220
        %v3226 = vlaneseq
        %v3227 = vshrl.u32 %v3226, 7
        %v3228 = vsub.s32 %v1740, %v3227
        %v3229 = vrot.slane %v2618, %v3228
        %v3230 = vsel %vm1745, %v3229, %v3225
        %v3231 = vlaneseq
        %v3232 = vshrl.u32 %v3231, 7
        %v3233 = vsub.s32 %v1747, %v3232
        %v3234 = vrot.slane %v2619, %v3233
        %v3235 = vsel %vm1752, %v3234, %v3230
        %v3236 = vlaneseq
        %v3237 = vshrl.u32 %v3236, 7
        %v3238 = vsub.s32 %v1754, %v3237
        %v3239 = vrot.slane %v2620, %v3238
        %v3240 = vsel %vm1759, %v3239, %v3235
        %v3241 = vlaneseq
        %v3242 = vshrl.u32 %v3241, 7
        %v3243 = vsub.s32 %v1761, %v3242
        %v3244 = vrot.slane %v2621, %v3243
        %v3245 = vsel %vm1766, %v3244, %v3240
        %v3246 = vlaneseq
        %v3247 = vshrl.u32 %v3246, 7
        %v3248 = vsub.s32 %v1768, %v3247
        %v3249 = vrot.slane %v2622, %v3248
        %v3250 = vsel %vm1773, %v3249, %v3245
        %v3251 = vlaneseq
        %v3252 = vshrl.u32 %v3251, 7
        %v3253 = vsub.s32 %v1775, %v3252
        %v3254 = vrot.slane %v2623, %v3253
        %v3255 = vsel %vm1780, %v3254, %v3250
        %v3256 = vsel %vm2335, %v2781, %v2702
        %v3257 = vsel %vm2337, %v2860, %v3256
        %v3258 = vsel %vm2339, %v2939, %v3257
        %v3259 = vsel %vm2341, %v3018, %v3258
        %v3260 = vsel %vm2343, %v3097, %v3259
        %v3261 = vsel %vm2345, %v3176, %v3260
        %v3262 = vsel %vm2347, %v3255, %v3261
        %v3263 = vpack.c.b16 %v3262, %v3262
        %v3281 = vunpack.c.l.b16 %v2416
        %v3282 = vunpack.c.l.b16 %v2417
        %v3283 = vunpack.c.l.b16 %v2418
        %v3284 = vunpack.c.l.b16 %v2419
        %v3285 = vunpack.c.l.b16 %v2420
        %v3286 = vunpack.c.l.b16 %v2421
        %v3287 = vunpack.c.l.b16 %v2422
        %v3288 = vunpack.c.l.b16 %v2423
        %v3289 = vunpack.c.l.b16 %v2424
        %v3290 = vunpack.c.l.b16 %v2425
        %v3291 = vunpack.c.l.b16 %v2426
        %v3292 = vunpack.c.l.b16 %v2427
        %v3293 = vunpack.c.l.b16 %v2428
        %v3294 = vunpack.c.l.b16 %v2429
        %v3295 = vunpack.c.l.b16 %v2430
        %v3296 = vunpack.c.l.b16 %v2431
        %v3297 = vpack.c.b16 %v3282, %v3281
        %v3298 = vpack.c.b16 %v3284, %v3283
        %v3299 = vpack.c.b16 %v3286, %v3285
        %v3300 = vpack.c.b16 %v3288, %v3287
        %v3301 = vpack.c.b16 %v3290, %v3289
        %v3302 = vpack.c.b16 %v3292, %v3291
        %v3303 = vpack.c.b16 %v3294, %v3293
        %v3304 = vpack.c.b16 %v3296, %v3295
        %3313 = vmatprep.subr.bf16.mxu0 0
        %3314 = vmatpush1.bf16.msra.mxu0 %v3297
        %3315 = vmatprep.subr.bf16.mxu0 0
        %3316 = vmatpush1.bf16.msra.mxu0 %v3298
        %3317 = vmatprep.subr.bf16.mxu0 0
        %3318 = vmatpush1.bf16.msra.mxu0 %v3299
        %3319 = vmatprep.subr.bf16.mxu0 0
        %3320 = vmatpush1.bf16.msra.mxu0 %v3300
        %3321 = vmatprep.subr.bf16.mxu0 0
        %3322 = vmatpush1.bf16.msra.mxu0 %v3301
        %3323 = vmatprep.subr.bf16.mxu0 0
        %3324 = vmatpush1.bf16.msra.mxu0 %v3302
        %3325 = vmatprep.subr.bf16.mxu0 0
        %3326 = vmatpush1.bf16.msra.mxu0 %v3303
        %3327 = vmatprep.subr.bf16.mxu0 0
        %3328 = vmatpush1.bf16.msra.mxu0 %v3304
        %3329 = vmatprep.subr.bf16.mxu0 0
        %3330 = vmatpush1.bf16.msra.mxu0 0
        %3331 = vmatprep.subr.bf16.mxu0 0
        %3332 = vmatpush1.bf16.msra.mxu0 0
        %3333 = vmatprep.subr.bf16.mxu0 0
        %3334 = vmatpush1.bf16.msra.mxu0 0
        %3335 = vmatprep.subr.bf16.mxu0 0
        %3336 = vmatpush1.bf16.msra.mxu0 0
        %3337 = vmatprep.subr.bf16.mxu0 0
        %3338 = vmatpush1.bf16.msra.mxu0 0
        %3339 = vmatprep.subr.bf16.mxu0 0
        %3340 = vmatpush1.bf16.msra.mxu0 0
        %3341 = vmatprep.subr.bf16.mxu0 0
        %3342 = vmatpush1.bf16.msra.mxu0 0
        %3343 = vmatprep.subr.bf16.mxu0 0
        %3344 = vmatpush1.bf16.msra.mxu0 0
        %3345 = vmatprep.mubr.bf16.mxu0 0
        %3346 = vmatmul.mubr.bf16.gmra.mrb[0].mxu0 %v3263
        %v3347 = vpop.f32.mrb[0].mxu0
        %v3348 = vadd.f32 0.0, %v3347
        %v3349 = vpop.f32.mrb[0].mxu0
        %v3350 = vpop.f32.mrb[0].mxu0
        %v3351 = vpop.f32.mrb[0].mxu0
        %3352 = vdwg.mxu0
        %v3353 = vadd.f32 %v2351, %v3348
        %3354 = vst [vmem:[#allocation2] sm:$0xff] %v3353
        %p3355 = scmp.eq.s32.totalorder %s25, 1
        // Predicated region
        $region95: #{tpu_custom_call.1} parent=85 // pred_check
          %p3356 = pneg %p3355
        $region96: #{tpu_custom_call.1} parent=85 // pred_check_branch
          %3358 = sbr.rel (%p3356) target = $region98
        $region97: #{tpu_custom_call.1} parent=85 // pred_region
          %v3359 = vld [vmem:[#allocation2] sm:$0xff]
          %v3360 = vld [vmem:[%s2] sm:$0x1]
          %v3362 = vlaneseq
          %v3363 = vshrl.u32 %v3362, 7
          %v3364 = vsub.s32 0, %v3363
          %v3365 = vrot.slane %v3360, %v3364
          %v3367 = vadd.f32 %v3359, %v3365
          %v3368 = vrot.slane %v3367, 4
          %v3369 = vadd.f32 %v3367, %v3368
          %v3370 = vrot.slane %v3369, 2
          %v3371 = vadd.f32 %v3369, %v3370
          %v3372 = vrot.slane %v3371, 1
          %v3373 = vadd.f32 %v3371, %v3372
          %v3374 = vrcp.pop 8.0
          %v3375 = vmul.f32 %v3373, %v3374
          %v3376 = vsub.f32 %v3367, %v3375
          %v3377 = vmul.f32 %v3376, %v3376
          %v3378 = vrot.slane %v3377, 4
          %v3379 = vadd.f32 %v3377, %v3378
          %v3380 = vrot.slane %v3379, 2
          %v3381 = vadd.f32 %v3379, %v3380
          %v3382 = vrot.slane %v3381, 1
          %v3383 = vadd.f32 %v3381, %v3382
          %v3384 = vmul.f32 %v3383, %v3374
          %v3385 = vadd.f32 %v3384, 1e-05
          %v3386 = vrsqrt.pop %v3385
          %v3387 = vmul.f32 %v3376, %v3386
          %v3388 = vld [vmem:[%s3] sm:$0x1]
          %v3390 = vlaneseq
          %v3391 = vshrl.u32 %v3390, 7
          %v3392 = vsub.s32 0, %v3391
          %v3393 = vrot.slane %v3388, %v3392
          %v3395 = vmul.f32 %v3387, %v3393
          %v3396 = vld [vmem:[%s4] sm:$0x1]
          %v3398 = vlaneseq
          %v3399 = vshrl.u32 %v3398, 7
          %v3400 = vsub.s32 0, %v3399
          %v3401 = vrot.slane %v3396, %v3400
          %v3403 = vadd.f32 %v3395, %v3401
          %v3404 = vld [vmem:[%s5] sm:$0xff]
          %v3405 = vmul.f32 %v3403, %v3404
          %v3406 = vpack.c.bf16 %v3405, %v3405
          %v3407 = vld [vmem:[%s6] sm:$0xf]
          %v3408 = vld [vmem:[%s6 + $0x4] sm:$0xf]
          %v3409 = vld [vmem:[%s6 + $0x8] sm:$0xf]
          %v3410 = vld [vmem:[%s6 + $0xc] sm:$0xf]
          %v3411 = vld [vmem:[%s6 + $0x10] sm:$0xf]
          %v3412 = vld [vmem:[%s6 + $0x14] sm:$0xf]
          %v3413 = vld [vmem:[%s6 + $0x18] sm:$0xf]
          %v3414 = vld [vmem:[%s6 + $0x1c] sm:$0xf]
          %v3415 = vld [vmem:[%s6 + $0x20] sm:$0xf]
          %v3416 = vld [vmem:[%s6 + $0x24] sm:$0xf]
          %v3417 = vld [vmem:[%s6 + $0x28] sm:$0xf]
          %v3418 = vld [vmem:[%s6 + $0x2c] sm:$0xf]
          %v3419 = vld [vmem:[%s6 + $0x30] sm:$0xf]
          %v3420 = vld [vmem:[%s6 + $0x34] sm:$0xf]
          %v3421 = vld [vmem:[%s6 + $0x38] sm:$0xf]
          %v3422 = vld [vmem:[%s6 + $0x3c] sm:$0xf]
          %v3423 = vld [vmem:[%s7] sm:$0x1]
          %v3425 = vlaneseq
          %v3426 = vshrl.u32 %v3425, 7
          %v3427 = vsub.s32 0, %v3426
          %v3428 = vrot.slane %v3423, %v3427
          %v3446 = vunpack.c.l.b16 %v3407
          %v3447 = vunpack.c.l.b16 %v3408
          %v3448 = vunpack.c.l.b16 %v3409
          %v3449 = vunpack.c.l.b16 %v3410
          %v3450 = vunpack.c.l.b16 %v3411
          %v3451 = vunpack.c.l.b16 %v3412
          %v3452 = vunpack.c.l.b16 %v3413
          %v3453 = vunpack.c.l.b16 %v3414
          %v3454 = vunpack.c.l.b16 %v3415
          %v3455 = vunpack.c.l.b16 %v3416
          %v3456 = vunpack.c.l.b16 %v3417
          %v3457 = vunpack.c.l.b16 %v3418
          %v3458 = vunpack.c.l.b16 %v3419
          %v3459 = vunpack.c.l.b16 %v3420
          %v3460 = vunpack.c.l.b16 %v3421
          %v3461 = vunpack.c.l.b16 %v3422
          %v3462 = vpack.c.b16 %v3447, %v3446
          %v3463 = vpack.c.b16 %v3449, %v3448
          %v3464 = vpack.c.b16 %v3451, %v3450
          %v3465 = vpack.c.b16 %v3453, %v3452
          %v3466 = vpack.c.b16 %v3455, %v3454
          %v3467 = vpack.c.b16 %v3457, %v3456
          %v3468 = vpack.c.b16 %v3459, %v3458
          %v3469 = vpack.c.b16 %v3461, %v3460
          %3478 = vmatprep.subr.bf16.mxu0 0
          %3479 = vmatpush1.bf16.msra.mxu0 %v3462
          %3480 = vmatprep.subr.bf16.mxu0 0
          %3481 = vmatpush1.bf16.msra.mxu0 %v3463
          %3482 = vmatprep.subr.bf16.mxu0 0
          %3483 = vmatpush1.bf16.msra.mxu0 %v3464
          %3484 = vmatprep.subr.bf16.mxu0 0
          %3485 = vmatpush1.bf16.msra.mxu0 %v3465
          %3486 = vmatprep.subr.bf16.mxu0 0
          %3487 = vmatpush1.bf16.msra.mxu0 %v3466
          %3488 = vmatprep.subr.bf16.mxu0 0
          %3489 = vmatpush1.bf16.msra.mxu0 %v3467
          %3490 = vmatprep.subr.bf16.mxu0 0
          %3491 = vmatpush1.bf16.msra.mxu0 %v3468
          %3492 = vmatprep.subr.bf16.mxu0 0
          %3493 = vmatpush1.bf16.msra.mxu0 %v3469
          %3494 = vmatprep.subr.bf16.mxu0 0
          %3495 = vmatpush1.bf16.msra.mxu0 0
          %3496 = vmatprep.subr.bf16.mxu0 0
          %3497 = vmatpush1.bf16.msra.mxu0 0
          %3498 = vmatprep.subr.bf16.mxu0 0
          %3499 = vmatpush1.bf16.msra.mxu0 0
          %3500 = vmatprep.subr.bf16.mxu0 0
          %3501 = vmatpush1.bf16.msra.mxu0 0
          %3502 = vmatprep.subr.bf16.mxu0 0
          %3503 = vmatpush1.bf16.msra.mxu0 0
          %3504 = vmatprep.subr.bf16.mxu0 0
          %3505 = vmatpush1.bf16.msra.mxu0 0
          %3506 = vmatprep.subr.bf16.mxu0 0
          %3507 = vmatpush1.bf16.msra.mxu0 0
          %3508 = vmatprep.subr.bf16.mxu0 0
          %3509 = vmatpush1.bf16.msra.mxu0 0
          %3510 = vmatprep.mubr.bf16.mxu0 0
          %3511 = vmatmul.mubr.bf16.gmra.mrb[0].mxu0 %v3406
          %v3512 = vpop.f32.mrb[0].mxu0
          %v3513 = vadd.f32 %v3428, %v3512
          %v3514 = vpop.f32.mrb[0].mxu0
          %v3515 = vpop.f32.mrb[0].mxu0
          %v3516 = vpop.f32.mrb[0].mxu0
          %3517 = vdwg.mxu0
          %3518 = vst [vmem:[#allocation6] sm:$0xff] %v3513
        $region98: #{tpu_custom_call.1} parent=85 // pred_fallthru
          _
        %s3519 = sand.u32 %s211, 1
        %s3520 = scalar_lea.sflag [#allocation5], %s3519
        %s3521 = sand.u32 %s211, 1
        %s3522 = smul.addr %s3521, 8
        %s3523 = scalar_lea.vmem [#allocation4], %s3522
        // Predicated region
        $region99: #{tpu_custom_call.1} parent=85 // pred_check
          %p3524 = pneg %p221
        $region100: #{tpu_custom_call.1} parent=85 // pred_check_branch
          %3526 = sbr.rel (%p3524) target = $region102
        $region101: #{tpu_custom_call.1} parent=85 // pred_region
          %s3528 = ssub.s32 128, 128
          %3529 = vsyncadd %s3520, %s3528
          %s3530 = smul.addr %s25, 128
          %s3531 = scalar_lea.hbm %s8, %s3530
          %s3533 = sshll.u32 %s3523, 4
          %s3534 = int_to_ptr.vmem [resolvable:$true] %s3533
          %3536 = dma.vmem_to_hbm [thread:$0]  %s3534, 128, %s3531, %s3520
        $region102: #{tpu_custom_call.1} parent=85 // pred_fallthru
          _
        // Predicated region
        $region103: #{tpu_custom_call.1} parent=85 // pred_check
          %p3537 = pneg %p242
        $region104: #{tpu_custom_call.1} parent=85 // pred_check_branch
          %3539 = sbr.rel (%p3537) target = $region106
        $region105: #{tpu_custom_call.1} parent=85 // pred_region
          %s3541 = ssub.s32 128, 128
          %3542 = vsyncadd [#allocation7], %s3541
          %s3544 = sshll.u32 [#allocation6], 4
          %s3545 = int_to_ptr.vmem [resolvable:$true] %s3544
          %3547 = dma.vmem_to_hbm [thread:$0]  %s3545, 128, %s9, [#allocation7]
        $region106: #{tpu_custom_call.1} parent=85 // pred_fallthru
          _
        // Predicated region
        $region107: #{tpu_custom_call.1} parent=85 // pred_check
          %p3548 = pneg %p242
        $region108: #{tpu_custom_call.1} parent=85 // pred_check_branch
          %3550 = sbr.rel (%p3548) target = $region110
        $region109: #{tpu_custom_call.1} parent=85 // pred_region
          %3551 = dma.done [#allocation7], 128
        $region110: #{tpu_custom_call.1} parent=85 // pred_fallthru
          _
      $region86: #{tpu_custom_call.1} parent=5 // pred_fallthru
        _
      %p3552 = scmp.le.s32.totalorder 2, %s20
      // Predicated region
      $region111: #{tpu_custom_call.1} parent=5 // pred_check
        %p3553 = pneg %p3552
      $region112: #{tpu_custom_call.1} parent=5 // pred_check_branch
        %3555 = sbr.rel (%p3553) target = $region114
      $region113: #{tpu_custom_call.1} parent=5 // pred_region
        %s3556 = ssub.s32 %s20, 2
        // Predicated region
        $region115: #{tpu_custom_call.1} parent=113 // pred_check
          %p3557 = pneg %p227
        $region116: #{tpu_custom_call.1} parent=113 // pred_check_branch
          %3559 = sbr.rel (%p3557) target = $region118
        $region117: #{tpu_custom_call.1} parent=113 // pred_region
          %s3560 = sand.u32 %s212, 1
          %s3561 = scalar_lea.sflag [#allocation5], %s3560
          %s3562 = sand.u32 %s212, 1
          %s3563 = smul.addr %s3562, 8
          %s3564 = scalar_lea.vmem [#allocation4], %s3563
          %3565 = dma.done %s3561, 128
        $region118: #{tpu_custom_call.1} parent=113 // pred_fallthru
          _
      $region114: #{tpu_custom_call.1} parent=5 // pred_fallthru
        _
    $region6: #{tpu_custom_call.1} parent=1 // loop_footer
      %s24 = sadd.s32 1, %s20
    $region7: #{tpu_custom_call.1} parent=1 // loop_footer_branch
      %19 = sbr.rel target = $region3
    $region8: #{tpu_custom_call.1} parent=1 // loop_exit
      _
    %3566 = vsyncpa [#allocation5], 1
    %s3567 = scalar_lea.sflag [#allocation5], 1
    %3568 = vsyncpa %s3567, 1
    %3569 = vsyncpa [#allocation7], 1

</llo_original>
